<compile_context>
chip_gen: v6e
topology: v6e:2x2x1
jax: 0.10.0
libtpu: 0.0.40
codegen_flags: <defaults>
</compile_context>

<pallas_src>
import jax
import jax.numpy as jnp
from jax.experimental import pallas as pl
from jax.experimental.pallas import tpu as pltpu

EPS = 1e-5
KSIZE = 3          # params['kernel_size']; padding = 1 (same conv)

# bf16 MXU operands would give ~2-4x matmul throughput on v5e/v6e/v7x, but the
# accumulated rounding error after two convs + two train-mode BNs exceeds the
# 1e-3 parity check against the f32 reference, so the default keeps f32.
USE_BF16_MXU = False


def _conv_matmul(col, w_ref):
    lhs, rhs = col, w_ref[...]
    if USE_BF16_MXU:
        lhs = lhs.astype(jnp.bfloat16)
        rhs = rhs.astype(jnp.bfloat16)
    return jnp.dot(lhs, rhs, preferred_element_type=jnp.float32)


def _bn_scale_bias(acc, gamma, beta, inv_m):
    # Train-mode BatchNorm folded into a single per-channel scale/bias.
    # mean/var in one pass via sum and sum-of-squares (biased variance).
    s = jnp.sum(acc, axis=0, keepdims=True)
    ss = jnp.sum(acc * acc, axis=0, keepdims=True)
    mean = s * inv_m
    var = ss * inv_m - mean * mean
    scale = gamma * jax.lax.rsqrt(var + EPS)       # rsqrt -> EUP slot
    bias = beta - mean * scale
    return scale, bias


def resblock_kernel(xpad_ref, w1_ref, g1_ref, be1_ref, w2_ref, g2_ref, be2_ref,
                    out_ref, col_ref, hpad_ref):
    N, Hp, Wp, C = xpad_ref.shape
    H, W = Hp - 2, Wp - 2
    M = N * H * W
    inv_m = jnp.float32(1.0 / M)

    # ---- im2col for conv1 from the pre-padded NHWC input --------------------
    # col[:, t*C:(t+1)*C] = shifted patch for tap t = dy*3 + dx, so one
    # (M, 9C) x (9C, C) matmul (K=576) replaces 9 latency-bound K=64 matmuls.
    for dy in range(KSIZE):
        for dx in range(KSIZE):
            t = dy * KSIZE + dx
            col_ref[:, t * C:(t + 1) * C] = (
                xpad_ref[:, dy:dy + H, dx:dx + W, :].reshape(M, C))

    # Conv bias intentionally dropped: train-mode BN cancels it exactly.
    acc1 = _conv_matmul(col_ref[...], w1_ref)

    # ---- BN1 (batch stats, folded into one FMA) + ReLU -----------------------
    scale1, bias1 = _bn_scale_bias(acc1, g1_ref[...], be1_ref[...], inv_m)
    h = jnp.maximum(acc1 * scale1 + bias1, 0.0)

    # ---- zero only the 1-pixel halo frame of hpad, then fill the interior ----
    zrow = jnp.zeros((N, 1, Wp, C), jnp.float32)
    zcol = jnp.zeros((N, H, 1, C), jnp.float32)
    hpad_ref[:, 0:1, :, :] = zrow
    hpad_ref[:, H + 1:H + 2, :, :] = zrow
    hpad_ref[:, 1:H + 1, 0:1, :] = zcol
    hpad_ref[:, 1:H + 1, W + 1:W + 2, :] = zcol
    hpad_ref[:, 1:H + 1, 1:W + 1, :] = h.reshape(N, H, W, C)

    # ---- im2col + single matmul for conv2 ------------------------------------
    for dy in range(KSIZE):
        for dx in range(KSIZE):
            t = dy * KSIZE + dx
            col_ref[:, t * C:(t + 1) * C] = (
                hpad_ref[:, dy:dy + H, dx:dx + W, :].reshape(M, C))
    acc2 = _conv_matmul(col_ref[...], w2_ref)

    # ---- BN2 (folded), residual from interior of xpad, final ReLU ------------
    scale2, bias2 = _bn_scale_bias(acc2, g2_ref[...], be2_ref[...], inv_m)
    resid = xpad_ref[:, 1:H + 1, 1:W + 1, :].reshape(M, C)
    y = jnp.maximum(resid + acc2 * scale2 + bias2, 0.0)

    # TODO(synk): with C=64 this store uses 64 of 128 lanes (masked vst); a
    # lane-dense (N*H, W*C) output would need a cross-lane relayout of the
    # (M, C) MXU result whose reshape lowering is not guaranteed, so it is
    # left in the natural NHWC block layout here.
    out_ref[...] = y.reshape(N, H, W, C)


def resblock_pallas(x_nchw, p):
    """x_nchw: (N, C, H, W) float32, PyTorch-style ResBlock input."""
    N, C, H, W = x_nchw.shape
    # TODO(synk): the NCHW<->NHWC transposes + pad stay in XLA; at realistic
    # sizes keeping activations NHWC end-to-end avoids this extra HBM traffic.
    x = jnp.transpose(x_nchw, (0, 2, 3, 1)).astype(jnp.float32)     # NHWC
    xpad = jnp.pad(x, ((0, 0), (1, 1), (1, 1), (0, 0)))             # padding=1

    def prep_w(w):  # OIHW -> (kH*kW*Cin, Cout), tap-major, matching im2col
        return jnp.transpose(w, (2, 3, 1, 0)).reshape(
            KSIZE * KSIZE * C, C).astype(jnp.float32)

    w1, w2 = prep_w(p["w1"]), prep_w(p["w2"])
    g1 = p["g1"].reshape(1, C).astype(jnp.float32)
    g2 = p["g2"].reshape(1, C).astype(jnp.float32)
    be1 = p["be1"].reshape(1, C).astype(jnp.float32)
    be2 = p["be2"].reshape(1, C).astype(jnp.float32)
    # Conv biases b1/b2 are NOT passed: train-mode BN cancels them exactly.

    vmem = pl.BlockSpec(memory_space=pltpu.MemorySpace.VMEM)
    f32b = 4
    buf_bytes = (
        xpad.size + w1.size + w2.size + 4 * C            # inputs
        + N * H * W * C                                  # output
        + (N * H * W) * (KSIZE * KSIZE * C)              # im2col scratch
        + N * (H + 2) * (W + 2) * C                      # padded-h scratch
    ) * f32b
    vmem_limit = min(int(2 * buf_bytes) + (8 << 20), 100 << 20)

    out = pl.pallas_call(
        resblock_kernel,
        out_shape=jax.ShapeDtypeStruct((N, H, W, C), jnp.float32),
        in_specs=[vmem] * 7,
        out_specs=vmem,
        scratch_shapes=[
            pltpu.VMEM((N * H * W, KSIZE * KSIZE * C), jnp.float32),  # im2col
            pltpu.VMEM((N, H + 2, W + 2, C), jnp.float32),            # padded h
        ],
        compiler_params=pltpu.CompilerParams(vmem_limit_bytes=vmem_limit),
    )(xpad, w1, g1, be1, w2, g2, be2)

    # TODO(synk): for large N/H/W (esp. v7x's 64 MiB VMEM / 2 TCs) this
    # single-grid-point design should be gridded over row bands with a
    # two-pass BN (sum/sumsq accumulate, then normalize); unnecessary here.
    return jnp.transpose(out, (0, 3, 1, 2))              # back to NCHW


# ---------------- pure-JAX reference (for a correctness check) ----------------
def resblock_ref(x, p):
    def conv(z, w, b):
        y = jax.lax.conv_general_dilated(
            z, w, window_strides=(1, 1), padding=((1, 1), (1, 1)),
            dimension_numbers=("NCHW", "OIHW", "NCHW"))
        return y + b[None, :, None, None]

    def bn(z, g, be):
        mean = jnp.mean(z, axis=(0, 2, 3), keepdims=True)
        var = jnp.mean((z - mean) ** 2, axis=(0, 2, 3), keepdims=True)
        return (z - mean) * jax.lax.rsqrt(var + EPS) \
            * g[None, :, None, None] + be[None, :, None, None]

    h = jax.nn.relu(bn(conv(x, p["w1"], p["b1"]), p["g1"], p["be1"]))
    y = bn(conv(h, p["w2"], p["b2"]), p["g2"], p["be2"])
    return jax.nn.relu(x + y)


def make_params(key, hidden_size):
    # Deterministic init mimicking nn.Conv2d defaults (uniform +-1/sqrt(fan_in))
    # and nn.BatchNorm2d defaults (gamma=1, beta=0).
    C, k = hidden_size, KSIZE
    fan_in = C * k * k
    bound = 1.0 / jnp.sqrt(fan_in)
    k1, k2, k3, k4 = jax.random.split(key, 4)
    return {
        "w1": jax.random.uniform(k1, (C, C, k, k), jnp.float32, -bound, bound),
        "b1": jax.random.uniform(k2, (C,), jnp.float32, -bound, bound),
        "w2": jax.random.uniform(k3, (C, C, k, k), jnp.float32, -bound, bound),
        "b2": jax.random.uniform(k4, (C,), jnp.float32, -bound, bound),
        "g1": jnp.ones((C,), jnp.float32),
        "be1": jnp.zeros((C,), jnp.float32),
        "g2": jnp.ones((C,), jnp.float32),
        "be2": jnp.zeros((C,), jnp.float32),
    }


if __name__ == "__main__":
    hidden_size = 64        # params['hidden_size']
    N, H, W = 2, 8, 8       # small synthetic batch / spatial size

    key = jax.random.PRNGKey(0)
    kx, kp = jax.random.split(key)
    x = jax.random.normal(kx, (N, hidden_size, H, W), jnp.float32)  # NCHW
    p = make_params(kp, hidden_size)

    out = jax.block_until_ready(resblock_pallas(x, p))
    ref = jax.block_until_ready(resblock_ref(x, p))

    max_err = float(jnp.max(jnp.abs(out - ref)))
    assert out.shape == (N, hidden_size, H, W)
    assert max_err < 1e-3, f"mismatch vs reference: {max_err}"

    print("KERNEL_OK")
</pallas_src>

<mosaic_0001>
module attributes {stable_mosaic.version = 11 : i64} {
  func.func @resblock_kernel(%arg0: memref<2x10x10x64xf32, #tpu.memory_space<vmem>>, %arg1: memref<576x64xf32, #tpu.memory_space<vmem>>, %arg2: memref<1x64xf32, #tpu.memory_space<vmem>>, %arg3: memref<1x64xf32, #tpu.memory_space<vmem>>, %arg4: memref<576x64xf32, #tpu.memory_space<vmem>>, %arg5: memref<1x64xf32, #tpu.memory_space<vmem>>, %arg6: memref<1x64xf32, #tpu.memory_space<vmem>>, %arg7: memref<2x8x8x64xf32, #tpu.memory_space<vmem>>, %arg8: memref<128x576xf32, #tpu.memory_space<vmem>>, %arg9: memref<2x10x10x64xf32, #tpu.memory_space<vmem>>) attributes {dimension_semantics = [], scalar_prefetch = 0 : i64, scratch_operands = 2 : i64, tpu.core_type = #tpu.core_type<tc>} {
    %c0 = arith.constant 0 : index
    %c0_0 = arith.constant 0 : index
    %c0_1 = arith.constant 0 : index
    %c0_2 = arith.constant 0 : index
    %0 = vector.load %arg0[%c0, %c0_0, %c0_1, %c0_2] : memref<2x10x10x64xf32, #tpu.memory_space<vmem>>, vector<2x8x8x64xf32>
    %1 = vector.shape_cast %0 : vector<2x8x8x64xf32> to vector<128x64xf32>
    %c0_3 = arith.constant 0 : index
    %c0_4 = arith.constant 0 : index
    %2 = vector.load %arg8[%c0_3, %c0_4] : memref<128x576xf32, #tpu.memory_space<vmem>>, vector<128x64xf32>
    tpu.vector_store %arg8[%c0_3, %c0_4], %1 {strides = array<i32>} : memref<128x576xf32, #tpu.memory_space<vmem>>, vector<128x64xf32>,
    %c0_5 = arith.constant 0 : index
    %c0_6 = arith.constant 0 : index
    %c1 = arith.constant 1 : index
    %c0_7 = arith.constant 0 : index
    %3 = vector.load %arg0[%c0_5, %c0_6, %c1, %c0_7] : memref<2x10x10x64xf32, #tpu.memory_space<vmem>>, vector<2x8x8x64xf32>
    %4 = vector.shape_cast %3 : vector<2x8x8x64xf32> to vector<128x64xf32>
    %c0_8 = arith.constant 0 : index
    %c64 = arith.constant 64 : index
    %5 = vector.load %arg8[%c0_8, %c64] : memref<128x576xf32, #tpu.memory_space<vmem>>, vector<128x64xf32>
    tpu.vector_store %arg8[%c0_8, %c64], %4 {strides = array<i32>} : memref<128x576xf32, #tpu.memory_space<vmem>>, vector<128x64xf32>,
    %c0_9 = arith.constant 0 : index
    %c0_10 = arith.constant 0 : index
    %c2 = arith.constant 2 : index
    %c0_11 = arith.constant 0 : index
    %6 = vector.load %arg0[%c0_9, %c0_10, %c2, %c0_11] : memref<2x10x10x64xf32, #tpu.memory_space<vmem>>, vector<2x8x8x64xf32>
    %7 = vector.shape_cast %6 : vector<2x8x8x64xf32> to vector<128x64xf32>
    %c0_12 = arith.constant 0 : index
    %c128 = arith.constant 128 : index
    %8 = vector.load %arg8[%c0_12, %c128] : memref<128x576xf32, #tpu.memory_space<vmem>>, vector<128x64xf32>
    tpu.vector_store %arg8[%c0_12, %c128], %7 {strides = array<i32>} : memref<128x576xf32, #tpu.memory_space<vmem>>, vector<128x64xf32>,
    %c0_13 = arith.constant 0 : index
    %c1_14 = arith.constant 1 : index
    %c0_15 = arith.constant 0 : index
    %c0_16 = arith.constant 0 : index
    %9 = vector.load %arg0[%c0_13, %c1_14, %c0_15, %c0_16] : memref<2x10x10x64xf32, #tpu.memory_space<vmem>>, vector<2x8x8x64xf32>
    %10 = vector.shape_cast %9 : vector<2x8x8x64xf32> to vector<128x64xf32>
    %c0_17 = arith.constant 0 : index
    %c192 = arith.constant 192 : index
    %11 = vector.load %arg8[%c0_17, %c192] : memref<128x576xf32, #tpu.memory_space<vmem>>, vector<128x64xf32>
    tpu.vector_store %arg8[%c0_17, %c192], %10 {strides = array<i32>} : memref<128x576xf32, #tpu.memory_space<vmem>>, vector<128x64xf32>,
    %c0_18 = arith.constant 0 : index
    %c1_19 = arith.constant 1 : index
    %c1_20 = arith.constant 1 : index
    %c0_21 = arith.constant 0 : index
    %12 = vector.load %arg0[%c0_18, %c1_19, %c1_20, %c0_21] : memref<2x10x10x64xf32, #tpu.memory_space<vmem>>, vector<2x8x8x64xf32>
    %13 = vector.shape_cast %12 : vector<2x8x8x64xf32> to vector<128x64xf32>
    %c0_22 = arith.constant 0 : index
    %c256 = arith.constant 256 : index
    %14 = vector.load %arg8[%c0_22, %c256] : memref<128x576xf32, #tpu.memory_space<vmem>>, vector<128x64xf32>
    tpu.vector_store %arg8[%c0_22, %c256], %13 {strides = array<i32>} : memref<128x576xf32, #tpu.memory_space<vmem>>, vector<128x64xf32>,
    %c0_23 = arith.constant 0 : index
    %c1_24 = arith.constant 1 : index
    %c2_25 = arith.constant 2 : index
    %c0_26 = arith.constant 0 : index
    %15 = vector.load %arg0[%c0_23, %c1_24, %c2_25, %c0_26] : memref<2x10x10x64xf32, #tpu.memory_space<vmem>>, vector<2x8x8x64xf32>
    %16 = vector.shape_cast %15 : vector<2x8x8x64xf32> to vector<128x64xf32>
    %c0_27 = arith.constant 0 : index
    %c320 = arith.constant 320 : index
    %17 = vector.load %arg8[%c0_27, %c320] : memref<128x576xf32, #tpu.memory_space<vmem>>, vector<128x64xf32>
    tpu.vector_store %arg8[%c0_27, %c320], %16 {strides = array<i32>} : memref<128x576xf32, #tpu.memory_space<vmem>>, vector<128x64xf32>,
    %c0_28 = arith.constant 0 : index
    %c2_29 = arith.constant 2 : index
    %c0_30 = arith.constant 0 : index
    %c0_31 = arith.constant 0 : index
    %18 = vector.load %arg0[%c0_28, %c2_29, %c0_30, %c0_31] : memref<2x10x10x64xf32, #tpu.memory_space<vmem>>, vector<2x8x8x64xf32>
    %19 = vector.shape_cast %18 : vector<2x8x8x64xf32> to vector<128x64xf32>
    %c0_32 = arith.constant 0 : index
    %c384 = arith.constant 384 : index
    %20 = vector.load %arg8[%c0_32, %c384] : memref<128x576xf32, #tpu.memory_space<vmem>>, vector<128x64xf32>
    tpu.vector_store %arg8[%c0_32, %c384], %19 {strides = array<i32>} : memref<128x576xf32, #tpu.memory_space<vmem>>, vector<128x64xf32>,
    %c0_33 = arith.constant 0 : index
    %c2_34 = arith.constant 2 : index
    %c1_35 = arith.constant 1 : index
    %c0_36 = arith.constant 0 : index
    %21 = vector.load %arg0[%c0_33, %c2_34, %c1_35, %c0_36] : memref<2x10x10x64xf32, #tpu.memory_space<vmem>>, vector<2x8x8x64xf32>
    %22 = vector.shape_cast %21 : vector<2x8x8x64xf32> to vector<128x64xf32>
    %c0_37 = arith.constant 0 : index
    %c448 = arith.constant 448 : index
    %23 = vector.load %arg8[%c0_37, %c448] : memref<128x576xf32, #tpu.memory_space<vmem>>, vector<128x64xf32>
    tpu.vector_store %arg8[%c0_37, %c448], %22 {strides = array<i32>} : memref<128x576xf32, #tpu.memory_space<vmem>>, vector<128x64xf32>,
    %c0_38 = arith.constant 0 : index
    %c2_39 = arith.constant 2 : index
    %c2_40 = arith.constant 2 : index
    %c0_41 = arith.constant 0 : index
    %24 = vector.load %arg0[%c0_38, %c2_39, %c2_40, %c0_41] : memref<2x10x10x64xf32, #tpu.memory_space<vmem>>, vector<2x8x8x64xf32>
    %25 = vector.shape_cast %24 : vector<2x8x8x64xf32> to vector<128x64xf32>
    %c0_42 = arith.constant 0 : index
    %c512 = arith.constant 512 : index
    %26 = vector.load %arg8[%c0_42, %c512] : memref<128x576xf32, #tpu.memory_space<vmem>>, vector<128x64xf32>
    tpu.vector_store %arg8[%c0_42, %c512], %25 {strides = array<i32>} : memref<128x576xf32, #tpu.memory_space<vmem>>, vector<128x64xf32>,
    %c0_43 = arith.constant 0 : index
    %c0_44 = arith.constant 0 : index
    %27 = vector.load %arg8[%c0_43, %c0_44] : memref<128x576xf32, #tpu.memory_space<vmem>>, vector<128x576xf32>
    %c0_45 = arith.constant 0 : index
    %c0_46 = arith.constant 0 : index
    %28 = vector.load %arg1[%c0_45, %c0_46] : memref<576x64xf32, #tpu.memory_space<vmem>>, vector<576x64xf32>
    %cst = arith.constant dense<0.000000e+00> : vector<128x64xf32>
    %29 = tpu.matmul %27, %28, %cst {dimension_numbers = #tpu.dot_dimension_numbers<[1], [0], [0], [1], [0, 0, 1, 1], [], []>} : vector<128x576xf32>, vector<576x64xf32>, vector<128x64xf32> -> vector<128x64xf32>
    %c0_47 = arith.constant 0 : index
    %c0_48 = arith.constant 0 : index
    %30 = vector.load %arg2[%c0_47, %c0_48] : memref<1x64xf32, #tpu.memory_space<vmem>>, vector<1x64xf32>
    %c0_49 = arith.constant 0 : index
    %c0_50 = arith.constant 0 : index
    %31 = vector.load %arg3[%c0_49, %c0_50] : memref<1x64xf32, #tpu.memory_space<vmem>>, vector<1x64xf32>
    %cst_51 = arith.constant dense<0.000000e+00> : vector<64xf32>
    %32 = vector.multi_reduction <add>, %29, %cst_51 [0] : vector<128x64xf32> to vector<64xf32>
    %33 = vector.shape_cast %32 : vector<64xf32> to vector<1x64xf32>
    %34 = arith.mulf %29, %29 : vector<128x64xf32>
    %cst_52 = arith.constant dense<0.000000e+00> : vector<64xf32>
    %35 = vector.multi_reduction <add>, %34, %cst_52 [0] : vector<128x64xf32> to vector<64xf32>
    %36 = vector.shape_cast %35 : vector<64xf32> to vector<1x64xf32>
    %cst_53 = arith.constant 7.812500e-03 : f32
    %37 = vector.broadcast %cst_53 : f32 to vector<1x64xf32>
    %38 = arith.mulf %33, %37 : vector<1x64xf32>
    %cst_54 = arith.constant 7.812500e-03 : f32
    %39 = vector.broadcast %cst_54 : f32 to vector<1x64xf32>
    %40 = arith.mulf %36, %39 : vector<1x64xf32>
    %41 = arith.mulf %38, %38 : vector<1x64xf32>
    %42 = arith.subf %40, %41 : vector<1x64xf32>
    %cst_55 = arith.constant 9.99999974E-6 : f32
    %43 = vector.broadcast %cst_55 : f32 to vector<1x64xf32>
    %44 = arith.addf %42, %43 : vector<1x64xf32>
    %45 = math.rsqrt %44 : vector<1x64xf32>
    %46 = arith.mulf %30, %45 : vector<1x64xf32>
    %47 = arith.mulf %38, %46 : vector<1x64xf32>
    %48 = arith.subf %31, %47 : vector<1x64xf32>
    %49 = vector.broadcast %46 : vector<1x64xf32> to vector<128x64xf32>
    %50 = arith.mulf %29, %49 : vector<128x64xf32>
    %51 = vector.broadcast %48 : vector<1x64xf32> to vector<128x64xf32>
    %52 = arith.addf %50, %51 : vector<128x64xf32>
    %cst_56 = arith.constant 0.000000e+00 : f32
    %53 = vector.broadcast %cst_56 : f32 to vector<128x64xf32>
    %54 = arith.maximumf %52, %53 : vector<128x64xf32>
    %cst_57 = arith.constant 0.000000e+00 : f32
    %55 = vector.broadcast %cst_57 : f32 to vector<2x1x10x64xf32>
    %cst_58 = arith.constant 0.000000e+00 : f32
    %56 = vector.broadcast %cst_58 : f32 to vector<2x8x1x64xf32>
    %c0_59 = arith.constant 0 : index
    %c0_60 = arith.constant 0 : index
    %c0_61 = arith.constant 0 : index
    %c0_62 = arith.constant 0 : index
    %57 = vector.load %arg9[%c0_59, %c0_60, %c0_61, %c0_62] : memref<2x10x10x64xf32, #tpu.memory_space<vmem>>, vector<2x1x10x64xf32>
    tpu.vector_store %arg9[%c0_59, %c0_60, %c0_61, %c0_62], %55 {strides = array<i32>} : memref<2x10x10x64xf32, #tpu.memory_space<vmem>>, vector<2x1x10x64xf32>,
    %c0_63 = arith.constant 0 : index
    %c9 = arith.constant 9 : index
    %c0_64 = arith.constant 0 : index
    %c0_65 = arith.constant 0 : index
    %58 = vector.load %arg9[%c0_63, %c9, %c0_64, %c0_65] : memref<2x10x10x64xf32, #tpu.memory_space<vmem>>, vector<2x1x10x64xf32>
    tpu.vector_store %arg9[%c0_63, %c9, %c0_64, %c0_65], %55 {strides = array<i32>} : memref<2x10x10x64xf32, #tpu.memory_space<vmem>>, vector<2x1x10x64xf32>,
    %c0_66 = arith.constant 0 : index
    %c1_67 = arith.constant 1 : index
    %c0_68 = arith.constant 0 : index
    %c0_69 = arith.constant 0 : index
    %59 = vector.load %arg9[%c0_66, %c1_67, %c0_68, %c0_69] : memref<2x10x10x64xf32, #tpu.memory_space<vmem>>, vector<2x8x1x64xf32>
    tpu.vector_store %arg9[%c0_66, %c1_67, %c0_68, %c0_69], %56 {strides = array<i32>} : memref<2x10x10x64xf32, #tpu.memory_space<vmem>>, vector<2x8x1x64xf32>,
    %c0_70 = arith.constant 0 : index
    %c1_71 = arith.constant 1 : index
    %c9_72 = arith.constant 9 : index
    %c0_73 = arith.constant 0 : index
    %60 = vector.load %arg9[%c0_70, %c1_71, %c9_72, %c0_73] : memref<2x10x10x64xf32, #tpu.memory_space<vmem>>, vector<2x8x1x64xf32>
    tpu.vector_store %arg9[%c0_70, %c1_71, %c9_72, %c0_73], %56 {strides = array<i32>} : memref<2x10x10x64xf32, #tpu.memory_space<vmem>>, vector<2x8x1x64xf32>,
    %61 = vector.shape_cast %54 : vector<128x64xf32> to vector<2x8x8x64xf32>
    %c0_74 = arith.constant 0 : index
    %c1_75 = arith.constant 1 : index
    %c1_76 = arith.constant 1 : index
    %c0_77 = arith.constant 0 : index
    %62 = vector.load %arg9[%c0_74, %c1_75, %c1_76, %c0_77] : memref<2x10x10x64xf32, #tpu.memory_space<vmem>>, vector<2x8x8x64xf32>
    tpu.vector_store %arg9[%c0_74, %c1_75, %c1_76, %c0_77], %61 {strides = array<i32>} : memref<2x10x10x64xf32, #tpu.memory_space<vmem>>, vector<2x8x8x64xf32>,
    %c0_78 = arith.constant 0 : index
    %c0_79 = arith.constant 0 : index
    %c0_80 = arith.constant 0 : index
    %c0_81 = arith.constant 0 : index
    %63 = vector.load %arg9[%c0_78, %c0_79, %c0_80, %c0_81] : memref<2x10x10x64xf32, #tpu.memory_space<vmem>>, vector<2x8x8x64xf32>
    %64 = vector.shape_cast %63 : vector<2x8x8x64xf32> to vector<128x64xf32>
    %c0_82 = arith.constant 0 : index
    %c0_83 = arith.constant 0 : index
    %65 = vector.load %arg8[%c0_82, %c0_83] : memref<128x576xf32, #tpu.memory_space<vmem>>, vector<128x64xf32>
    tpu.vector_store %arg8[%c0_82, %c0_83], %64 {strides = array<i32>} : memref<128x576xf32, #tpu.memory_space<vmem>>, vector<128x64xf32>,
    %c0_84 = arith.constant 0 : index
    %c0_85 = arith.constant 0 : index
    %c1_86 = arith.constant 1 : index
    %c0_87 = arith.constant 0 : index
    %66 = vector.load %arg9[%c0_84, %c0_85, %c1_86, %c0_87] : memref<2x10x10x64xf32, #tpu.memory_space<vmem>>, vector<2x8x8x64xf32>
    %67 = vector.shape_cast %66 : vector<2x8x8x64xf32> to vector<128x64xf32>
    %c0_88 = arith.constant 0 : index
    %c64_89 = arith.constant 64 : index
    %68 = vector.load %arg8[%c0_88, %c64_89] : memref<128x576xf32, #tpu.memory_space<vmem>>, vector<128x64xf32>
    tpu.vector_store %arg8[%c0_88, %c64_89], %67 {strides = array<i32>} : memref<128x576xf32, #tpu.memory_space<vmem>>, vector<128x64xf32>,
    %c0_90 = arith.constant 0 : index
    %c0_91 = arith.constant 0 : index
    %c2_92 = arith.constant 2 : index
    %c0_93 = arith.constant 0 : index
    %69 = vector.load %arg9[%c0_90, %c0_91, %c2_92, %c0_93] : memref<2x10x10x64xf32, #tpu.memory_space<vmem>>, vector<2x8x8x64xf32>
    %70 = vector.shape_cast %69 : vector<2x8x8x64xf32> to vector<128x64xf32>
    %c0_94 = arith.constant 0 : index
    %c128_95 = arith.constant 128 : index
    %71 = vector.load %arg8[%c0_94, %c128_95] : memref<128x576xf32, #tpu.memory_space<vmem>>, vector<128x64xf32>
    tpu.vector_store %arg8[%c0_94, %c128_95], %70 {strides = array<i32>} : memref<128x576xf32, #tpu.memory_space<vmem>>, vector<128x64xf32>,
    %c0_96 = arith.constant 0 : index
    %c1_97 = arith.constant 1 : index
    %c0_98 = arith.constant 0 : index
    %c0_99 = arith.constant 0 : index
    %72 = vector.load %arg9[%c0_96, %c1_97, %c0_98, %c0_99] : memref<2x10x10x64xf32, #tpu.memory_space<vmem>>, vector<2x8x8x64xf32>
    %73 = vector.shape_cast %72 : vector<2x8x8x64xf32> to vector<128x64xf32>
    %c0_100 = arith.constant 0 : index
    %c192_101 = arith.constant 192 : index
    %74 = vector.load %arg8[%c0_100, %c192_101] : memref<128x576xf32, #tpu.memory_space<vmem>>, vector<128x64xf32>
    tpu.vector_store %arg8[%c0_100, %c192_101], %73 {strides = array<i32>} : memref<128x576xf32, #tpu.memory_space<vmem>>, vector<128x64xf32>,
    %c0_102 = arith.constant 0 : index
    %c1_103 = arith.constant 1 : index
    %c1_104 = arith.constant 1 : index
    %c0_105 = arith.constant 0 : index
    %75 = vector.load %arg9[%c0_102, %c1_103, %c1_104, %c0_105] : memref<2x10x10x64xf32, #tpu.memory_space<vmem>>, vector<2x8x8x64xf32>
    %76 = vector.shape_cast %75 : vector<2x8x8x64xf32> to vector<128x64xf32>
    %c0_106 = arith.constant 0 : index
    %c256_107 = arith.constant 256 : index
    %77 = vector.load %arg8[%c0_106, %c256_107] : memref<128x576xf32, #tpu.memory_space<vmem>>, vector<128x64xf32>
    tpu.vector_store %arg8[%c0_106, %c256_107], %76 {strides = array<i32>} : memref<128x576xf32, #tpu.memory_space<vmem>>, vector<128x64xf32>,
    %c0_108 = arith.constant 0 : index
    %c1_109 = arith.constant 1 : index
    %c2_110 = arith.constant 2 : index
    %c0_111 = arith.constant 0 : index
    %78 = vector.load %arg9[%c0_108, %c1_109, %c2_110, %c0_111] : memref<2x10x10x64xf32, #tpu.memory_space<vmem>>, vector<2x8x8x64xf32>
    %79 = vector.shape_cast %78 : vector<2x8x8x64xf32> to vector<128x64xf32>
    %c0_112 = arith.constant 0 : index
    %c320_113 = arith.constant 320 : index
    %80 = vector.load %arg8[%c0_112, %c320_113] : memref<128x576xf32, #tpu.memory_space<vmem>>, vector<128x64xf32>
    tpu.vector_store %arg8[%c0_112, %c320_113], %79 {strides = array<i32>} : memref<128x576xf32, #tpu.memory_space<vmem>>, vector<128x64xf32>,
    %c0_114 = arith.constant 0 : index
    %c2_115 = arith.constant 2 : index
    %c0_116 = arith.constant 0 : index
    %c0_117 = arith.constant 0 : index
    %81 = vector.load %arg9[%c0_114, %c2_115, %c0_116, %c0_117] : memref<2x10x10x64xf32, #tpu.memory_space<vmem>>, vector<2x8x8x64xf32>
    %82 = vector.shape_cast %81 : vector<2x8x8x64xf32> to vector<128x64xf32>
    %c0_118 = arith.constant 0 : index
    %c384_119 = arith.constant 384 : index
    %83 = vector.load %arg8[%c0_118, %c384_119] : memref<128x576xf32, #tpu.memory_space<vmem>>, vector<128x64xf32>
    tpu.vector_store %arg8[%c0_118, %c384_119], %82 {strides = array<i32>} : memref<128x576xf32, #tpu.memory_space<vmem>>, vector<128x64xf32>,
    %c0_120 = arith.constant 0 : index
    %c2_121 = arith.constant 2 : index
    %c1_122 = arith.constant 1 : index
    %c0_123 = arith.constant 0 : index
    %84 = vector.load %arg9[%c0_120, %c2_121, %c1_122, %c0_123] : memref<2x10x10x64xf32, #tpu.memory_space<vmem>>, vector<2x8x8x64xf32>
    %85 = vector.shape_cast %84 : vector<2x8x8x64xf32> to vector<128x64xf32>
    %c0_124 = arith.constant 0 : index
    %c448_125 = arith.constant 448 : index
    %86 = vector.load %arg8[%c0_124, %c448_125] : memref<128x576xf32, #tpu.memory_space<vmem>>, vector<128x64xf32>
    tpu.vector_store %arg8[%c0_124, %c448_125], %85 {strides = array<i32>} : memref<128x576xf32, #tpu.memory_space<vmem>>, vector<128x64xf32>,
    %c0_126 = arith.constant 0 : index
    %c2_127 = arith.constant 2 : index
    %c2_128 = arith.constant 2 : index
    %c0_129 = arith.constant 0 : index
    %87 = vector.load %arg9[%c0_126, %c2_127, %c2_128, %c0_129] : memref<2x10x10x64xf32, #tpu.memory_space<vmem>>, vector<2x8x8x64xf32>
    %88 = vector.shape_cast %87 : vector<2x8x8x64xf32> to vector<128x64xf32>
    %c0_130 = arith.constant 0 : index
    %c512_131 = arith.constant 512 : index
    %89 = vector.load %arg8[%c0_130, %c512_131] : memref<128x576xf32, #tpu.memory_space<vmem>>, vector<128x64xf32>
    tpu.vector_store %arg8[%c0_130, %c512_131], %88 {strides = array<i32>} : memref<128x576xf32, #tpu.memory_space<vmem>>, vector<128x64xf32>,
    %c0_132 = arith.constant 0 : index
    %c0_133 = arith.constant 0 : index
    %90 = vector.load %arg8[%c0_132, %c0_133] : memref<128x576xf32, #tpu.memory_space<vmem>>, vector<128x576xf32>
    %c0_134 = arith.constant 0 : index
    %c0_135 = arith.constant 0 : index
    %91 = vector.load %arg4[%c0_134, %c0_135] : memref<576x64xf32, #tpu.memory_space<vmem>>, vector<576x64xf32>
    %cst_136 = arith.constant dense<0.000000e+00> : vector<128x64xf32>
    %92 = tpu.matmul %90, %91, %cst_136 {dimension_numbers = #tpu.dot_dimension_numbers<[1], [0], [0], [1], [0, 0, 1, 1], [], []>} : vector<128x576xf32>, vector<576x64xf32>, vector<128x64xf32> -> vector<128x64xf32>
    %c0_137 = arith.constant 0 : index
    %c0_138 = arith.constant 0 : index
    %93 = vector.load %arg5[%c0_137, %c0_138] : memref<1x64xf32, #tpu.memory_space<vmem>>, vector<1x64xf32>
    %c0_139 = arith.constant 0 : index
    %c0_140 = arith.constant 0 : index
    %94 = vector.load %arg6[%c0_139, %c0_140] : memref<1x64xf32, #tpu.memory_space<vmem>>, vector<1x64xf32>
    %cst_141 = arith.constant dense<0.000000e+00> : vector<64xf32>
    %95 = vector.multi_reduction <add>, %92, %cst_141 [0] : vector<128x64xf32> to vector<64xf32>
    %96 = vector.shape_cast %95 : vector<64xf32> to vector<1x64xf32>
    %97 = arith.mulf %92, %92 : vector<128x64xf32>
    %cst_142 = arith.constant dense<0.000000e+00> : vector<64xf32>
    %98 = vector.multi_reduction <add>, %97, %cst_142 [0] : vector<128x64xf32> to vector<64xf32>
    %99 = vector.shape_cast %98 : vector<64xf32> to vector<1x64xf32>
    %cst_143 = arith.constant 7.812500e-03 : f32
    %100 = vector.broadcast %cst_143 : f32 to vector<1x64xf32>
    %101 = arith.mulf %96, %100 : vector<1x64xf32>
    %cst_144 = arith.constant 7.812500e-03 : f32
    %102 = vector.broadcast %cst_144 : f32 to vector<1x64xf32>
    %103 = arith.mulf %99, %102 : vector<1x64xf32>
    %104 = arith.mulf %101, %101 : vector<1x64xf32>
    %105 = arith.subf %103, %104 : vector<1x64xf32>
    %cst_145 = arith.constant 9.99999974E-6 : f32
    %106 = vector.broadcast %cst_145 : f32 to vector<1x64xf32>
    %107 = arith.addf %105, %106 : vector<1x64xf32>
    %108 = math.rsqrt %107 : vector<1x64xf32>
    %109 = arith.mulf %93, %108 : vector<1x64xf32>
    %110 = arith.mulf %101, %109 : vector<1x64xf32>
    %111 = arith.subf %94, %110 : vector<1x64xf32>
    %c0_146 = arith.constant 0 : index
    %c1_147 = arith.constant 1 : index
    %c1_148 = arith.constant 1 : index
    %c0_149 = arith.constant 0 : index
    %112 = vector.load %arg0[%c0_146, %c1_147, %c1_148, %c0_149] : memref<2x10x10x64xf32, #tpu.memory_space<vmem>>, vector<2x8x8x64xf32>
    %113 = vector.shape_cast %112 : vector<2x8x8x64xf32> to vector<128x64xf32>
    %114 = vector.broadcast %109 : vector<1x64xf32> to vector<128x64xf32>
    %115 = arith.mulf %92, %114 : vector<128x64xf32>
    %116 = arith.addf %113, %115 : vector<128x64xf32>
    %117 = vector.broadcast %111 : vector<1x64xf32> to vector<128x64xf32>
    %118 = arith.addf %116, %117 : vector<128x64xf32>
    %cst_150 = arith.constant 0.000000e+00 : f32
    %119 = vector.broadcast %cst_150 : f32 to vector<128x64xf32>
    %120 = arith.maximumf %118, %119 : vector<128x64xf32>
    %121 = vector.shape_cast %120 : vector<128x64xf32> to vector<2x8x8x64xf32>
    %c0_151 = arith.constant 0 : index
    %c0_152 = arith.constant 0 : index
    %c0_153 = arith.constant 0 : index
    %c0_154 = arith.constant 0 : index
    %122 = vector.load %arg7[%c0_151, %c0_152, %c0_153, %c0_154] : memref<2x8x8x64xf32, #tpu.memory_space<vmem>>, vector<2x8x8x64xf32>
    tpu.vector_store %arg7[%c0_151, %c0_152, %c0_153, %c0_154], %121 {strides = array<i32>} : memref<2x8x8x64xf32, #tpu.memory_space<vmem>>, vector<2x8x8x64xf32>,
    return
  }
}

</mosaic_0001>

<llo_original>
// kernel: tpu_custom_call.1
$region0: #{tpu_custom_call.1}
  #allocation0 [shape = 'u32[]', space=smem, size = 0x4, offset = 0x4, fixed_abs, tag = 'smem constant byte address 0x4 - core index']
  #allocation1 [shape = 'u32[144,128]{1,0:T(1,128)}', space=vmem, size = 0x12000, scoped, tag = 'internal scratch']
  #allocation2 [shape = 'f32[128,576]{1,0:T(8,128)}', space=vmem, size = 0x50000, scoped, tag = 'scratch operand']
  #allocation3 [shape = 'f32[2,10,10,64]{3,2,1,0:T(8,128)}', space=vmem, size = 0x28000, scoped, tag = 'scratch operand']
  %s0 = inlined_call_operand.vmem [shape: f32[2,10,10,64], index: 0, kind: input, shape index: {}]
  %s1 = inlined_call_operand.vmem [shape: f32[576,64], index: 1, kind: input, shape index: {}]
  %s2 = inlined_call_operand.vmem [shape: f32[1,64], index: 2, kind: input, shape index: {}]
  %s3 = inlined_call_operand.vmem [shape: f32[1,64], index: 3, kind: input, shape index: {}]
  %s4 = inlined_call_operand.vmem [shape: f32[576,64], index: 4, kind: input, shape index: {}]
  %s5 = inlined_call_operand.vmem [shape: f32[1,64], index: 5, kind: input, shape index: {}]
  %s6 = inlined_call_operand.vmem [shape: f32[1,64], index: 6, kind: input, shape index: {}]
  %s7 = inlined_call_operand.hbm [shape: f32[2,8,8,64], index: 7, kind: output, shape index: {}]
  %s8 = sld [smem:[#allocation0]]
  $region38: #{tpu_custom_call.1} parent=0
    _
  %s10 = ssub.s32 1, %s8
  %s11 = scalar_select 0, %s10, %s8
  $region1: #{tpu_custom_call.1} parent=0
    #allocation4 [shape = 'u8[65536]{0}', space=vmem, size = 0x10000, scoped, tag = 'output window, operand 0, single buffered']
    #allocation5 [shape = 's32[1]{0}', space=sflag, size = 0x4, scoped, tag = 'scoped memory for tpu_custom_call.1']
    %12 = vsyncpa [#allocation5], 0
    // Predicated region
    $region2: #{tpu_custom_call.1} parent=1 // pred_check
      _
    $region3: #{tpu_custom_call.1} parent=1 // pred_check_branch
      %14 = sbr.rel (0) target = $region5
    $region4: #{tpu_custom_call.1} parent=1 // pred_region
      _
    $region5: #{tpu_custom_call.1} parent=1 // pred_fallthru
      _
    // Predicated region
    $region6: #{tpu_custom_call.1} parent=1 // pred_check
      _
    $region7: #{tpu_custom_call.1} parent=1 // pred_check_branch
      %16 = sbr.rel (0) target = $region9
    $region8: #{tpu_custom_call.1} parent=1 // pred_region
      _
    $region9: #{tpu_custom_call.1} parent=1 // pred_fallthru
      _
    // Predicated region
    $region10: #{tpu_custom_call.1} parent=1 // pred_check
      _
    $region11: #{tpu_custom_call.1} parent=1 // pred_check_branch
      %18 = sbr.rel (0) target = $region13
    $region12: #{tpu_custom_call.1} parent=1 // pred_region
      _
    $region13: #{tpu_custom_call.1} parent=1 // pred_fallthru
      _
    // Predicated region
    $region14: #{tpu_custom_call.1} parent=1 // pred_check
      _
    $region15: #{tpu_custom_call.1} parent=1 // pred_check_branch
      %20 = sbr.rel (0) target = $region17
    $region16: #{tpu_custom_call.1} parent=1 // pred_region
      _
    $region17: #{tpu_custom_call.1} parent=1 // pred_fallthru
      _
    // Predicated region
    $region18: #{tpu_custom_call.1} parent=1 // pred_check
      _
    $region19: #{tpu_custom_call.1} parent=1 // pred_check_branch
      %22 = sbr.rel (0) target = $region21
    $region20: #{tpu_custom_call.1} parent=1 // pred_region
      _
    $region21: #{tpu_custom_call.1} parent=1 // pred_fallthru
      _
    // Predicated region
    $region22: #{tpu_custom_call.1} parent=1 // pred_check
      _
    $region23: #{tpu_custom_call.1} parent=1 // pred_check_branch
      %24 = sbr.rel (0) target = $region25
    $region24: #{tpu_custom_call.1} parent=1 // pred_region
      _
    $region25: #{tpu_custom_call.1} parent=1 // pred_fallthru
      _
    // Predicated region
    $region26: #{tpu_custom_call.1} parent=1 // pred_check
      _
    $region27: #{tpu_custom_call.1} parent=1 // pred_check_branch
      %26 = sbr.rel (0) target = $region29
    $region28: #{tpu_custom_call.1} parent=1 // pred_region
      _
    $region29: #{tpu_custom_call.1} parent=1 // pred_fallthru
      _
    %v27 = vld [vmem:[%s0] sm:$0xff]
    %v28 = vld [vmem:[%s0 + $0x10] sm:$0xff]
    %v29 = vld [vmem:[%s0 + $0x20] sm:$0xff]
    %v30 = vld [vmem:[%s0 + $0x30] sm:$0xff]
    %v31 = vld [vmem:[%s0 + $0x40] sm:$0xff]
    %v32 = vld [vmem:[%s0 + $0x50] sm:$0xff]
    %v33 = vld [vmem:[%s0 + $0x60] sm:$0xff]
    %v34 = vld [vmem:[%s0 + $0x70] sm:$0xff]
    %v35 = vld [vmem:[%s0 + $0xa0] sm:$0xff]
    %v36 = vld [vmem:[%s0 + $0xb0] sm:$0xff]
    %v37 = vld [vmem:[%s0 + $0xc0] sm:$0xff]
    %v38 = vld [vmem:[%s0 + $0xd0] sm:$0xff]
    %v39 = vld [vmem:[%s0 + $0xe0] sm:$0xff]
    %v40 = vld [vmem:[%s0 + $0xf0] sm:$0xff]
    %v41 = vld [vmem:[%s0 + $0x100] sm:$0xff]
    %v42 = vld [vmem:[%s0 + $0x110] sm:$0xff]
    %vm43 = vcmask 523264
    %44 = vst.msk [vmem:[#allocation2] sm:$0xff] %vm43, %v27
    %45 = vst.msk [vmem:[#allocation2 + $0x28] sm:$0xff] %vm43, %v28
    %46 = vst.msk [vmem:[#allocation2 + $0x50] sm:$0xff] %vm43, %v29
    %47 = vst.msk [vmem:[#allocation2 + $0x78] sm:$0xff] %vm43, %v30
    %48 = vst.msk [vmem:[#allocation2 + $0xa0] sm:$0xff] %vm43, %v31
    %49 = vst.msk [vmem:[#allocation2 + $0xc8] sm:$0xff] %vm43, %v32
    %50 = vst.msk [vmem:[#allocation2 + $0xf0] sm:$0xff] %vm43, %v33
    %51 = vst.msk [vmem:[#allocation2 + $0x118] sm:$0xff] %vm43, %v34
    %52 = vst.msk [vmem:[#allocation2 + $0x140] sm:$0xff] %vm43, %v35
    %53 = vst.msk [vmem:[#allocation2 + $0x168] sm:$0xff] %vm43, %v36
    %54 = vst.msk [vmem:[#allocation2 + $0x190] sm:$0xff] %vm43, %v37
    %55 = vst.msk [vmem:[#allocation2 + $0x1b8] sm:$0xff] %vm43, %v38
    %56 = vst.msk [vmem:[#allocation2 + $0x1e0] sm:$0xff] %vm43, %v39
    %57 = vst.msk [vmem:[#allocation2 + $0x208] sm:$0xff] %vm43, %v40
    %58 = vst.msk [vmem:[#allocation2 + $0x230] sm:$0xff] %vm43, %v41
    %59 = vst.msk [vmem:[#allocation2 + $0x258] sm:$0xff] %vm43, %v42
    %v60 = vld [vmem:[%s0 + $0x1] sm:$0xff]
    %v61 = vld [vmem:[%s0 + $0x11] sm:$0xff]
    %v62 = vld [vmem:[%s0 + $0x21] sm:$0xff]
    %v63 = vld [vmem:[%s0 + $0x31] sm:$0xff]
    %v64 = vld [vmem:[%s0 + $0x41] sm:$0xff]
    %v65 = vld [vmem:[%s0 + $0x51] sm:$0xff]
    %v66 = vld [vmem:[%s0 + $0x61] sm:$0xff]
    %v67 = vld [vmem:[%s0 + $0x71] sm:$0xff]
    %v68 = vld [vmem:[%s0 + $0xa1] sm:$0xff]
    %v69 = vld [vmem:[%s0 + $0xb1] sm:$0xff]
    %v70 = vld [vmem:[%s0 + $0xc1] sm:$0xff]
    %v71 = vld [vmem:[%s0 + $0xd1] sm:$0xff]
    %v72 = vld [vmem:[%s0 + $0xe1] sm:$0xff]
    %v73 = vld [vmem:[%s0 + $0xf1] sm:$0xff]
    %v74 = vld [vmem:[%s0 + $0x101] sm:$0xff]
    %v75 = vld [vmem:[%s0 + $0x111] sm:$0xff]
    %92 = vrot.lane.b32.xlu0 %v60, 64
    %v93 = vpop.permute.xlu0 %92
    %94 = vrot.lane.b32.xlu0 %v61, 64
    %v95 = vpop.permute.xlu0 %94
    %96 = vrot.lane.b32.xlu0 %v62, 64
    %v97 = vpop.permute.xlu0 %96
    %98 = vrot.lane.b32.xlu0 %v63, 64
    %v99 = vpop.permute.xlu0 %98
    %100 = vrot.lane.b32.xlu0 %v64, 64
    %v101 = vpop.permute.xlu0 %100
    %102 = vrot.lane.b32.xlu0 %v65, 64
    %v103 = vpop.permute.xlu0 %102
    %104 = vrot.lane.b32.xlu0 %v66, 64
    %v105 = vpop.permute.xlu0 %104
    %106 = vrot.lane.b32.xlu0 %v67, 64
    %v107 = vpop.permute.xlu0 %106
    %108 = vrot.lane.b32.xlu0 %v68, 64
    %v109 = vpop.permute.xlu0 %108
    %110 = vrot.lane.b32.xlu0 %v69, 64
    %v111 = vpop.permute.xlu0 %110
    %112 = vrot.lane.b32.xlu0 %v70, 64
    %v113 = vpop.permute.xlu0 %112
    %114 = vrot.lane.b32.xlu0 %v71, 64
    %v115 = vpop.permute.xlu0 %114
    %116 = vrot.lane.b32.xlu0 %v72, 64
    %v117 = vpop.permute.xlu0 %116
    %118 = vrot.lane.b32.xlu0 %v73, 64
    %v119 = vpop.permute.xlu0 %118
    %120 = vrot.lane.b32.xlu0 %v74, 64
    %v121 = vpop.permute.xlu0 %120
    %122 = vrot.lane.b32.xlu0 %v75, 64
    %v123 = vpop.permute.xlu0 %122
    %vm140 = vcmask 1048064
    %141 = vst.msk [vmem:[#allocation2] sm:$0xff] %vm140, %v93
    %142 = vst.msk [vmem:[#allocation2 + $0x28] sm:$0xff] %vm140, %v95
    %143 = vst.msk [vmem:[#allocation2 + $0x50] sm:$0xff] %vm140, %v97
    %144 = vst.msk [vmem:[#allocation2 + $0x78] sm:$0xff] %vm140, %v99
    %145 = vst.msk [vmem:[#allocation2 + $0xa0] sm:$0xff] %vm140, %v101
    %146 = vst.msk [vmem:[#allocation2 + $0xc8] sm:$0xff] %vm140, %v103
    %147 = vst.msk [vmem:[#allocation2 + $0xf0] sm:$0xff] %vm140, %v105
    %148 = vst.msk [vmem:[#allocation2 + $0x118] sm:$0xff] %vm140, %v107
    %149 = vst.msk [vmem:[#allocation2 + $0x140] sm:$0xff] %vm140, %v109
    %150 = vst.msk [vmem:[#allocation2 + $0x168] sm:$0xff] %vm140, %v111
    %151 = vst.msk [vmem:[#allocation2 + $0x190] sm:$0xff] %vm140, %v113
    %152 = vst.msk [vmem:[#allocation2 + $0x1b8] sm:$0xff] %vm140, %v115
    %153 = vst.msk [vmem:[#allocation2 + $0x1e0] sm:$0xff] %vm140, %v117
    %154 = vst.msk [vmem:[#allocation2 + $0x208] sm:$0xff] %vm140, %v119
    %155 = vst.msk [vmem:[#allocation2 + $0x230] sm:$0xff] %vm140, %v121
    %156 = vst.msk [vmem:[#allocation2 + $0x258] sm:$0xff] %vm140, %v123
    %v157 = vld [vmem:[%s0 + $0x2] sm:$0xff]
    %v158 = vld [vmem:[%s0 + $0x12] sm:$0xff]
    %v159 = vld [vmem:[%s0 + $0x22] sm:$0xff]
    %v160 = vld [vmem:[%s0 + $0x32] sm:$0xff]
    %v161 = vld [vmem:[%s0 + $0x42] sm:$0xff]
    %v162 = vld [vmem:[%s0 + $0x52] sm:$0xff]
    %v163 = vld [vmem:[%s0 + $0x62] sm:$0xff]
    %v164 = vld [vmem:[%s0 + $0x72] sm:$0xff]
    %v165 = vld [vmem:[%s0 + $0xa2] sm:$0xff]
    %v166 = vld [vmem:[%s0 + $0xb2] sm:$0xff]
    %v167 = vld [vmem:[%s0 + $0xc2] sm:$0xff]
    %v168 = vld [vmem:[%s0 + $0xd2] sm:$0xff]
    %v169 = vld [vmem:[%s0 + $0xe2] sm:$0xff]
    %v170 = vld [vmem:[%s0 + $0xf2] sm:$0xff]
    %v171 = vld [vmem:[%s0 + $0x102] sm:$0xff]
    %v172 = vld [vmem:[%s0 + $0x112] sm:$0xff]
    %173 = vst.msk [vmem:[#allocation2 + $0x8] sm:$0xff] %vm43, %v157
    %174 = vst.msk [vmem:[#allocation2 + $0x30] sm:$0xff] %vm43, %v158
    %175 = vst.msk [vmem:[#allocation2 + $0x58] sm:$0xff] %vm43, %v159
    %176 = vst.msk [vmem:[#allocation2 + $0x80] sm:$0xff] %vm43, %v160
    %177 = vst.msk [vmem:[#allocation2 + $0xa8] sm:$0xff] %vm43, %v161
    %178 = vst.msk [vmem:[#allocation2 + $0xd0] sm:$0xff] %vm43, %v162
    %179 = vst.msk [vmem:[#allocation2 + $0xf8] sm:$0xff] %vm43, %v163
    %180 = vst.msk [vmem:[#allocation2 + $0x120] sm:$0xff] %vm43, %v164
    %181 = vst.msk [vmem:[#allocation2 + $0x148] sm:$0xff] %vm43, %v165
    %182 = vst.msk [vmem:[#allocation2 + $0x170] sm:$0xff] %vm43, %v166
    %183 = vst.msk [vmem:[#allocation2 + $0x198] sm:$0xff] %vm43, %v167
    %184 = vst.msk [vmem:[#allocation2 + $0x1c0] sm:$0xff] %vm43, %v168
    %185 = vst.msk [vmem:[#allocation2 + $0x1e8] sm:$0xff] %vm43, %v169
    %186 = vst.msk [vmem:[#allocation2 + $0x210] sm:$0xff] %vm43, %v170
    %187 = vst.msk [vmem:[#allocation2 + $0x238] sm:$0xff] %vm43, %v171
    %188 = vst.msk [vmem:[#allocation2 + $0x260] sm:$0xff] %vm43, %v172
    %s189 = scalar_lea.vmem %s0, 16
    %v190 = vld [vmem:[%s189] sm:$0xff]
    %v191 = vld [vmem:[%s189 + $0x10] sm:$0xff]
    %v192 = vld [vmem:[%s189 + $0x20] sm:$0xff]
    %v193 = vld [vmem:[%s189 + $0x30] sm:$0xff]
    %v194 = vld [vmem:[%s189 + $0x40] sm:$0xff]
    %v195 = vld [vmem:[%s189 + $0x50] sm:$0xff]
    %v196 = vld [vmem:[%s189 + $0x60] sm:$0xff]
    %v197 = vld [vmem:[%s189 + $0x70] sm:$0xff]
    %v198 = vld [vmem:[%s189 + $0xa0] sm:$0xff]
    %v199 = vld [vmem:[%s189 + $0xb0] sm:$0xff]
    %v200 = vld [vmem:[%s189 + $0xc0] sm:$0xff]
    %v201 = vld [vmem:[%s189 + $0xd0] sm:$0xff]
    %v202 = vld [vmem:[%s189 + $0xe0] sm:$0xff]
    %v203 = vld [vmem:[%s189 + $0xf0] sm:$0xff]
    %v204 = vld [vmem:[%s189 + $0x100] sm:$0xff]
    %v205 = vld [vmem:[%s189 + $0x110] sm:$0xff]
    %222 = vrot.lane.b32.xlu0 %v190, 64
    %v223 = vpop.permute.xlu0 %222
    %224 = vrot.lane.b32.xlu0 %v191, 64
    %v225 = vpop.permute.xlu0 %224
    %226 = vrot.lane.b32.xlu0 %v192, 64
    %v227 = vpop.permute.xlu0 %226
    %228 = vrot.lane.b32.xlu0 %v193, 64
    %v229 = vpop.permute.xlu0 %228
    %230 = vrot.lane.b32.xlu0 %v194, 64
    %v231 = vpop.permute.xlu0 %230
    %232 = vrot.lane.b32.xlu0 %v195, 64
    %v233 = vpop.permute.xlu0 %232
    %234 = vrot.lane.b32.xlu0 %v196, 64
    %v235 = vpop.permute.xlu0 %234
    %236 = vrot.lane.b32.xlu0 %v197, 64
    %v237 = vpop.permute.xlu0 %236
    %238 = vrot.lane.b32.xlu0 %v198, 64
    %v239 = vpop.permute.xlu0 %238
    %240 = vrot.lane.b32.xlu0 %v199, 64
    %v241 = vpop.permute.xlu0 %240
    %242 = vrot.lane.b32.xlu0 %v200, 64
    %v243 = vpop.permute.xlu0 %242
    %244 = vrot.lane.b32.xlu0 %v201, 64
    %v245 = vpop.permute.xlu0 %244
    %246 = vrot.lane.b32.xlu0 %v202, 64
    %v247 = vpop.permute.xlu0 %246
    %248 = vrot.lane.b32.xlu0 %v203, 64
    %v249 = vpop.permute.xlu0 %248
    %250 = vrot.lane.b32.xlu0 %v204, 64
    %v251 = vpop.permute.xlu0 %250
    %252 = vrot.lane.b32.xlu0 %v205, 64
    %v253 = vpop.permute.xlu0 %252
    %270 = vst.msk [vmem:[#allocation2 + $0x8] sm:$0xff] %vm140, %v223
    %271 = vst.msk [vmem:[#allocation2 + $0x30] sm:$0xff] %vm140, %v225
    %272 = vst.msk [vmem:[#allocation2 + $0x58] sm:$0xff] %vm140, %v227
    %273 = vst.msk [vmem:[#allocation2 + $0x80] sm:$0xff] %vm140, %v229
    %274 = vst.msk [vmem:[#allocation2 + $0xa8] sm:$0xff] %vm140, %v231
    %275 = vst.msk [vmem:[#allocation2 + $0xd0] sm:$0xff] %vm140, %v233
    %276 = vst.msk [vmem:[#allocation2 + $0xf8] sm:$0xff] %vm140, %v235
    %277 = vst.msk [vmem:[#allocation2 + $0x120] sm:$0xff] %vm140, %v237
    %278 = vst.msk [vmem:[#allocation2 + $0x148] sm:$0xff] %vm140, %v239
    %279 = vst.msk [vmem:[#allocation2 + $0x170] sm:$0xff] %vm140, %v241
    %280 = vst.msk [vmem:[#allocation2 + $0x198] sm:$0xff] %vm140, %v243
    %281 = vst.msk [vmem:[#allocation2 + $0x1c0] sm:$0xff] %vm140, %v245
    %282 = vst.msk [vmem:[#allocation2 + $0x1e8] sm:$0xff] %vm140, %v247
    %283 = vst.msk [vmem:[#allocation2 + $0x210] sm:$0xff] %vm140, %v249
    %284 = vst.msk [vmem:[#allocation2 + $0x238] sm:$0xff] %vm140, %v251
    %285 = vst.msk [vmem:[#allocation2 + $0x260] sm:$0xff] %vm140, %v253
    %v286 = vld [vmem:[%s189 + $0x1] sm:$0xff]
    %v287 = vld [vmem:[%s189 + $0x11] sm:$0xff]
    %v288 = vld [vmem:[%s189 + $0x21] sm:$0xff]
    %v289 = vld [vmem:[%s189 + $0x31] sm:$0xff]
    %v290 = vld [vmem:[%s189 + $0x41] sm:$0xff]
    %v291 = vld [vmem:[%s189 + $0x51] sm:$0xff]
    %v292 = vld [vmem:[%s189 + $0x61] sm:$0xff]
    %v293 = vld [vmem:[%s189 + $0x71] sm:$0xff]
    %v294 = vld [vmem:[%s189 + $0xa1] sm:$0xff]
    %v295 = vld [vmem:[%s189 + $0xb1] sm:$0xff]
    %v296 = vld [vmem:[%s189 + $0xc1] sm:$0xff]
    %v297 = vld [vmem:[%s189 + $0xd1] sm:$0xff]
    %v298 = vld [vmem:[%s189 + $0xe1] sm:$0xff]
    %v299 = vld [vmem:[%s189 + $0xf1] sm:$0xff]
    %v300 = vld [vmem:[%s189 + $0x101] sm:$0xff]
    %v301 = vld [vmem:[%s189 + $0x111] sm:$0xff]
    %302 = vst.msk [vmem:[#allocation2 + $0x10] sm:$0xff] %vm43, %v286
    %303 = vst.msk [vmem:[#allocation2 + $0x38] sm:$0xff] %vm43, %v287
    %304 = vst.msk [vmem:[#allocation2 + $0x60] sm:$0xff] %vm43, %v288
    %305 = vst.msk [vmem:[#allocation2 + $0x88] sm:$0xff] %vm43, %v289
    %306 = vst.msk [vmem:[#allocation2 + $0xb0] sm:$0xff] %vm43, %v290
    %307 = vst.msk [vmem:[#allocation2 + $0xd8] sm:$0xff] %vm43, %v291
    %308 = vst.msk [vmem:[#allocation2 + $0x100] sm:$0xff] %vm43, %v292
    %309 = vst.msk [vmem:[#allocation2 + $0x128] sm:$0xff] %vm43, %v293
    %310 = vst.msk [vmem:[#allocation2 + $0x150] sm:$0xff] %vm43, %v294
    %311 = vst.msk [vmem:[#allocation2 + $0x178] sm:$0xff] %vm43, %v295
    %312 = vst.msk [vmem:[#allocation2 + $0x1a0] sm:$0xff] %vm43, %v296
    %313 = vst.msk [vmem:[#allocation2 + $0x1c8] sm:$0xff] %vm43, %v297
    %314 = vst.msk [vmem:[#allocation2 + $0x1f0] sm:$0xff] %vm43, %v298
    %315 = vst.msk [vmem:[#allocation2 + $0x218] sm:$0xff] %vm43, %v299
    %316 = vst.msk [vmem:[#allocation2 + $0x240] sm:$0xff] %vm43, %v300
    %317 = vst.msk [vmem:[#allocation2 + $0x268] sm:$0xff] %vm43, %v301
    %v318 = vld [vmem:[%s189 + $0x2] sm:$0xff]
    %v319 = vld [vmem:[%s189 + $0x12] sm:$0xff]
    %v320 = vld [vmem:[%s189 + $0x22] sm:$0xff]
    %v321 = vld [vmem:[%s189 + $0x32] sm:$0xff]
    %v322 = vld [vmem:[%s189 + $0x42] sm:$0xff]
    %v323 = vld [vmem:[%s189 + $0x52] sm:$0xff]
    %v324 = vld [vmem:[%s189 + $0x62] sm:$0xff]
    %v325 = vld [vmem:[%s189 + $0x72] sm:$0xff]
    %v326 = vld [vmem:[%s189 + $0xa2] sm:$0xff]
    %v327 = vld [vmem:[%s189 + $0xb2] sm:$0xff]
    %v328 = vld [vmem:[%s189 + $0xc2] sm:$0xff]
    %v329 = vld [vmem:[%s189 + $0xd2] sm:$0xff]
    %v330 = vld [vmem:[%s189 + $0xe2] sm:$0xff]
    %v331 = vld [vmem:[%s189 + $0xf2] sm:$0xff]
    %v332 = vld [vmem:[%s189 + $0x102] sm:$0xff]
    %v333 = vld [vmem:[%s189 + $0x112] sm:$0xff]
    %350 = vrot.lane.b32.xlu0 %v318, 64
    %v351 = vpop.permute.xlu0 %350
    %352 = vrot.lane.b32.xlu0 %v319, 64
    %v353 = vpop.permute.xlu0 %352
    %354 = vrot.lane.b32.xlu0 %v320, 64
    %v355 = vpop.permute.xlu0 %354
    %356 = vrot.lane.b32.xlu0 %v321, 64
    %v357 = vpop.permute.xlu0 %356
    %358 = vrot.lane.b32.xlu0 %v322, 64
    %v359 = vpop.permute.xlu0 %358
    %360 = vrot.lane.b32.xlu0 %v323, 64
    %v361 = vpop.permute.xlu0 %360
    %362 = vrot.lane.b32.xlu0 %v324, 64
    %v363 = vpop.permute.xlu0 %362
    %364 = vrot.lane.b32.xlu0 %v325, 64
    %v365 = vpop.permute.xlu0 %364
    %366 = vrot.lane.b32.xlu0 %v326, 64
    %v367 = vpop.permute.xlu0 %366
    %368 = vrot.lane.b32.xlu0 %v327, 64
    %v369 = vpop.permute.xlu0 %368
    %370 = vrot.lane.b32.xlu0 %v328, 64
    %v371 = vpop.permute.xlu0 %370
    %372 = vrot.lane.b32.xlu0 %v329, 64
    %v373 = vpop.permute.xlu0 %372
    %374 = vrot.lane.b32.xlu0 %v330, 64
    %v375 = vpop.permute.xlu0 %374
    %376 = vrot.lane.b32.xlu0 %v331, 64
    %v377 = vpop.permute.xlu0 %376
    %378 = vrot.lane.b32.xlu0 %v332, 64
    %v379 = vpop.permute.xlu0 %378
    %380 = vrot.lane.b32.xlu0 %v333, 64
    %v381 = vpop.permute.xlu0 %380
    %398 = vst.msk [vmem:[#allocation2 + $0x10] sm:$0xff] %vm140, %v351
    %399 = vst.msk [vmem:[#allocation2 + $0x38] sm:$0xff] %vm140, %v353
    %400 = vst.msk [vmem:[#allocation2 + $0x60] sm:$0xff] %vm140, %v355
    %401 = vst.msk [vmem:[#allocation2 + $0x88] sm:$0xff] %vm140, %v357
    %402 = vst.msk [vmem:[#allocation2 + $0xb0] sm:$0xff] %vm140, %v359
    %403 = vst.msk [vmem:[#allocation2 + $0xd8] sm:$0xff] %vm140, %v361
    %404 = vst.msk [vmem:[#allocation2 + $0x100] sm:$0xff] %vm140, %v363
    %405 = vst.msk [vmem:[#allocation2 + $0x128] sm:$0xff] %vm140, %v365
    %406 = vst.msk [vmem:[#allocation2 + $0x150] sm:$0xff] %vm140, %v367
    %407 = vst.msk [vmem:[#allocation2 + $0x178] sm:$0xff] %vm140, %v369
    %408 = vst.msk [vmem:[#allocation2 + $0x1a0] sm:$0xff] %vm140, %v371
    %409 = vst.msk [vmem:[#allocation2 + $0x1c8] sm:$0xff] %vm140, %v373
    %410 = vst.msk [vmem:[#allocation2 + $0x1f0] sm:$0xff] %vm140, %v375
    %411 = vst.msk [vmem:[#allocation2 + $0x218] sm:$0xff] %vm140, %v377
    %412 = vst.msk [vmem:[#allocation2 + $0x240] sm:$0xff] %vm140, %v379
    %413 = vst.msk [vmem:[#allocation2 + $0x268] sm:$0xff] %vm140, %v381
    %s414 = scalar_lea.vmem %s0, 32
    %v415 = vld [vmem:[%s414] sm:$0xff]
    %v416 = vld [vmem:[%s414 + $0x10] sm:$0xff]
    %v417 = vld [vmem:[%s414 + $0x20] sm:$0xff]
    %v418 = vld [vmem:[%s414 + $0x30] sm:$0xff]
    %v419 = vld [vmem:[%s414 + $0x40] sm:$0xff]
    %v420 = vld [vmem:[%s414 + $0x50] sm:$0xff]
    %v421 = vld [vmem:[%s414 + $0x60] sm:$0xff]
    %v422 = vld [vmem:[%s414 + $0x70] sm:$0xff]
    %v423 = vld [vmem:[%s414 + $0xa0] sm:$0xff]
    %v424 = vld [vmem:[%s414 + $0xb0] sm:$0xff]
    %v425 = vld [vmem:[%s414 + $0xc0] sm:$0xff]
    %v426 = vld [vmem:[%s414 + $0xd0] sm:$0xff]
    %v427 = vld [vmem:[%s414 + $0xe0] sm:$0xff]
    %v428 = vld [vmem:[%s414 + $0xf0] sm:$0xff]
    %v429 = vld [vmem:[%s414 + $0x100] sm:$0xff]
    %v430 = vld [vmem:[%s414 + $0x110] sm:$0xff]
    %431 = vst.msk [vmem:[#allocation2 + $0x18] sm:$0xff] %vm43, %v415
    %432 = vst.msk [vmem:[#allocation2 + $0x40] sm:$0xff] %vm43, %v416
    %433 = vst.msk [vmem:[#allocation2 + $0x68] sm:$0xff] %vm43, %v417
    %434 = vst.msk [vmem:[#allocation2 + $0x90] sm:$0xff] %vm43, %v418
    %435 = vst.msk [vmem:[#allocation2 + $0xb8] sm:$0xff] %vm43, %v419
    %436 = vst.msk [vmem:[#allocation2 + $0xe0] sm:$0xff] %vm43, %v420
    %437 = vst.msk [vmem:[#allocation2 + $0x108] sm:$0xff] %vm43, %v421
    %438 = vst.msk [vmem:[#allocation2 + $0x130] sm:$0xff] %vm43, %v422
    %439 = vst.msk [vmem:[#allocation2 + $0x158] sm:$0xff] %vm43, %v423
    %440 = vst.msk [vmem:[#allocation2 + $0x180] sm:$0xff] %vm43, %v424
    %441 = vst.msk [vmem:[#allocation2 + $0x1a8] sm:$0xff] %vm43, %v425
    %442 = vst.msk [vmem:[#allocation2 + $0x1d0] sm:$0xff] %vm43, %v426
    %443 = vst.msk [vmem:[#allocation2 + $0x1f8] sm:$0xff] %vm43, %v427
    %444 = vst.msk [vmem:[#allocation2 + $0x220] sm:$0xff] %vm43, %v428
    %445 = vst.msk [vmem:[#allocation2 + $0x248] sm:$0xff] %vm43, %v429
    %446 = vst.msk [vmem:[#allocation2 + $0x270] sm:$0xff] %vm43, %v430
    %v447 = vld [vmem:[%s414 + $0x1] sm:$0xff]
    %v448 = vld [vmem:[%s414 + $0x11] sm:$0xff]
    %v449 = vld [vmem:[%s414 + $0x21] sm:$0xff]
    %v450 = vld [vmem:[%s414 + $0x31] sm:$0xff]
    %v451 = vld [vmem:[%s414 + $0x41] sm:$0xff]
    %v452 = vld [vmem:[%s414 + $0x51] sm:$0xff]
    %v453 = vld [vmem:[%s414 + $0x61] sm:$0xff]
    %v454 = vld [vmem:[%s414 + $0x71] sm:$0xff]
    %v455 = vld [vmem:[%s414 + $0xa1] sm:$0xff]
    %v456 = vld [vmem:[%s414 + $0xb1] sm:$0xff]
    %v457 = vld [vmem:[%s414 + $0xc1] sm:$0xff]
    %v458 = vld [vmem:[%s414 + $0xd1] sm:$0xff]
    %v459 = vld [vmem:[%s414 + $0xe1] sm:$0xff]
    %v460 = vld [vmem:[%s414 + $0xf1] sm:$0xff]
    %v461 = vld [vmem:[%s414 + $0x101] sm:$0xff]
    %v462 = vld [vmem:[%s414 + $0x111] sm:$0xff]
    %479 = vrot.lane.b32.xlu0 %v447, 64
    %v480 = vpop.permute.xlu0 %479
    %481 = vrot.lane.b32.xlu0 %v448, 64
    %v482 = vpop.permute.xlu0 %481
    %483 = vrot.lane.b32.xlu0 %v449, 64
    %v484 = vpop.permute.xlu0 %483
    %485 = vrot.lane.b32.xlu0 %v450, 64
    %v486 = vpop.permute.xlu0 %485
    %487 = vrot.lane.b32.xlu0 %v451, 64
    %v488 = vpop.permute.xlu0 %487
    %489 = vrot.lane.b32.xlu0 %v452, 64
    %v490 = vpop.permute.xlu0 %489
    %491 = vrot.lane.b32.xlu0 %v453, 64
    %v492 = vpop.permute.xlu0 %491
    %493 = vrot.lane.b32.xlu0 %v454, 64
    %v494 = vpop.permute.xlu0 %493
    %495 = vrot.lane.b32.xlu0 %v455, 64
    %v496 = vpop.permute.xlu0 %495
    %497 = vrot.lane.b32.xlu0 %v456, 64
    %v498 = vpop.permute.xlu0 %497
    %499 = vrot.lane.b32.xlu0 %v457, 64
    %v500 = vpop.permute.xlu0 %499
    %501 = vrot.lane.b32.xlu0 %v458, 64
    %v502 = vpop.permute.xlu0 %501
    %503 = vrot.lane.b32.xlu0 %v459, 64
    %v504 = vpop.permute.xlu0 %503
    %505 = vrot.lane.b32.xlu0 %v460, 64
    %v506 = vpop.permute.xlu0 %505
    %507 = vrot.lane.b32.xlu0 %v461, 64
    %v508 = vpop.permute.xlu0 %507
    %509 = vrot.lane.b32.xlu0 %v462, 64
    %v510 = vpop.permute.xlu0 %509
    %527 = vst.msk [vmem:[#allocation2 + $0x18] sm:$0xff] %vm140, %v480
    %528 = vst.msk [vmem:[#allocation2 + $0x40] sm:$0xff] %vm140, %v482
    %529 = vst.msk [vmem:[#allocation2 + $0x68] sm:$0xff] %vm140, %v484
    %530 = vst.msk [vmem:[#allocation2 + $0x90] sm:$0xff] %vm140, %v486
    %531 = vst.msk [vmem:[#allocation2 + $0xb8] sm:$0xff] %vm140, %v488
    %532 = vst.msk [vmem:[#allocation2 + $0xe0] sm:$0xff] %vm140, %v490
    %533 = vst.msk [vmem:[#allocation2 + $0x108] sm:$0xff] %vm140, %v492
    %534 = vst.msk [vmem:[#allocation2 + $0x130] sm:$0xff] %vm140, %v494
    %535 = vst.msk [vmem:[#allocation2 + $0x158] sm:$0xff] %vm140, %v496
    %536 = vst.msk [vmem:[#allocation2 + $0x180] sm:$0xff] %vm140, %v498
    %537 = vst.msk [vmem:[#allocation2 + $0x1a8] sm:$0xff] %vm140, %v500
    %538 = vst.msk [vmem:[#allocation2 + $0x1d0] sm:$0xff] %vm140, %v502
    %539 = vst.msk [vmem:[#allocation2 + $0x1f8] sm:$0xff] %vm140, %v504
    %540 = vst.msk [vmem:[#allocation2 + $0x220] sm:$0xff] %vm140, %v506
    %541 = vst.msk [vmem:[#allocation2 + $0x248] sm:$0xff] %vm140, %v508
    %542 = vst.msk [vmem:[#allocation2 + $0x270] sm:$0xff] %vm140, %v510
    %v543 = vld [vmem:[%s414 + $0x2] sm:$0xff]
    %v544 = vld [vmem:[%s414 + $0x12] sm:$0xff]
    %v545 = vld [vmem:[%s414 + $0x22] sm:$0xff]
    %v546 = vld [vmem:[%s414 + $0x32] sm:$0xff]
    %v547 = vld [vmem:[%s414 + $0x42] sm:$0xff]
    %v548 = vld [vmem:[%s414 + $0x52] sm:$0xff]
    %v549 = vld [vmem:[%s414 + $0x62] sm:$0xff]
    %v550 = vld [vmem:[%s414 + $0x72] sm:$0xff]
    %v551 = vld [vmem:[%s414 + $0xa2] sm:$0xff]
    %v552 = vld [vmem:[%s414 + $0xb2] sm:$0xff]
    %v553 = vld [vmem:[%s414 + $0xc2] sm:$0xff]
    %v554 = vld [vmem:[%s414 + $0xd2] sm:$0xff]
    %v555 = vld [vmem:[%s414 + $0xe2] sm:$0xff]
    %v556 = vld [vmem:[%s414 + $0xf2] sm:$0xff]
    %v557 = vld [vmem:[%s414 + $0x102] sm:$0xff]
    %v558 = vld [vmem:[%s414 + $0x112] sm:$0xff]
    %559 = vst.msk [vmem:[#allocation2 + $0x20] sm:$0xff] %vm43, %v543
    %560 = vst.msk [vmem:[#allocation2 + $0x48] sm:$0xff] %vm43, %v544
    %561 = vst.msk [vmem:[#allocation2 + $0x70] sm:$0xff] %vm43, %v545
    %562 = vst.msk [vmem:[#allocation2 + $0x98] sm:$0xff] %vm43, %v546
    %563 = vst.msk [vmem:[#allocation2 + $0xc0] sm:$0xff] %vm43, %v547
    %564 = vst.msk [vmem:[#allocation2 + $0xe8] sm:$0xff] %vm43, %v548
    %565 = vst.msk [vmem:[#allocation2 + $0x110] sm:$0xff] %vm43, %v549
    %566 = vst.msk [vmem:[#allocation2 + $0x138] sm:$0xff] %vm43, %v550
    %567 = vst.msk [vmem:[#allocation2 + $0x160] sm:$0xff] %vm43, %v551
    %568 = vst.msk [vmem:[#allocation2 + $0x188] sm:$0xff] %vm43, %v552
    %569 = vst.msk [vmem:[#allocation2 + $0x1b0] sm:$0xff] %vm43, %v553
    %570 = vst.msk [vmem:[#allocation2 + $0x1d8] sm:$0xff] %vm43, %v554
    %571 = vst.msk [vmem:[#allocation2 + $0x200] sm:$0xff] %vm43, %v555
    %572 = vst.msk [vmem:[#allocation2 + $0x228] sm:$0xff] %vm43, %v556
    %573 = vst.msk [vmem:[#allocation2 + $0x250] sm:$0xff] %vm43, %v557
    %574 = vst.msk [vmem:[#allocation2 + $0x278] sm:$0xff] %vm43, %v558
    %v575 = vld [vmem:[#allocation2] sm:$0xff]
    %v576 = vld [vmem:[#allocation2 + $0x8] sm:$0xff]
    %v577 = vld [vmem:[#allocation2 + $0x10] sm:$0xff]
    %v578 = vld [vmem:[#allocation2 + $0x18] sm:$0xff]
    %v579 = vld [vmem:[#allocation2 + $0x20] sm:$0xff]
    %v580 = vld [vmem:[#allocation2 + $0x28] sm:$0xff]
    %v581 = vld [vmem:[#allocation2 + $0x30] sm:$0xff]
    %v582 = vld [vmem:[#allocation2 + $0x38] sm:$0xff]
    %v583 = vld [vmem:[#allocation2 + $0x40] sm:$0xff]
    %v584 = vld [vmem:[#allocation2 + $0x48] sm:$0xff]
    %v585 = vld [vmem:[#allocation2 + $0x50] sm:$0xff]
    %v586 = vld [vmem:[#allocation2 + $0x58] sm:$0xff]
    %v587 = vld [vmem:[#allocation2 + $0x60] sm:$0xff]
    %v588 = vld [vmem:[#allocation2 + $0x68] sm:$0xff]
    %v589 = vld [vmem:[#allocation2 + $0x70] sm:$0xff]
    %v590 = vld [vmem:[#allocation2 + $0x78] sm:$0xff]
    %v591 = vld [vmem:[#allocation2 + $0x80] sm:$0xff]
    %v592 = vld [vmem:[#allocation2 + $0x88] sm:$0xff]
    %v593 = vld [vmem:[#allocation2 + $0x90] sm:$0xff]
    %v594 = vld [vmem:[#allocation2 + $0x98] sm:$0xff]
    %v595 = vld [vmem:[#allocation2 + $0xa0] sm:$0xff]
    %v596 = vld [vmem:[#allocation2 + $0xa8] sm:$0xff]
    %v597 = vld [vmem:[#allocation2 + $0xb0] sm:$0xff]
    %v598 = vld [vmem:[#allocation2 + $0xb8] sm:$0xff]
    %v599 = vld [vmem:[#allocation2 + $0xc0] sm:$0xff]
    %v600 = vld [vmem:[#allocation2 + $0xc8] sm:$0xff]
    %v601 = vld [vmem:[#allocation2 + $0xd0] sm:$0xff]
    %v602 = vld [vmem:[#allocation2 + $0xd8] sm:$0xff]
    %v603 = vld [vmem:[#allocation2 + $0xe0] sm:$0xff]
    %v604 = vld [vmem:[#allocation2 + $0xe8] sm:$0xff]
    %v605 = vld [vmem:[#allocation2 + $0xf0] sm:$0xff]
    %v606 = vld [vmem:[#allocation2 + $0xf8] sm:$0xff]
    %v607 = vld [vmem:[#allocation2 + $0x100] sm:$0xff]
    %v608 = vld [vmem:[#allocation2 + $0x108] sm:$0xff]
    %v609 = vld [vmem:[#allocation2 + $0x110] sm:$0xff]
    %v610 = vld [vmem:[#allocation2 + $0x118] sm:$0xff]
    %v611 = vld [vmem:[#allocation2 + $0x120] sm:$0xff]
    %v612 = vld [vmem:[#allocation2 + $0x128] sm:$0xff]
    %v613 = vld [vmem:[#allocation2 + $0x130] sm:$0xff]
    %v614 = vld [vmem:[#allocation2 + $0x138] sm:$0xff]
    %v615 = vld [vmem:[#allocation2 + $0x140] sm:$0xff]
    %v616 = vld [vmem:[#allocation2 + $0x148] sm:$0xff]
    %v617 = vld [vmem:[#allocation2 + $0x150] sm:$0xff]
    %v618 = vld [vmem:[#allocation2 + $0x158] sm:$0xff]
    %v619 = vld [vmem:[#allocation2 + $0x160] sm:$0xff]
    %v620 = vld [vmem:[#allocation2 + $0x168] sm:$0xff]
    %v621 = vld [vmem:[#allocation2 + $0x170] sm:$0xff]
    %v622 = vld [vmem:[#allocation2 + $0x178] sm:$0xff]
    %v623 = vld [vmem:[#allocation2 + $0x180] sm:$0xff]
    %v624 = vld [vmem:[#allocation2 + $0x188] sm:$0xff]
    %v625 = vld [vmem:[#allocation2 + $0x190] sm:$0xff]
    %v626 = vld [vmem:[#allocation2 + $0x198] sm:$0xff]
    %v627 = vld [vmem:[#allocation2 + $0x1a0] sm:$0xff]
    %v628 = vld [vmem:[#allocation2 + $0x1a8] sm:$0xff]
    %v629 = vld [vmem:[#allocation2 + $0x1b0] sm:$0xff]
    %v630 = vld [vmem:[#allocation2 + $0x1b8] sm:$0xff]
    %v631 = vld [vmem:[#allocation2 + $0x1c0] sm:$0xff]
    %v632 = vld [vmem:[#allocation2 + $0x1c8] sm:$0xff]
    %v633 = vld [vmem:[#allocation2 + $0x1d0] sm:$0xff]
    %v634 = vld [vmem:[#allocation2 + $0x1d8] sm:$0xff]
    %v635 = vld [vmem:[#allocation2 + $0x1e0] sm:$0xff]
    %v636 = vld [vmem:[#allocation2 + $0x1e8] sm:$0xff]
    %v637 = vld [vmem:[#allocation2 + $0x1f0] sm:$0xff]
    %v638 = vld [vmem:[#allocation2 + $0x1f8] sm:$0xff]
    %v639 = vld [vmem:[#allocation2 + $0x200] sm:$0xff]
    %v640 = vld [vmem:[#allocation2 + $0x208] sm:$0xff]
    %v641 = vld [vmem:[#allocation2 + $0x210] sm:$0xff]
    %v642 = vld [vmem:[#allocation2 + $0x218] sm:$0xff]
    %v643 = vld [vmem:[#allocation2 + $0x220] sm:$0xff]
    %v644 = vld [vmem:[#allocation2 + $0x228] sm:$0xff]
    %v645 = vld [vmem:[#allocation2 + $0x230] sm:$0xff]
    %v646 = vld [vmem:[#allocation2 + $0x238] sm:$0xff]
    %v647 = vld [vmem:[#allocation2 + $0x240] sm:$0xff]
    %v648 = vld [vmem:[#allocation2 + $0x248] sm:$0xff]
    %v649 = vld [vmem:[#allocation2 + $0x250] sm:$0xff]
    %v650 = vld [vmem:[#allocation2 + $0x258] sm:$0xff]
    %v651 = vld [vmem:[#allocation2 + $0x260] sm:$0xff]
    %v652 = vld [vmem:[#allocation2 + $0x268] sm:$0xff]
    %v653 = vld [vmem:[#allocation2 + $0x270] sm:$0xff]
    %v654 = vld [vmem:[#allocation2 + $0x278] sm:$0xff]
    %v655 = vld [vmem:[%s1] sm:$0xff]
    %v656 = vld [vmem:[%s1 + $0x8] sm:$0xff]
    %v657 = vld [vmem:[%s1 + $0x10] sm:$0xff]
    %v658 = vld [vmem:[%s1 + $0x18] sm:$0xff]
    %v659 = vld [vmem:[%s1 + $0x20] sm:$0xff]
    %v660 = vld [vmem:[%s1 + $0x28] sm:$0xff]
    %v661 = vld [vmem:[%s1 + $0x30] sm:$0xff]
    %v662 = vld [vmem:[%s1 + $0x38] sm:$0xff]
    %v663 = vld [vmem:[%s1 + $0x40] sm:$0xff]
    %v664 = vld [vmem:[%s1 + $0x48] sm:$0xff]
    %v665 = vld [vmem:[%s1 + $0x50] sm:$0xff]
    %v666 = vld [vmem:[%s1 + $0x58] sm:$0xff]
    %v667 = vld [vmem:[%s1 + $0x60] sm:$0xff]
    %v668 = vld [vmem:[%s1 + $0x68] sm:$0xff]
    %v669 = vld [vmem:[%s1 + $0x70] sm:$0xff]
    %v670 = vld [vmem:[%s1 + $0x78] sm:$0xff]
    %v671 = vld [vmem:[%s1 + $0x80] sm:$0xff]
    %v672 = vld [vmem:[%s1 + $0x88] sm:$0xff]
    %v673 = vld [vmem:[%s1 + $0x90] sm:$0xff]
    %v674 = vld [vmem:[%s1 + $0x98] sm:$0xff]
    %v675 = vld [vmem:[%s1 + $0xa0] sm:$0xff]
    %v676 = vld [vmem:[%s1 + $0xa8] sm:$0xff]
    %v677 = vld [vmem:[%s1 + $0xb0] sm:$0xff]
    %v678 = vld [vmem:[%s1 + $0xb8] sm:$0xff]
    %v679 = vld [vmem:[%s1 + $0xc0] sm:$0xff]
    %v680 = vld [vmem:[%s1 + $0xc8] sm:$0xff]
    %v681 = vld [vmem:[%s1 + $0xd0] sm:$0xff]
    %v682 = vld [vmem:[%s1 + $0xd8] sm:$0xff]
    %v683 = vld [vmem:[%s1 + $0xe0] sm:$0xff]
    %v684 = vld [vmem:[%s1 + $0xe8] sm:$0xff]
    %v685 = vld [vmem:[%s1 + $0xf0] sm:$0xff]
    %v686 = vld [vmem:[%s1 + $0xf8] sm:$0xff]
    %v687 = vld [vmem:[%s1 + $0x100] sm:$0xff]
    %v688 = vld [vmem:[%s1 + $0x108] sm:$0xff]
    %v689 = vld [vmem:[%s1 + $0x110] sm:$0xff]
    %v690 = vld [vmem:[%s1 + $0x118] sm:$0xff]
    %v691 = vld [vmem:[%s1 + $0x120] sm:$0xff]
    %v692 = vld [vmem:[%s1 + $0x128] sm:$0xff]
    %v693 = vld [vmem:[%s1 + $0x130] sm:$0xff]
    %v694 = vld [vmem:[%s1 + $0x138] sm:$0xff]
    %v695 = vld [vmem:[%s1 + $0x140] sm:$0xff]
    %v696 = vld [vmem:[%s1 + $0x148] sm:$0xff]
    %v697 = vld [vmem:[%s1 + $0x150] sm:$0xff]
    %v698 = vld [vmem:[%s1 + $0x158] sm:$0xff]
    %v699 = vld [vmem:[%s1 + $0x160] sm:$0xff]
    %v700 = vld [vmem:[%s1 + $0x168] sm:$0xff]
    %v701 = vld [vmem:[%s1 + $0x170] sm:$0xff]
    %v702 = vld [vmem:[%s1 + $0x178] sm:$0xff]
    %v703 = vld [vmem:[%s1 + $0x180] sm:$0xff]
    %v704 = vld [vmem:[%s1 + $0x188] sm:$0xff]
    %v705 = vld [vmem:[%s1 + $0x190] sm:$0xff]
    %v706 = vld [vmem:[%s1 + $0x198] sm:$0xff]
    %v707 = vld [vmem:[%s1 + $0x1a0] sm:$0xff]
    %v708 = vld [vmem:[%s1 + $0x1a8] sm:$0xff]
    %v709 = vld [vmem:[%s1 + $0x1b0] sm:$0xff]
    %v710 = vld [vmem:[%s1 + $0x1b8] sm:$0xff]
    %v711 = vld [vmem:[%s1 + $0x1c0] sm:$0xff]
    %v712 = vld [vmem:[%s1 + $0x1c8] sm:$0xff]
    %v713 = vld [vmem:[%s1 + $0x1d0] sm:$0xff]
    %v714 = vld [vmem:[%s1 + $0x1d8] sm:$0xff]
    %v715 = vld [vmem:[%s1 + $0x1e0] sm:$0xff]
    %v716 = vld [vmem:[%s1 + $0x1e8] sm:$0xff]
    %v717 = vld [vmem:[%s1 + $0x1f0] sm:$0xff]
    %v718 = vld [vmem:[%s1 + $0x1f8] sm:$0xff]
    %v719 = vld [vmem:[%s1 + $0x200] sm:$0xff]
    %v720 = vld [vmem:[%s1 + $0x208] sm:$0xff]
    %v721 = vld [vmem:[%s1 + $0x210] sm:$0xff]
    %v722 = vld [vmem:[%s1 + $0x218] sm:$0xff]
    %v723 = vld [vmem:[%s1 + $0x220] sm:$0xff]
    %v724 = vld [vmem:[%s1 + $0x228] sm:$0xff]
    %v725 = vld [vmem:[%s1 + $0x230] sm:$0xff]
    %v726 = vld [vmem:[%s1 + $0x238] sm:$0xff]
    %v728 = vsel %vm43, %v579, 0
    %v731 = vsel %vm43, %v584, 0
    %v734 = vsel %vm43, %v589, 0
    %v737 = vsel %vm43, %v594, 0
    %v740 = vsel %vm43, %v599, 0
    %v743 = vsel %vm43, %v604, 0
    %v746 = vsel %vm43, %v609, 0
    %v749 = vsel %vm43, %v614, 0
    %v752 = vsel %vm43, %v619, 0
    %v755 = vsel %vm43, %v624, 0
    %v758 = vsel %vm43, %v629, 0
    %v761 = vsel %vm43, %v634, 0
    %v764 = vsel %vm43, %v639, 0
    %v767 = vsel %vm43, %v644, 0
    %v770 = vsel %vm43, %v649, 0
    %v773 = vsel %vm43, %v654, 0
    %775 = vmatprep.subr.mxu0 0.0
    %776 = vmatpush1.msra.mxu0 %v670
    %777 = vmatprep.subr.mxu0 0.0
    %778 = vmatpush1.msra.mxu0 %v669
    %779 = vmatprep.subr.mxu0 0.0
    %780 = vmatpush1.msra.mxu0 %v668
    %781 = vmatprep.subr.mxu0 0.0
    %782 = vmatpush1.msra.mxu0 %v667
    %783 = vmatprep.subr.mxu0 0.0
    %784 = vmatpush1.msra.mxu0 %v666
    %785 = vmatprep.subr.mxu0 0.0
    %786 = vmatpush1.msra.mxu0 %v665
    %787 = vmatprep.subr.mxu0 0.0
    %788 = vmatpush1.msra.mxu0 %v664
    %789 = vmatprep.subr.mxu0 0.0
    %790 = vmatpush1.msra.mxu0 %v663
    %791 = vmatprep.subr.mxu0 0.0
    %792 = vmatpush1.msra.mxu0 %v662
    %793 = vmatprep.subr.mxu0 0.0
    %794 = vmatpush1.msra.mxu0 %v661
    %795 = vmatprep.subr.mxu0 0.0
    %796 = vmatpush1.msra.mxu0 %v660
    %797 = vmatprep.subr.mxu0 0.0
    %798 = vmatpush1.msra.mxu0 %v659
    %799 = vmatprep.subr.mxu0 0.0
    %800 = vmatpush1.msra.mxu0 %v658
    %801 = vmatprep.subr.mxu0 0.0
    %802 = vmatpush1.msra.mxu0 %v657
    %803 = vmatprep.subr.mxu0 0.0
    %804 = vmatpush1.msra.mxu0 %v656
    %805 = vmatprep.subr.mxu0 0.0
    %806 = vmatpush1.msra.mxu0 %v655
    %807 = vmatprep.subr.mxu0 0.0
    %808 = vmatpush2.msra.mxu0 %v686
    %809 = vmatprep.subr.mxu0 0.0
    %810 = vmatpush2.msra.mxu0 %v685
    %811 = vmatprep.subr.mxu0 0.0
    %812 = vmatpush2.msra.mxu0 %v684
    %813 = vmatprep.subr.mxu0 0.0
    %814 = vmatpush2.msra.mxu0 %v683
    %815 = vmatprep.subr.mxu0 0.0
    %816 = vmatpush2.msra.mxu0 %v682
    %817 = vmatprep.subr.mxu0 0.0
    %818 = vmatpush2.msra.mxu0 %v681
    %819 = vmatprep.subr.mxu0 0.0
    %820 = vmatpush2.msra.mxu0 %v680
    %821 = vmatprep.subr.mxu0 0.0
    %822 = vmatpush2.msra.mxu0 %v679
    %823 = vmatprep.subr.mxu0 0.0
    %824 = vmatpush2.msra.mxu0 %v678
    %825 = vmatprep.subr.mxu0 0.0
    %826 = vmatpush2.msra.mxu0 %v677
    %827 = vmatprep.subr.mxu0 0.0
    %828 = vmatpush2.msra.mxu0 %v676
    %829 = vmatprep.subr.mxu0 0.0
    %830 = vmatpush2.msra.mxu0 %v675
    %831 = vmatprep.subr.mxu0 0.0
    %832 = vmatpush2.msra.mxu0 %v674
    %833 = vmatprep.subr.mxu0 0.0
    %834 = vmatpush2.msra.mxu0 %v673
    %835 = vmatprep.subr.mxu0 0.0
    %836 = vmatpush2.msra.mxu0 %v672
    %837 = vmatprep.subr.mxu0 0.0
    %838 = vmatpush2.msra.mxu0 %v671
    %839 = vmatprep.mubr.f32.mxu0 %v576
    %840 = vmatmul.mubr.f32.gmra.mxu0 %v575
    %v841 = vpop.f32.mrf.mxu0
    %v842 = vadd.f32 0.0, %v841
    %v843 = vpop.f32.mrf.mxu0
    %844 = vmatprep.mubr.f32.mxu0 %v581
    %845 = vmatmul.mubr.f32.gmra.mxu0 %v580
    %v846 = vpop.f32.mrf.mxu0
    %v847 = vadd.f32 0.0, %v846
    %v848 = vpop.f32.mrf.mxu0
    %849 = vmatprep.mubr.f32.mxu0 %v586
    %850 = vmatmul.mubr.f32.gmra.mxu0 %v585
    %v851 = vpop.f32.mrf.mxu0
    %v852 = vadd.f32 0.0, %v851
    %v853 = vpop.f32.mrf.mxu0
    %854 = vmatprep.mubr.f32.mxu0 %v591
    %855 = vmatmul.mubr.f32.gmra.mxu0 %v590
    %v856 = vpop.f32.mrf.mxu0
    %v857 = vadd.f32 0.0, %v856
    %v858 = vpop.f32.mrf.mxu0
    %859 = vmatprep.mubr.f32.mxu0 %v596
    %860 = vmatmul.mubr.f32.gmra.mxu0 %v595
    %v861 = vpop.f32.mrf.mxu0
    %v862 = vadd.f32 0.0, %v861
    %v863 = vpop.f32.mrf.mxu0
    %864 = vmatprep.mubr.f32.mxu0 %v601
    %865 = vmatmul.mubr.f32.gmra.mxu0 %v600
    %v866 = vpop.f32.mrf.mxu0
    %v867 = vadd.f32 0.0, %v866
    %v868 = vpop.f32.mrf.mxu0
    %869 = vmatprep.mubr.f32.mxu0 %v606
    %870 = vmatmul.mubr.f32.gmra.mxu0 %v605
    %v871 = vpop.f32.mrf.mxu0
    %v872 = vadd.f32 0.0, %v871
    %v873 = vpop.f32.mrf.mxu0
    %874 = vmatprep.mubr.f32.mxu0 %v611
    %875 = vmatmul.mubr.f32.gmra.mxu0 %v610
    %v876 = vpop.f32.mrf.mxu0
    %v877 = vadd.f32 0.0, %v876
    %v878 = vpop.f32.mrf.mxu0
    %879 = vmatprep.mubr.f32.mxu0 %v616
    %880 = vmatmul.mubr.f32.gmra.mxu0 %v615
    %v881 = vpop.f32.mrf.mxu0
    %v882 = vadd.f32 0.0, %v881
    %v883 = vpop.f32.mrf.mxu0
    %884 = vmatprep.mubr.f32.mxu0 %v621
    %885 = vmatmul.mubr.f32.gmra.mxu0 %v620
    %v886 = vpop.f32.mrf.mxu0
    %v887 = vadd.f32 0.0, %v886
    %v888 = vpop.f32.mrf.mxu0
    %889 = vmatprep.mubr.f32.mxu0 %v626
    %890 = vmatmul.mubr.f32.gmra.mxu0 %v625
    %v891 = vpop.f32.mrf.mxu0
    %v892 = vadd.f32 0.0, %v891
    %v893 = vpop.f32.mrf.mxu0
    %894 = vmatprep.mubr.f32.mxu0 %v631
    %895 = vmatmul.mubr.f32.gmra.mxu0 %v630
    %v896 = vpop.f32.mrf.mxu0
    %v897 = vadd.f32 0.0, %v896
    %v898 = vpop.f32.mrf.mxu0
    %899 = vmatprep.mubr.f32.mxu0 %v636
    %900 = vmatmul.mubr.f32.gmra.mxu0 %v635
    %v901 = vpop.f32.mrf.mxu0
    %v902 = vadd.f32 0.0, %v901
    %v903 = vpop.f32.mrf.mxu0
    %904 = vmatprep.mubr.f32.mxu0 %v641
    %905 = vmatmul.mubr.f32.gmra.mxu0 %v640
    %v906 = vpop.f32.mrf.mxu0
    %v907 = vadd.f32 0.0, %v906
    %v908 = vpop.f32.mrf.mxu0
    %909 = vmatprep.mubr.f32.mxu0 %v646
    %910 = vmatmul.mubr.f32.gmra.mxu0 %v645
    %v911 = vpop.f32.mrf.mxu0
    %v912 = vadd.f32 0.0, %v911
    %v913 = vpop.f32.mrf.mxu0
    %914 = vmatprep.mubr.f32.mxu0 %v651
    %915 = vmatmul.mubr.f32.gmra.mxu0 %v650
    %v916 = vpop.f32.mrf.mxu0
    %v917 = vadd.f32 0.0, %v916
    %v918 = vpop.f32.mrf.mxu0
    %919 = vdwg.mxu0
    %920 = vmatprep.subr.mxu0 0.0
    %921 = vmatpush1.msra.mxu0 %v702
    %922 = vmatprep.subr.mxu0 0.0
    %923 = vmatpush1.msra.mxu0 %v701
    %924 = vmatprep.subr.mxu0 0.0
    %925 = vmatpush1.msra.mxu0 %v700
    %926 = vmatprep.subr.mxu0 0.0
    %927 = vmatpush1.msra.mxu0 %v699
    %928 = vmatprep.subr.mxu0 0.0
    %929 = vmatpush1.msra.mxu0 %v698
    %930 = vmatprep.subr.mxu0 0.0
    %931 = vmatpush1.msra.mxu0 %v697
    %932 = vmatprep.subr.mxu0 0.0
    %933 = vmatpush1.msra.mxu0 %v696
    %934 = vmatprep.subr.mxu0 0.0
    %935 = vmatpush1.msra.mxu0 %v695
    %936 = vmatprep.subr.mxu0 0.0
    %937 = vmatpush1.msra.mxu0 %v694
    %938 = vmatprep.subr.mxu0 0.0
    %939 = vmatpush1.msra.mxu0 %v693
    %940 = vmatprep.subr.mxu0 0.0
    %941 = vmatpush1.msra.mxu0 %v692
    %942 = vmatprep.subr.mxu0 0.0
    %943 = vmatpush1.msra.mxu0 %v691
    %944 = vmatprep.subr.mxu0 0.0
    %945 = vmatpush1.msra.mxu0 %v690
    %946 = vmatprep.subr.mxu0 0.0
    %947 = vmatpush1.msra.mxu0 %v689
    %948 = vmatprep.subr.mxu0 0.0
    %949 = vmatpush1.msra.mxu0 %v688
    %950 = vmatprep.subr.mxu0 0.0
    %951 = vmatpush1.msra.mxu0 %v687
    %952 = vmatprep.subr.mxu0 0.0
    %953 = vmatpush2.msra.mxu0 %v718
    %954 = vmatprep.subr.mxu0 0.0
    %955 = vmatpush2.msra.mxu0 %v717
    %956 = vmatprep.subr.mxu0 0.0
    %957 = vmatpush2.msra.mxu0 %v716
    %958 = vmatprep.subr.mxu0 0.0
    %959 = vmatpush2.msra.mxu0 %v715
    %960 = vmatprep.subr.mxu0 0.0
    %961 = vmatpush2.msra.mxu0 %v714
    %962 = vmatprep.subr.mxu0 0.0
    %963 = vmatpush2.msra.mxu0 %v713
    %964 = vmatprep.subr.mxu0 0.0
    %965 = vmatpush2.msra.mxu0 %v712
    %966 = vmatprep.subr.mxu0 0.0
    %967 = vmatpush2.msra.mxu0 %v711
    %968 = vmatprep.subr.mxu0 0.0
    %969 = vmatpush2.msra.mxu0 %v710
    %970 = vmatprep.subr.mxu0 0.0
    %971 = vmatpush2.msra.mxu0 %v709
    %972 = vmatprep.subr.mxu0 0.0
    %973 = vmatpush2.msra.mxu0 %v708
    %974 = vmatprep.subr.mxu0 0.0
    %975 = vmatpush2.msra.mxu0 %v707
    %976 = vmatprep.subr.mxu0 0.0
    %977 = vmatpush2.msra.mxu0 %v706
    %978 = vmatprep.subr.mxu0 0.0
    %979 = vmatpush2.msra.mxu0 %v705
    %980 = vmatprep.subr.mxu0 0.0
    %981 = vmatpush2.msra.mxu0 %v704
    %982 = vmatprep.subr.mxu0 0.0
    %983 = vmatpush2.msra.mxu0 %v703
    %984 = vmatprep.mubr.f32.mxu0 %v578
    %985 = vmatmul.mubr.f32.gmra.mxu0 %v577
    %v986 = vpop.f32.mrf.mxu0
    %v987 = vadd.f32 %v842, %v986
    %v988 = vpop.f32.mrf.mxu0
    %989 = vmatprep.mubr.f32.mxu0 %v583
    %990 = vmatmul.mubr.f32.gmra.mxu0 %v582
    %v991 = vpop.f32.mrf.mxu0
    %v992 = vadd.f32 %v847, %v991
    %v993 = vpop.f32.mrf.mxu0
    %994 = vmatprep.mubr.f32.mxu0 %v588
    %995 = vmatmul.mubr.f32.gmra.mxu0 %v587
    %v996 = vpop.f32.mrf.mxu0
    %v997 = vadd.f32 %v852, %v996
    %v998 = vpop.f32.mrf.mxu0
    %999 = vmatprep.mubr.f32.mxu0 %v593
    %1000 = vmatmul.mubr.f32.gmra.mxu0 %v592
    %v1001 = vpop.f32.mrf.mxu0
    %v1002 = vadd.f32 %v857, %v1001
    %v1003 = vpop.f32.mrf.mxu0
    %1004 = vmatprep.mubr.f32.mxu0 %v598
    %1005 = vmatmul.mubr.f32.gmra.mxu0 %v597
    %v1006 = vpop.f32.mrf.mxu0
    %v1007 = vadd.f32 %v862, %v1006
    %v1008 = vpop.f32.mrf.mxu0
    %1009 = vmatprep.mubr.f32.mxu0 %v603
    %1010 = vmatmul.mubr.f32.gmra.mxu0 %v602
    %v1011 = vpop.f32.mrf.mxu0
    %v1012 = vadd.f32 %v867, %v1011
    %v1013 = vpop.f32.mrf.mxu0
    %1014 = vmatprep.mubr.f32.mxu0 %v608
    %1015 = vmatmul.mubr.f32.gmra.mxu0 %v607
    %v1016 = vpop.f32.mrf.mxu0
    %v1017 = vadd.f32 %v872, %v1016
    %v1018 = vpop.f32.mrf.mxu0
    %1019 = vmatprep.mubr.f32.mxu0 %v613
    %1020 = vmatmul.mubr.f32.gmra.mxu0 %v612
    %v1021 = vpop.f32.mrf.mxu0
    %v1022 = vadd.f32 %v877, %v1021
    %v1023 = vpop.f32.mrf.mxu0
    %1024 = vmatprep.mubr.f32.mxu0 %v618
    %1025 = vmatmul.mubr.f32.gmra.mxu0 %v617
    %v1026 = vpop.f32.mrf.mxu0
    %v1027 = vadd.f32 %v882, %v1026
    %v1028 = vpop.f32.mrf.mxu0
    %1029 = vmatprep.mubr.f32.mxu0 %v623
    %1030 = vmatmul.mubr.f32.gmra.mxu0 %v622
    %v1031 = vpop.f32.mrf.mxu0
    %v1032 = vadd.f32 %v887, %v1031
    %v1033 = vpop.f32.mrf.mxu0
    %1034 = vmatprep.mubr.f32.mxu0 %v628
    %1035 = vmatmul.mubr.f32.gmra.mxu0 %v627
    %v1036 = vpop.f32.mrf.mxu0
    %v1037 = vadd.f32 %v892, %v1036
    %v1038 = vpop.f32.mrf.mxu0
    %1039 = vmatprep.mubr.f32.mxu0 %v633
    %1040 = vmatmul.mubr.f32.gmra.mxu0 %v632
    %v1041 = vpop.f32.mrf.mxu0
    %v1042 = vadd.f32 %v897, %v1041
    %v1043 = vpop.f32.mrf.mxu0
    %1044 = vmatprep.mubr.f32.mxu0 %v638
    %1045 = vmatmul.mubr.f32.gmra.mxu0 %v637
    %v1046 = vpop.f32.mrf.mxu0
    %v1047 = vadd.f32 %v902, %v1046
    %v1048 = vpop.f32.mrf.mxu0
    %1049 = vmatprep.mubr.f32.mxu0 %v643
    %1050 = vmatmul.mubr.f32.gmra.mxu0 %v642
    %v1051 = vpop.f32.mrf.mxu0
    %v1052 = vadd.f32 %v907, %v1051
    %v1053 = vpop.f32.mrf.mxu0
    %1054 = vmatprep.mubr.f32.mxu0 %v648
    %1055 = vmatmul.mubr.f32.gmra.mxu0 %v647
    %v1056 = vpop.f32.mrf.mxu0
    %v1057 = vadd.f32 %v912, %v1056
    %v1058 = vpop.f32.mrf.mxu0
    %1059 = vmatprep.mubr.f32.mxu0 %v653
    %1060 = vmatmul.mubr.f32.gmra.mxu0 %v652
    %v1061 = vpop.f32.mrf.mxu0
    %v1062 = vadd.f32 %v917, %v1061
    %v1063 = vpop.f32.mrf.mxu0
    %1064 = vdwg.mxu0
    %1065 = vmatprep.subr.mxu0 0.0
    %1066 = vmatpush1.msra.mxu0 0.0
    %1067 = vmatprep.subr.mxu0 0.0
    %1068 = vmatpush1.msra.mxu0 0.0
    %1069 = vmatprep.subr.mxu0 0.0
    %1070 = vmatpush1.msra.mxu0 0.0
    %1071 = vmatprep.subr.mxu0 0.0
    %1072 = vmatpush1.msra.mxu0 0.0
    %1073 = vmatprep.subr.mxu0 0.0
    %1074 = vmatpush1.msra.mxu0 0.0
    %1075 = vmatprep.subr.mxu0 0.0
    %1076 = vmatpush1.msra.mxu0 0.0
    %1077 = vmatprep.subr.mxu0 0.0
    %1078 = vmatpush1.msra.mxu0 0.0
    %1079 = vmatprep.subr.mxu0 0.0
    %1080 = vmatpush1.msra.mxu0 0.0
    %1081 = vmatprep.subr.mxu0 0.0
    %1082 = vmatpush1.msra.mxu0 %v726
    %1083 = vmatprep.subr.mxu0 0.0
    %1084 = vmatpush1.msra.mxu0 %v725
    %1085 = vmatprep.subr.mxu0 0.0
    %1086 = vmatpush1.msra.mxu0 %v724
    %1087 = vmatprep.subr.mxu0 0.0
    %1088 = vmatpush1.msra.mxu0 %v723
    %1089 = vmatprep.subr.mxu0 0.0
    %1090 = vmatpush1.msra.mxu0 %v722
    %1091 = vmatprep.subr.mxu0 0.0
    %1092 = vmatpush1.msra.mxu0 %v721
    %1093 = vmatprep.subr.mxu0 0.0
    %1094 = vmatpush1.msra.mxu0 %v720
    %1095 = vmatprep.subr.mxu0 0.0
    %1096 = vmatpush1.msra.mxu0 %v719
    %1097 = vmatprep.subr.mxu0 0.0
    %1098 = vmatpush2.msra.mxu0 0.0
    %1099 = vmatprep.subr.mxu0 0.0
    %1100 = vmatpush2.msra.mxu0 0.0
    %1101 = vmatprep.subr.mxu0 0.0
    %1102 = vmatpush2.msra.mxu0 0.0
    %1103 = vmatprep.subr.mxu0 0.0
    %1104 = vmatpush2.msra.mxu0 0.0
    %1105 = vmatprep.subr.mxu0 0.0
    %1106 = vmatpush2.msra.mxu0 0.0
    %1107 = vmatprep.subr.mxu0 0.0
    %1108 = vmatpush2.msra.mxu0 0.0
    %1109 = vmatprep.subr.mxu0 0.0
    %1110 = vmatpush2.msra.mxu0 0.0
    %1111 = vmatprep.subr.mxu0 0.0
    %1112 = vmatpush2.msra.mxu0 0.0
    %1113 = vmatprep.subr.mxu0 0.0
    %1114 = vmatpush2.msra.mxu0 0.0
    %1115 = vmatprep.subr.mxu0 0.0
    %1116 = vmatpush2.msra.mxu0 0.0
    %1117 = vmatprep.subr.mxu0 0.0
    %1118 = vmatpush2.msra.mxu0 0.0
    %1119 = vmatprep.subr.mxu0 0.0
    %1120 = vmatpush2.msra.mxu0 0.0
    %1121 = vmatprep.subr.mxu0 0.0
    %1122 = vmatpush2.msra.mxu0 0.0
    %1123 = vmatprep.subr.mxu0 0.0
    %1124 = vmatpush2.msra.mxu0 0.0
    %1125 = vmatprep.subr.mxu0 0.0
    %1126 = vmatpush2.msra.mxu0 0.0
    %1127 = vmatprep.subr.mxu0 0.0
    %1128 = vmatpush2.msra.mxu0 0.0
    %1129 = vmatprep.mubr.f32.mxu0 0.0
    %1130 = vmatmul.mubr.f32.gmra.mxu0 %v728
    %v1131 = vpop.f32.mrf.mxu0
    %v1132 = vadd.f32 %v987, %v1131
    %v1133 = vpop.f32.mrf.mxu0
    %1134 = vmatprep.mubr.f32.mxu0 0.0
    %1135 = vmatmul.mubr.f32.gmra.mxu0 %v731
    %v1136 = vpop.f32.mrf.mxu0
    %v1137 = vadd.f32 %v992, %v1136
    %v1138 = vpop.f32.mrf.mxu0
    %1139 = vmatprep.mubr.f32.mxu0 0.0
    %1140 = vmatmul.mubr.f32.gmra.mxu0 %v734
    %v1141 = vpop.f32.mrf.mxu0
    %v1142 = vadd.f32 %v997, %v1141
    %v1143 = vpop.f32.mrf.mxu0
    %1144 = vmatprep.mubr.f32.mxu0 0.0
    %1145 = vmatmul.mubr.f32.gmra.mxu0 %v737
    %v1146 = vpop.f32.mrf.mxu0
    %v1147 = vadd.f32 %v1002, %v1146
    %v1148 = vpop.f32.mrf.mxu0
    %1149 = vmatprep.mubr.f32.mxu0 0.0
    %1150 = vmatmul.mubr.f32.gmra.mxu0 %v740
    %v1151 = vpop.f32.mrf.mxu0
    %v1152 = vadd.f32 %v1007, %v1151
    %v1153 = vpop.f32.mrf.mxu0
    %1154 = vmatprep.mubr.f32.mxu0 0.0
    %1155 = vmatmul.mubr.f32.gmra.mxu0 %v743
    %v1156 = vpop.f32.mrf.mxu0
    %v1157 = vadd.f32 %v1012, %v1156
    %v1158 = vpop.f32.mrf.mxu0
    %1159 = vmatprep.mubr.f32.mxu0 0.0
    %1160 = vmatmul.mubr.f32.gmra.mxu0 %v746
    %v1161 = vpop.f32.mrf.mxu0
    %v1162 = vadd.f32 %v1017, %v1161
    %v1163 = vpop.f32.mrf.mxu0
    %1164 = vmatprep.mubr.f32.mxu0 0.0
    %1165 = vmatmul.mubr.f32.gmra.mxu0 %v749
    %v1166 = vpop.f32.mrf.mxu0
    %v1167 = vadd.f32 %v1022, %v1166
    %v1168 = vpop.f32.mrf.mxu0
    %1169 = vmatprep.mubr.f32.mxu0 0.0
    %1170 = vmatmul.mubr.f32.gmra.mxu0 %v752
    %v1171 = vpop.f32.mrf.mxu0
    %v1172 = vadd.f32 %v1027, %v1171
    %v1173 = vpop.f32.mrf.mxu0
    %1174 = vmatprep.mubr.f32.mxu0 0.0
    %1175 = vmatmul.mubr.f32.gmra.mxu0 %v755
    %v1176 = vpop.f32.mrf.mxu0
    %v1177 = vadd.f32 %v1032, %v1176
    %v1178 = vpop.f32.mrf.mxu0
    %1179 = vmatprep.mubr.f32.mxu0 0.0
    %1180 = vmatmul.mubr.f32.gmra.mxu0 %v758
    %v1181 = vpop.f32.mrf.mxu0
    %v1182 = vadd.f32 %v1037, %v1181
    %v1183 = vpop.f32.mrf.mxu0
    %1184 = vmatprep.mubr.f32.mxu0 0.0
    %1185 = vmatmul.mubr.f32.gmra.mxu0 %v761
    %v1186 = vpop.f32.mrf.mxu0
    %v1187 = vadd.f32 %v1042, %v1186
    %v1188 = vpop.f32.mrf.mxu0
    %1189 = vmatprep.mubr.f32.mxu0 0.0
    %1190 = vmatmul.mubr.f32.gmra.mxu0 %v764
    %v1191 = vpop.f32.mrf.mxu0
    %v1192 = vadd.f32 %v1047, %v1191
    %v1193 = vpop.f32.mrf.mxu0
    %1194 = vmatprep.mubr.f32.mxu0 0.0
    %1195 = vmatmul.mubr.f32.gmra.mxu0 %v767
    %v1196 = vpop.f32.mrf.mxu0
    %v1197 = vadd.f32 %v1052, %v1196
    %v1198 = vpop.f32.mrf.mxu0
    %1199 = vmatprep.mubr.f32.mxu0 0.0
    %1200 = vmatmul.mubr.f32.gmra.mxu0 %v770
    %v1201 = vpop.f32.mrf.mxu0
    %v1202 = vadd.f32 %v1057, %v1201
    %v1203 = vpop.f32.mrf.mxu0
    %1204 = vmatprep.mubr.f32.mxu0 0.0
    %1205 = vmatmul.mubr.f32.gmra.mxu0 %v773
    %v1206 = vpop.f32.mrf.mxu0
    %v1207 = vadd.f32 %v1062, %v1206
    %v1208 = vpop.f32.mrf.mxu0
    %1209 = vdwg.mxu0
    %v1210 = vld [vmem:[%s2] sm:$0x1]
    %v1211 = vld [vmem:[%s3] sm:$0x1]
    %v1212 = vsel %vm43, %v1132, 0.0
    %v1213 = vsel %vm43, %v1137, 0.0
    %v1214 = vadd.f32 %v1212, %v1213
    %v1215 = vsel %vm43, %v1142, 0.0
    %v1216 = vadd.f32 %v1214, %v1215
    %v1217 = vsel %vm43, %v1147, 0.0
    %v1218 = vadd.f32 %v1216, %v1217
    %v1219 = vsel %vm43, %v1152, 0.0
    %v1220 = vadd.f32 %v1218, %v1219
    %v1221 = vsel %vm43, %v1157, 0.0
    %v1222 = vadd.f32 %v1220, %v1221
    %v1223 = vsel %vm43, %v1162, 0.0
    %v1224 = vadd.f32 %v1222, %v1223
    %v1225 = vsel %vm43, %v1167, 0.0
    %v1226 = vadd.f32 %v1224, %v1225
    %v1227 = vsel %vm43, %v1172, 0.0
    %v1228 = vadd.f32 %v1226, %v1227
    %v1229 = vsel %vm43, %v1177, 0.0
    %v1230 = vadd.f32 %v1228, %v1229
    %v1231 = vsel %vm43, %v1182, 0.0
    %v1232 = vadd.f32 %v1230, %v1231
    %v1233 = vsel %vm43, %v1187, 0.0
    %v1234 = vadd.f32 %v1232, %v1233
    %v1235 = vsel %vm43, %v1192, 0.0
    %v1236 = vadd.f32 %v1234, %v1235
    %v1237 = vsel %vm43, %v1197, 0.0
    %v1238 = vadd.f32 %v1236, %v1237
    %v1239 = vsel %vm43, %v1202, 0.0
    %v1240 = vadd.f32 %v1238, %v1239
    %v1241 = vsel %vm43, %v1207, 0.0
    %v1242 = vadd.f32 %v1240, %v1241
    %v1243 = vrot.slane %v1242, 4
    %v1244 = vadd.f32 %v1242, %v1243
    %v1245 = vrot.slane %v1244, 2
    %v1246 = vadd.f32 %v1244, %v1245
    %v1247 = vrot.slane %v1246, 1
    %v1248 = vadd.f32 %v1246, %v1247
    %v1249 = vmul.f32 %v1132, %v1132
    %v1250 = vmul.f32 %v1137, %v1137
    %v1251 = vmul.f32 %v1142, %v1142
    %v1252 = vmul.f32 %v1147, %v1147
    %v1253 = vmul.f32 %v1152, %v1152
    %v1254 = vmul.f32 %v1157, %v1157
    %v1255 = vmul.f32 %v1162, %v1162
    %v1256 = vmul.f32 %v1167, %v1167
    %v1257 = vmul.f32 %v1172, %v1172
    %v1258 = vmul.f32 %v1177, %v1177
    %v1259 = vmul.f32 %v1182, %v1182
    %v1260 = vmul.f32 %v1187, %v1187
    %v1261 = vmul.f32 %v1192, %v1192
    %v1262 = vmul.f32 %v1197, %v1197
    %v1263 = vmul.f32 %v1202, %v1202
    %v1264 = vmul.f32 %v1207, %v1207
    %v1265 = vsel %vm43, %v1249, 0.0
    %v1266 = vsel %vm43, %v1250, 0.0
    %v1267 = vadd.f32 %v1265, %v1266
    %v1268 = vsel %vm43, %v1251, 0.0
    %v1269 = vadd.f32 %v1267, %v1268
    %v1270 = vsel %vm43, %v1252, 0.0
    %v1271 = vadd.f32 %v1269, %v1270
    %v1272 = vsel %vm43, %v1253, 0.0
    %v1273 = vadd.f32 %v1271, %v1272
    %v1274 = vsel %vm43, %v1254, 0.0
    %v1275 = vadd.f32 %v1273, %v1274
    %v1276 = vsel %vm43, %v1255, 0.0
    %v1277 = vadd.f32 %v1275, %v1276
    %v1278 = vsel %vm43, %v1256, 0.0
    %v1279 = vadd.f32 %v1277, %v1278
    %v1280 = vsel %vm43, %v1257, 0.0
    %v1281 = vadd.f32 %v1279, %v1280
    %v1282 = vsel %vm43, %v1258, 0.0
    %v1283 = vadd.f32 %v1281, %v1282
    %v1284 = vsel %vm43, %v1259, 0.0
    %v1285 = vadd.f32 %v1283, %v1284
    %v1286 = vsel %vm43, %v1260, 0.0
    %v1287 = vadd.f32 %v1285, %v1286
    %v1288 = vsel %vm43, %v1261, 0.0
    %v1289 = vadd.f32 %v1287, %v1288
    %v1290 = vsel %vm43, %v1262, 0.0
    %v1291 = vadd.f32 %v1289, %v1290
    %v1292 = vsel %vm43, %v1263, 0.0
    %v1293 = vadd.f32 %v1291, %v1292
    %v1294 = vsel %vm43, %v1264, 0.0
    %v1295 = vadd.f32 %v1293, %v1294
    %v1296 = vrot.slane %v1295, 4
    %v1297 = vadd.f32 %v1295, %v1296
    %v1298 = vrot.slane %v1297, 2
    %v1299 = vadd.f32 %v1297, %v1298
    %v1300 = vrot.slane %v1299, 1
    %v1301 = vadd.f32 %v1299, %v1300
    %v1302 = vmul.f32 %v1248, 0.0078125
    %v1303 = vmul.f32 %v1301, 0.0078125
    %v1304 = vmul.f32 %v1302, %v1302
    %v1305 = vsub.f32 %v1303, %v1304
    %v1306 = vadd.f32 %v1305, 1e-05
    %v1307 = vrsqrt.pop %v1306
    %v1308 = vmul.f32 %v1210, %v1307
    %v1309 = vmul.f32 %v1302, %v1308
    %v1310 = vsub.f32 %v1211, %v1309
    %v1312 = vlaneseq
    %v1313 = vshrl.u32 %v1312, 7
    %v1314 = vsub.s32 0, %v1313
    %v1315 = vrot.slane %v1308, %v1314
    %v1317 = vmul.f32 %v1132, %v1315
    %v1318 = vmul.f32 %v1137, %v1315
    %v1319 = vmul.f32 %v1142, %v1315
    %v1320 = vmul.f32 %v1147, %v1315
    %v1321 = vmul.f32 %v1152, %v1315
    %v1322 = vmul.f32 %v1157, %v1315
    %v1323 = vmul.f32 %v1162, %v1315
    %v1324 = vmul.f32 %v1167, %v1315
    %v1325 = vmul.f32 %v1172, %v1315
    %v1326 = vmul.f32 %v1177, %v1315
    %v1327 = vmul.f32 %v1182, %v1315
    %v1328 = vmul.f32 %v1187, %v1315
    %v1329 = vmul.f32 %v1192, %v1315
    %v1330 = vmul.f32 %v1197, %v1315
    %v1331 = vmul.f32 %v1202, %v1315
    %v1332 = vmul.f32 %v1207, %v1315
    %v1334 = vlaneseq
    %v1335 = vshrl.u32 %v1334, 7
    %v1336 = vsub.s32 0, %v1335
    %v1337 = vrot.slane %v1310, %v1336
    %v1339 = vadd.f32 %v1317, %v1337
    %v1340 = vadd.f32 %v1318, %v1337
    %v1341 = vadd.f32 %v1319, %v1337
    %v1342 = vadd.f32 %v1320, %v1337
    %v1343 = vadd.f32 %v1321, %v1337
    %v1344 = vadd.f32 %v1322, %v1337
    %v1345 = vadd.f32 %v1323, %v1337
    %v1346 = vadd.f32 %v1324, %v1337
    %v1347 = vadd.f32 %v1325, %v1337
    %v1348 = vadd.f32 %v1326, %v1337
    %v1349 = vadd.f32 %v1327, %v1337
    %v1350 = vadd.f32 %v1328, %v1337
    %v1351 = vadd.f32 %v1329, %v1337
    %v1352 = vadd.f32 %v1330, %v1337
    %v1353 = vadd.f32 %v1331, %v1337
    %v1354 = vadd.f32 %v1332, %v1337
    %v1355 = vmax.f32 %v1339, 0.0
    %v1356 = vmax.f32 %v1340, 0.0
    %v1357 = vmax.f32 %v1341, 0.0
    %v1358 = vmax.f32 %v1342, 0.0
    %v1359 = vmax.f32 %v1343, 0.0
    %v1360 = vmax.f32 %v1344, 0.0
    %v1361 = vmax.f32 %v1345, 0.0
    %v1362 = vmax.f32 %v1346, 0.0
    %v1363 = vmax.f32 %v1347, 0.0
    %v1364 = vmax.f32 %v1348, 0.0
    %v1365 = vmax.f32 %v1349, 0.0
    %v1366 = vmax.f32 %v1350, 0.0
    %v1367 = vmax.f32 %v1351, 0.0
    %v1368 = vmax.f32 %v1352, 0.0
    %v1369 = vmax.f32 %v1353, 0.0
    %v1370 = vmax.f32 %v1354, 0.0
    %1371 = vst.msk [vmem:[#allocation3] sm:$0xff] %vm43, 0.0
    %vm1372 = vcmask 517120
    %1373 = vst.msk [vmem:[#allocation3 + $0x8] sm:$0x3] %vm1372, 0.0
    %1374 = vst.msk [vmem:[#allocation3 + $0xa0] sm:$0xff] %vm43, 0.0
    %1375 = vst.msk [vmem:[#allocation3 + $0xa8] sm:$0x3] %vm1372, 0.0
    %s1376 = scalar_lea.vmem [#allocation3], 144
    %1377 = vst.msk [vmem:[%s1376] sm:$0xff] %vm43, 0.0
    %1378 = vst.msk [vmem:[%s1376 + $0x8] sm:$0x3] %vm1372, 0.0
    %1379 = vst.msk [vmem:[%s1376 + $0xa0] sm:$0xff] %vm43, 0.0
    %1380 = vst.msk [vmem:[%s1376 + $0xa8] sm:$0x3] %vm1372, 0.0
    %s1381 = scalar_lea.vmem [#allocation3], 16
    %vm1382 = vcmask 516096
    %1383 = vst.msk [vmem:[%s1381] sm:$0x1] %vm1382, 0.0
    %1384 = vst.msk [vmem:[%s1381 + $0x10] sm:$0x1] %vm1382, 0.0
    %1385 = vst.msk [vmem:[%s1381 + $0x20] sm:$0x1] %vm1382, 0.0
    %1386 = vst.msk [vmem:[%s1381 + $0x30] sm:$0x1] %vm1382, 0.0
    %1387 = vst.msk [vmem:[%s1381 + $0x40] sm:$0x1] %vm1382, 0.0
    %1388 = vst.msk [vmem:[%s1381 + $0x50] sm:$0x1] %vm1382, 0.0
    %1389 = vst.msk [vmem:[%s1381 + $0x60] sm:$0x1] %vm1382, 0.0
    %1390 = vst.msk [vmem:[%s1381 + $0x70] sm:$0x1] %vm1382, 0.0
    %1391 = vst.msk [vmem:[%s1381 + $0xa0] sm:$0x1] %vm1382, 0.0
    %1392 = vst.msk [vmem:[%s1381 + $0xb0] sm:$0x1] %vm1382, 0.0
    %1393 = vst.msk [vmem:[%s1381 + $0xc0] sm:$0x1] %vm1382, 0.0
    %1394 = vst.msk [vmem:[%s1381 + $0xd0] sm:$0x1] %vm1382, 0.0
    %1395 = vst.msk [vmem:[%s1381 + $0xe0] sm:$0x1] %vm1382, 0.0
    %1396 = vst.msk [vmem:[%s1381 + $0xf0] sm:$0x1] %vm1382, 0.0
    %1397 = vst.msk [vmem:[%s1381 + $0x100] sm:$0x1] %vm1382, 0.0
    %1398 = vst.msk [vmem:[%s1381 + $0x110] sm:$0x1] %vm1382, 0.0
    %1399 = vst.msk [vmem:[%s1381 + $0x9] sm:$0x1] %vm1382, 0.0
    %1400 = vst.msk [vmem:[%s1381 + $0x19] sm:$0x1] %vm1382, 0.0
    %1401 = vst.msk [vmem:[%s1381 + $0x29] sm:$0x1] %vm1382, 0.0
    %1402 = vst.msk [vmem:[%s1381 + $0x39] sm:$0x1] %vm1382, 0.0
    %1403 = vst.msk [vmem:[%s1381 + $0x49] sm:$0x1] %vm1382, 0.0
    %1404 = vst.msk [vmem:[%s1381 + $0x59] sm:$0x1] %vm1382, 0.0
    %1405 = vst.msk [vmem:[%s1381 + $0x69] sm:$0x1] %vm1382, 0.0
    %1406 = vst.msk [vmem:[%s1381 + $0x79] sm:$0x1] %vm1382, 0.0
    %1407 = vst.msk [vmem:[%s1381 + $0xa9] sm:$0x1] %vm1382, 0.0
    %1408 = vst.msk [vmem:[%s1381 + $0xb9] sm:$0x1] %vm1382, 0.0
    %1409 = vst.msk [vmem:[%s1381 + $0xc9] sm:$0x1] %vm1382, 0.0
    %1410 = vst.msk [vmem:[%s1381 + $0xd9] sm:$0x1] %vm1382, 0.0
    %1411 = vst.msk [vmem:[%s1381 + $0xe9] sm:$0x1] %vm1382, 0.0
    %1412 = vst.msk [vmem:[%s1381 + $0xf9] sm:$0x1] %vm1382, 0.0
    %1413 = vst.msk [vmem:[%s1381 + $0x109] sm:$0x1] %vm1382, 0.0
    %1414 = vst.msk [vmem:[%s1381 + $0x119] sm:$0x1] %vm1382, 0.0
    %1415 = vst.msk [vmem:[%s1381 + $0x1] sm:$0xff] %vm43, %v1355
    %1416 = vst.msk [vmem:[%s1381 + $0x11] sm:$0xff] %vm43, %v1356
    %1417 = vst.msk [vmem:[%s1381 + $0x21] sm:$0xff] %vm43, %v1357
    %1418 = vst.msk [vmem:[%s1381 + $0x31] sm:$0xff] %vm43, %v1358
    %1419 = vst.msk [vmem:[%s1381 + $0x41] sm:$0xff] %vm43, %v1359
    %1420 = vst.msk [vmem:[%s1381 + $0x51] sm:$0xff] %vm43, %v1360
    %1421 = vst.msk [vmem:[%s1381 + $0x61] sm:$0xff] %vm43, %v1361
    %1422 = vst.msk [vmem:[%s1381 + $0x71] sm:$0xff] %vm43, %v1362
    %1423 = vst.msk [vmem:[%s1381 + $0xa1] sm:$0xff] %vm43, %v1363
    %1424 = vst.msk [vmem:[%s1381 + $0xb1] sm:$0xff] %vm43, %v1364
    %1425 = vst.msk [vmem:[%s1381 + $0xc1] sm:$0xff] %vm43, %v1365
    %1426 = vst.msk [vmem:[%s1381 + $0xd1] sm:$0xff] %vm43, %v1366
    %1427 = vst.msk [vmem:[%s1381 + $0xe1] sm:$0xff] %vm43, %v1367
    %1428 = vst.msk [vmem:[%s1381 + $0xf1] sm:$0xff] %vm43, %v1368
    %1429 = vst.msk [vmem:[%s1381 + $0x101] sm:$0xff] %vm43, %v1369
    %1430 = vst.msk [vmem:[%s1381 + $0x111] sm:$0xff] %vm43, %v1370
    %v1431 = vld [vmem:[#allocation3] sm:$0xff]
    %v1432 = vld [vmem:[#allocation3 + $0x10] sm:$0xff]
    %v1433 = vld [vmem:[#allocation3 + $0x20] sm:$0xff]
    %v1434 = vld [vmem:[#allocation3 + $0x30] sm:$0xff]
    %v1435 = vld [vmem:[#allocation3 + $0x40] sm:$0xff]
    %v1436 = vld [vmem:[#allocation3 + $0x50] sm:$0xff]
    %v1437 = vld [vmem:[#allocation3 + $0x60] sm:$0xff]
    %v1438 = vld [vmem:[#allocation3 + $0x70] sm:$0xff]
    %v1439 = vld [vmem:[#allocation3 + $0xa0] sm:$0xff]
    %v1440 = vld [vmem:[#allocation3 + $0xb0] sm:$0xff]
    %v1441 = vld [vmem:[#allocation3 + $0xc0] sm:$0xff]
    %v1442 = vld [vmem:[#allocation3 + $0xd0] sm:$0xff]
    %v1443 = vld [vmem:[#allocation3 + $0xe0] sm:$0xff]
    %v1444 = vld [vmem:[#allocation3 + $0xf0] sm:$0xff]
    %v1445 = vld [vmem:[#allocation3 + $0x100] sm:$0xff]
    %v1446 = vld [vmem:[#allocation3 + $0x110] sm:$0xff]
    %1447 = vst.msk [vmem:[#allocation2] sm:$0xff] %vm43, %v1431
    %1448 = vst.msk [vmem:[#allocation2 + $0x28] sm:$0xff] %vm43, %v1432
    %1449 = vst.msk [vmem:[#allocation2 + $0x50] sm:$0xff] %vm43, %v1433
    %1450 = vst.msk [vmem:[#allocation2 + $0x78] sm:$0xff] %vm43, %v1434
    %1451 = vst.msk [vmem:[#allocation2 + $0xa0] sm:$0xff] %vm43, %v1435
    %1452 = vst.msk [vmem:[#allocation2 + $0xc8] sm:$0xff] %vm43, %v1436
    %1453 = vst.msk [vmem:[#allocation2 + $0xf0] sm:$0xff] %vm43, %v1437
    %1454 = vst.msk [vmem:[#allocation2 + $0x118] sm:$0xff] %vm43, %v1438
    %1455 = vst.msk [vmem:[#allocation2 + $0x140] sm:$0xff] %vm43, %v1439
    %1456 = vst.msk [vmem:[#allocation2 + $0x168] sm:$0xff] %vm43, %v1440
    %1457 = vst.msk [vmem:[#allocation2 + $0x190] sm:$0xff] %vm43, %v1441
    %1458 = vst.msk [vmem:[#allocation2 + $0x1b8] sm:$0xff] %vm43, %v1442
    %1459 = vst.msk [vmem:[#allocation2 + $0x1e0] sm:$0xff] %vm43, %v1443
    %1460 = vst.msk [vmem:[#allocation2 + $0x208] sm:$0xff] %vm43, %v1444
    %1461 = vst.msk [vmem:[#allocation2 + $0x230] sm:$0xff] %vm43, %v1445
    %1462 = vst.msk [vmem:[#allocation2 + $0x258] sm:$0xff] %vm43, %v1446
    %v1463 = vld [vmem:[#allocation3 + $0x1] sm:$0xff]
    %v1464 = vld [vmem:[#allocation3 + $0x11] sm:$0xff]
    %v1465 = vld [vmem:[#allocation3 + $0x21] sm:$0xff]
    %v1466 = vld [vmem:[#allocation3 + $0x31] sm:$0xff]
    %v1467 = vld [vmem:[#allocation3 + $0x41] sm:$0xff]
    %v1468 = vld [vmem:[#allocation3 + $0x51] sm:$0xff]
    %v1469 = vld [vmem:[#allocation3 + $0x61] sm:$0xff]
    %v1470 = vld [vmem:[#allocation3 + $0x71] sm:$0xff]
    %v1471 = vld [vmem:[#allocation3 + $0xa1] sm:$0xff]
    %v1472 = vld [vmem:[#allocation3 + $0xb1] sm:$0xff]
    %v1473 = vld [vmem:[#allocation3 + $0xc1] sm:$0xff]
    %v1474 = vld [vmem:[#allocation3 + $0xd1] sm:$0xff]
    %v1475 = vld [vmem:[#allocation3 + $0xe1] sm:$0xff]
    %v1476 = vld [vmem:[#allocation3 + $0xf1] sm:$0xff]
    %v1477 = vld [vmem:[#allocation3 + $0x101] sm:$0xff]
    %v1478 = vld [vmem:[#allocation3 + $0x111] sm:$0xff]
    %1495 = vrot.lane.b32.xlu0 %v1463, 64
    %v1496 = vpop.permute.xlu0 %1495
    %1497 = vrot.lane.b32.xlu0 %v1464, 64
    %v1498 = vpop.permute.xlu0 %1497
    %1499 = vrot.lane.b32.xlu0 %v1465, 64
    %v1500 = vpop.permute.xlu0 %1499
    %1501 = vrot.lane.b32.xlu0 %v1466, 64
    %v1502 = vpop.permute.xlu0 %1501
    %1503 = vrot.lane.b32.xlu0 %v1467, 64
    %v1504 = vpop.permute.xlu0 %1503
    %1505 = vrot.lane.b32.xlu0 %v1468, 64
    %v1506 = vpop.permute.xlu0 %1505
    %1507 = vrot.lane.b32.xlu0 %v1469, 64
    %v1508 = vpop.permute.xlu0 %1507
    %1509 = vrot.lane.b32.xlu0 %v1470, 64
    %v1510 = vpop.permute.xlu0 %1509
    %1511 = vrot.lane.b32.xlu0 %v1471, 64
    %v1512 = vpop.permute.xlu0 %1511
    %1513 = vrot.lane.b32.xlu0 %v1472, 64
    %v1514 = vpop.permute.xlu0 %1513
    %1515 = vrot.lane.b32.xlu0 %v1473, 64
    %v1516 = vpop.permute.xlu0 %1515
    %1517 = vrot.lane.b32.xlu0 %v1474, 64
    %v1518 = vpop.permute.xlu0 %1517
    %1519 = vrot.lane.b32.xlu0 %v1475, 64
    %v1520 = vpop.permute.xlu0 %1519
    %1521 = vrot.lane.b32.xlu0 %v1476, 64
    %v1522 = vpop.permute.xlu0 %1521
    %1523 = vrot.lane.b32.xlu0 %v1477, 64
    %v1524 = vpop.permute.xlu0 %1523
    %1525 = vrot.lane.b32.xlu0 %v1478, 64
    %v1526 = vpop.permute.xlu0 %1525
    %1543 = vst.msk [vmem:[#allocation2] sm:$0xff] %vm140, %v1496
    %1544 = vst.msk [vmem:[#allocation2 + $0x28] sm:$0xff] %vm140, %v1498
    %1545 = vst.msk [vmem:[#allocation2 + $0x50] sm:$0xff] %vm140, %v1500
    %1546 = vst.msk [vmem:[#allocation2 + $0x78] sm:$0xff] %vm140, %v1502
    %1547 = vst.msk [vmem:[#allocation2 + $0xa0] sm:$0xff] %vm140, %v1504
    %1548 = vst.msk [vmem:[#allocation2 + $0xc8] sm:$0xff] %vm140, %v1506
    %1549 = vst.msk [vmem:[#allocation2 + $0xf0] sm:$0xff] %vm140, %v1508
    %1550 = vst.msk [vmem:[#allocation2 + $0x118] sm:$0xff] %vm140, %v1510
    %1551 = vst.msk [vmem:[#allocation2 + $0x140] sm:$0xff] %vm140, %v1512
    %1552 = vst.msk [vmem:[#allocation2 + $0x168] sm:$0xff] %vm140, %v1514
    %1553 = vst.msk [vmem:[#allocation2 + $0x190] sm:$0xff] %vm140, %v1516
    %1554 = vst.msk [vmem:[#allocation2 + $0x1b8] sm:$0xff] %vm140, %v1518
    %1555 = vst.msk [vmem:[#allocation2 + $0x1e0] sm:$0xff] %vm140, %v1520
    %1556 = vst.msk [vmem:[#allocation2 + $0x208] sm:$0xff] %vm140, %v1522
    %1557 = vst.msk [vmem:[#allocation2 + $0x230] sm:$0xff] %vm140, %v1524
    %1558 = vst.msk [vmem:[#allocation2 + $0x258] sm:$0xff] %vm140, %v1526
    %v1559 = vld [vmem:[#allocation3 + $0x2] sm:$0xff]
    %v1560 = vld [vmem:[#allocation3 + $0x12] sm:$0xff]
    %v1561 = vld [vmem:[#allocation3 + $0x22] sm:$0xff]
    %v1562 = vld [vmem:[#allocation3 + $0x32] sm:$0xff]
    %v1563 = vld [vmem:[#allocation3 + $0x42] sm:$0xff]
    %v1564 = vld [vmem:[#allocation3 + $0x52] sm:$0xff]
    %v1565 = vld [vmem:[#allocation3 + $0x62] sm:$0xff]
    %v1566 = vld [vmem:[#allocation3 + $0x72] sm:$0xff]
    %v1567 = vld [vmem:[#allocation3 + $0xa2] sm:$0xff]
    %v1568 = vld [vmem:[#allocation3 + $0xb2] sm:$0xff]
    %v1569 = vld [vmem:[#allocation3 + $0xc2] sm:$0xff]
    %v1570 = vld [vmem:[#allocation3 + $0xd2] sm:$0xff]
    %v1571 = vld [vmem:[#allocation3 + $0xe2] sm:$0xff]
    %v1572 = vld [vmem:[#allocation3 + $0xf2] sm:$0xff]
    %v1573 = vld [vmem:[#allocation3 + $0x102] sm:$0xff]
    %v1574 = vld [vmem:[#allocation3 + $0x112] sm:$0xff]
    %1575 = vst.msk [vmem:[#allocation2 + $0x8] sm:$0xff] %vm43, %v1559
    %1576 = vst.msk [vmem:[#allocation2 + $0x30] sm:$0xff] %vm43, %v1560
    %1577 = vst.msk [vmem:[#allocation2 + $0x58] sm:$0xff] %vm43, %v1561
    %1578 = vst.msk [vmem:[#allocation2 + $0x80] sm:$0xff] %vm43, %v1562
    %1579 = vst.msk [vmem:[#allocation2 + $0xa8] sm:$0xff] %vm43, %v1563
    %1580 = vst.msk [vmem:[#allocation2 + $0xd0] sm:$0xff] %vm43, %v1564
    %1581 = vst.msk [vmem:[#allocation2 + $0xf8] sm:$0xff] %vm43, %v1565
    %1582 = vst.msk [vmem:[#allocation2 + $0x120] sm:$0xff] %vm43, %v1566
    %1583 = vst.msk [vmem:[#allocation2 + $0x148] sm:$0xff] %vm43, %v1567
    %1584 = vst.msk [vmem:[#allocation2 + $0x170] sm:$0xff] %vm43, %v1568
    %1585 = vst.msk [vmem:[#allocation2 + $0x198] sm:$0xff] %vm43, %v1569
    %1586 = vst.msk [vmem:[#allocation2 + $0x1c0] sm:$0xff] %vm43, %v1570
    %1587 = vst.msk [vmem:[#allocation2 + $0x1e8] sm:$0xff] %vm43, %v1571
    %1588 = vst.msk [vmem:[#allocation2 + $0x210] sm:$0xff] %vm43, %v1572
    %1589 = vst.msk [vmem:[#allocation2 + $0x238] sm:$0xff] %vm43, %v1573
    %1590 = vst.msk [vmem:[#allocation2 + $0x260] sm:$0xff] %vm43, %v1574
    %v1591 = vld [vmem:[%s1381] sm:$0xff]
    %v1592 = vld [vmem:[%s1381 + $0x10] sm:$0xff]
    %v1593 = vld [vmem:[%s1381 + $0x20] sm:$0xff]
    %v1594 = vld [vmem:[%s1381 + $0x30] sm:$0xff]
    %v1595 = vld [vmem:[%s1381 + $0x40] sm:$0xff]
    %v1596 = vld [vmem:[%s1381 + $0x50] sm:$0xff]
    %v1597 = vld [vmem:[%s1381 + $0x60] sm:$0xff]
    %v1598 = vld [vmem:[%s1381 + $0x70] sm:$0xff]
    %v1599 = vld [vmem:[%s1381 + $0xa0] sm:$0xff]
    %v1600 = vld [vmem:[%s1381 + $0xb0] sm:$0xff]
    %v1601 = vld [vmem:[%s1381 + $0xc0] sm:$0xff]
    %v1602 = vld [vmem:[%s1381 + $0xd0] sm:$0xff]
    %v1603 = vld [vmem:[%s1381 + $0xe0] sm:$0xff]
    %v1604 = vld [vmem:[%s1381 + $0xf0] sm:$0xff]
    %v1605 = vld [vmem:[%s1381 + $0x100] sm:$0xff]
    %v1606 = vld [vmem:[%s1381 + $0x110] sm:$0xff]
    %1623 = vrot.lane.b32.xlu0 %v1591, 64
    %v1624 = vpop.permute.xlu0 %1623
    %1625 = vrot.lane.b32.xlu0 %v1592, 64
    %v1626 = vpop.permute.xlu0 %1625
    %1627 = vrot.lane.b32.xlu0 %v1593, 64
    %v1628 = vpop.permute.xlu0 %1627
    %1629 = vrot.lane.b32.xlu0 %v1594, 64
    %v1630 = vpop.permute.xlu0 %1629
    %1631 = vrot.lane.b32.xlu0 %v1595, 64
    %v1632 = vpop.permute.xlu0 %1631
    %1633 = vrot.lane.b32.xlu0 %v1596, 64
    %v1634 = vpop.permute.xlu0 %1633
    %1635 = vrot.lane.b32.xlu0 %v1597, 64
    %v1636 = vpop.permute.xlu0 %1635
    %1637 = vrot.lane.b32.xlu0 %v1598, 64
    %v1638 = vpop.permute.xlu0 %1637
    %1639 = vrot.lane.b32.xlu0 %v1599, 64
    %v1640 = vpop.permute.xlu0 %1639
    %1641 = vrot.lane.b32.xlu0 %v1600, 64
    %v1642 = vpop.permute.xlu0 %1641
    %1643 = vrot.lane.b32.xlu0 %v1601, 64
    %v1644 = vpop.permute.xlu0 %1643
    %1645 = vrot.lane.b32.xlu0 %v1602, 64
    %v1646 = vpop.permute.xlu0 %1645
    %1647 = vrot.lane.b32.xlu0 %v1603, 64
    %v1648 = vpop.permute.xlu0 %1647
    %1649 = vrot.lane.b32.xlu0 %v1604, 64
    %v1650 = vpop.permute.xlu0 %1649
    %1651 = vrot.lane.b32.xlu0 %v1605, 64
    %v1652 = vpop.permute.xlu0 %1651
    %1653 = vrot.lane.b32.xlu0 %v1606, 64
    %v1654 = vpop.permute.xlu0 %1653
    %1671 = vst.msk [vmem:[#allocation2 + $0x8] sm:$0xff] %vm140, %v1624
    %1672 = vst.msk [vmem:[#allocation2 + $0x30] sm:$0xff] %vm140, %v1626
    %1673 = vst.msk [vmem:[#allocation2 + $0x58] sm:$0xff] %vm140, %v1628
    %1674 = vst.msk [vmem:[#allocation2 + $0x80] sm:$0xff] %vm140, %v1630
    %1675 = vst.msk [vmem:[#allocation2 + $0xa8] sm:$0xff] %vm140, %v1632
    %1676 = vst.msk [vmem:[#allocation2 + $0xd0] sm:$0xff] %vm140, %v1634
    %1677 = vst.msk [vmem:[#allocation2 + $0xf8] sm:$0xff] %vm140, %v1636
    %1678 = vst.msk [vmem:[#allocation2 + $0x120] sm:$0xff] %vm140, %v1638
    %1679 = vst.msk [vmem:[#allocation2 + $0x148] sm:$0xff] %vm140, %v1640
    %1680 = vst.msk [vmem:[#allocation2 + $0x170] sm:$0xff] %vm140, %v1642
    %1681 = vst.msk [vmem:[#allocation2 + $0x198] sm:$0xff] %vm140, %v1644
    %1682 = vst.msk [vmem:[#allocation2 + $0x1c0] sm:$0xff] %vm140, %v1646
    %1683 = vst.msk [vmem:[#allocation2 + $0x1e8] sm:$0xff] %vm140, %v1648
    %1684 = vst.msk [vmem:[#allocation2 + $0x210] sm:$0xff] %vm140, %v1650
    %1685 = vst.msk [vmem:[#allocation2 + $0x238] sm:$0xff] %vm140, %v1652
    %1686 = vst.msk [vmem:[#allocation2 + $0x260] sm:$0xff] %vm140, %v1654
    %v1687 = vld [vmem:[%s1381 + $0x1] sm:$0xff]
    %v1688 = vld [vmem:[%s1381 + $0x11] sm:$0xff]
    %v1689 = vld [vmem:[%s1381 + $0x21] sm:$0xff]
    %v1690 = vld [vmem:[%s1381 + $0x31] sm:$0xff]
    %v1691 = vld [vmem:[%s1381 + $0x41] sm:$0xff]
    %v1692 = vld [vmem:[%s1381 + $0x51] sm:$0xff]
    %v1693 = vld [vmem:[%s1381 + $0x61] sm:$0xff]
    %v1694 = vld [vmem:[%s1381 + $0x71] sm:$0xff]
    %v1695 = vld [vmem:[%s1381 + $0xa1] sm:$0xff]
    %v1696 = vld [vmem:[%s1381 + $0xb1] sm:$0xff]
    %v1697 = vld [vmem:[%s1381 + $0xc1] sm:$0xff]
    %v1698 = vld [vmem:[%s1381 + $0xd1] sm:$0xff]
    %v1699 = vld [vmem:[%s1381 + $0xe1] sm:$0xff]
    %v1700 = vld [vmem:[%s1381 + $0xf1] sm:$0xff]
    %v1701 = vld [vmem:[%s1381 + $0x101] sm:$0xff]
    %v1702 = vld [vmem:[%s1381 + $0x111] sm:$0xff]
    %1703 = vst.msk [vmem:[#allocation2 + $0x10] sm:$0xff] %vm43, %v1687
    %1704 = vst.msk [vmem:[#allocation2 + $0x38] sm:$0xff] %vm43, %v1688
    %1705 = vst.msk [vmem:[#allocation2 + $0x60] sm:$0xff] %vm43, %v1689
    %1706 = vst.msk [vmem:[#allocation2 + $0x88] sm:$0xff] %vm43, %v1690
    %1707 = vst.msk [vmem:[#allocation2 + $0xb0] sm:$0xff] %vm43, %v1691
    %1708 = vst.msk [vmem:[#allocation2 + $0xd8] sm:$0xff] %vm43, %v1692
    %1709 = vst.msk [vmem:[#allocation2 + $0x100] sm:$0xff] %vm43, %v1693
    %1710 = vst.msk [vmem:[#allocation2 + $0x128] sm:$0xff] %vm43, %v1694
    %1711 = vst.msk [vmem:[#allocation2 + $0x150] sm:$0xff] %vm43, %v1695
    %1712 = vst.msk [vmem:[#allocation2 + $0x178] sm:$0xff] %vm43, %v1696
    %1713 = vst.msk [vmem:[#allocation2 + $0x1a0] sm:$0xff] %vm43, %v1697
    %1714 = vst.msk [vmem:[#allocation2 + $0x1c8] sm:$0xff] %vm43, %v1698
    %1715 = vst.msk [vmem:[#allocation2 + $0x1f0] sm:$0xff] %vm43, %v1699
    %1716 = vst.msk [vmem:[#allocation2 + $0x218] sm:$0xff] %vm43, %v1700
    %1717 = vst.msk [vmem:[#allocation2 + $0x240] sm:$0xff] %vm43, %v1701
    %1718 = vst.msk [vmem:[#allocation2 + $0x268] sm:$0xff] %vm43, %v1702
    %v1719 = vld [vmem:[%s1381 + $0x2] sm:$0xff]
    %v1720 = vld [vmem:[%s1381 + $0x12] sm:$0xff]
    %v1721 = vld [vmem:[%s1381 + $0x22] sm:$0xff]
    %v1722 = vld [vmem:[%s1381 + $0x32] sm:$0xff]
    %v1723 = vld [vmem:[%s1381 + $0x42] sm:$0xff]
    %v1724 = vld [vmem:[%s1381 + $0x52] sm:$0xff]
    %v1725 = vld [vmem:[%s1381 + $0x62] sm:$0xff]
    %v1726 = vld [vmem:[%s1381 + $0x72] sm:$0xff]
    %v1727 = vld [vmem:[%s1381 + $0xa2] sm:$0xff]
    %v1728 = vld [vmem:[%s1381 + $0xb2] sm:$0xff]
    %v1729 = vld [vmem:[%s1381 + $0xc2] sm:$0xff]
    %v1730 = vld [vmem:[%s1381 + $0xd2] sm:$0xff]
    %v1731 = vld [vmem:[%s1381 + $0xe2] sm:$0xff]
    %v1732 = vld [vmem:[%s1381 + $0xf2] sm:$0xff]
    %v1733 = vld [vmem:[%s1381 + $0x102] sm:$0xff]
    %v1734 = vld [vmem:[%s1381 + $0x112] sm:$0xff]
    %1751 = vrot.lane.b32.xlu0 %v1719, 64
    %v1752 = vpop.permute.xlu0 %1751
    %1753 = vrot.lane.b32.xlu0 %v1720, 64
    %v1754 = vpop.permute.xlu0 %1753
    %1755 = vrot.lane.b32.xlu0 %v1721, 64
    %v1756 = vpop.permute.xlu0 %1755
    %1757 = vrot.lane.b32.xlu0 %v1722, 64
    %v1758 = vpop.permute.xlu0 %1757
    %1759 = vrot.lane.b32.xlu0 %v1723, 64
    %v1760 = vpop.permute.xlu0 %1759
    %1761 = vrot.lane.b32.xlu0 %v1724, 64
    %v1762 = vpop.permute.xlu0 %1761
    %1763 = vrot.lane.b32.xlu0 %v1725, 64
    %v1764 = vpop.permute.xlu0 %1763
    %1765 = vrot.lane.b32.xlu0 %v1726, 64
    %v1766 = vpop.permute.xlu0 %1765
    %1767 = vrot.lane.b32.xlu0 %v1727, 64
    %v1768 = vpop.permute.xlu0 %1767
    %1769 = vrot.lane.b32.xlu0 %v1728, 64
    %v1770 = vpop.permute.xlu0 %1769
    %1771 = vrot.lane.b32.xlu0 %v1729, 64
    %v1772 = vpop.permute.xlu0 %1771
    %1773 = vrot.lane.b32.xlu0 %v1730, 64
    %v1774 = vpop.permute.xlu0 %1773
    %1775 = vrot.lane.b32.xlu0 %v1731, 64
    %v1776 = vpop.permute.xlu0 %1775
    %1777 = vrot.lane.b32.xlu0 %v1732, 64
    %v1778 = vpop.permute.xlu0 %1777
    %1779 = vrot.lane.b32.xlu0 %v1733, 64
    %v1780 = vpop.permute.xlu0 %1779
    %1781 = vrot.lane.b32.xlu0 %v1734, 64
    %v1782 = vpop.permute.xlu0 %1781
    %1799 = vst.msk [vmem:[#allocation2 + $0x10] sm:$0xff] %vm140, %v1752
    %1800 = vst.msk [vmem:[#allocation2 + $0x38] sm:$0xff] %vm140, %v1754
    %1801 = vst.msk [vmem:[#allocation2 + $0x60] sm:$0xff] %vm140, %v1756
    %1802 = vst.msk [vmem:[#allocation2 + $0x88] sm:$0xff] %vm140, %v1758
    %1803 = vst.msk [vmem:[#allocation2 + $0xb0] sm:$0xff] %vm140, %v1760
    %1804 = vst.msk [vmem:[#allocation2 + $0xd8] sm:$0xff] %vm140, %v1762
    %1805 = vst.msk [vmem:[#allocation2 + $0x100] sm:$0xff] %vm140, %v1764
    %1806 = vst.msk [vmem:[#allocation2 + $0x128] sm:$0xff] %vm140, %v1766
    %1807 = vst.msk [vmem:[#allocation2 + $0x150] sm:$0xff] %vm140, %v1768
    %1808 = vst.msk [vmem:[#allocation2 + $0x178] sm:$0xff] %vm140, %v1770
    %1809 = vst.msk [vmem:[#allocation2 + $0x1a0] sm:$0xff] %vm140, %v1772
    %1810 = vst.msk [vmem:[#allocation2 + $0x1c8] sm:$0xff] %vm140, %v1774
    %1811 = vst.msk [vmem:[#allocation2 + $0x1f0] sm:$0xff] %vm140, %v1776
    %1812 = vst.msk [vmem:[#allocation2 + $0x218] sm:$0xff] %vm140, %v1778
    %1813 = vst.msk [vmem:[#allocation2 + $0x240] sm:$0xff] %vm140, %v1780
    %1814 = vst.msk [vmem:[#allocation2 + $0x268] sm:$0xff] %vm140, %v1782
    %s1815 = scalar_lea.vmem [#allocation3], 32
    %v1816 = vld [vmem:[%s1815] sm:$0xff]
    %v1817 = vld [vmem:[%s1815 + $0x10] sm:$0xff]
    %v1818 = vld [vmem:[%s1815 + $0x20] sm:$0xff]
    %v1819 = vld [vmem:[%s1815 + $0x30] sm:$0xff]
    %v1820 = vld [vmem:[%s1815 + $0x40] sm:$0xff]
    %v1821 = vld [vmem:[%s1815 + $0x50] sm:$0xff]
    %v1822 = vld [vmem:[%s1815 + $0x60] sm:$0xff]
    %v1823 = vld [vmem:[%s1815 + $0x70] sm:$0xff]
    %v1824 = vld [vmem:[%s1815 + $0xa0] sm:$0xff]
    %v1825 = vld [vmem:[%s1815 + $0xb0] sm:$0xff]
    %v1826 = vld [vmem:[%s1815 + $0xc0] sm:$0xff]
    %v1827 = vld [vmem:[%s1815 + $0xd0] sm:$0xff]
    %v1828 = vld [vmem:[%s1815 + $0xe0] sm:$0xff]
    %v1829 = vld [vmem:[%s1815 + $0xf0] sm:$0xff]
    %v1830 = vld [vmem:[%s1815 + $0x100] sm:$0xff]
    %v1831 = vld [vmem:[%s1815 + $0x110] sm:$0xff]
    %1832 = vst.msk [vmem:[#allocation2 + $0x18] sm:$0xff] %vm43, %v1816
    %1833 = vst.msk [vmem:[#allocation2 + $0x40] sm:$0xff] %vm43, %v1817
    %1834 = vst.msk [vmem:[#allocation2 + $0x68] sm:$0xff] %vm43, %v1818
    %1835 = vst.msk [vmem:[#allocation2 + $0x90] sm:$0xff] %vm43, %v1819
    %1836 = vst.msk [vmem:[#allocation2 + $0xb8] sm:$0xff] %vm43, %v1820
    %1837 = vst.msk [vmem:[#allocation2 + $0xe0] sm:$0xff] %vm43, %v1821
    %1838 = vst.msk [vmem:[#allocation2 + $0x108] sm:$0xff] %vm43, %v1822
    %1839 = vst.msk [vmem:[#allocation2 + $0x130] sm:$0xff] %vm43, %v1823
    %1840 = vst.msk [vmem:[#allocation2 + $0x158] sm:$0xff] %vm43, %v1824
    %1841 = vst.msk [vmem:[#allocation2 + $0x180] sm:$0xff] %vm43, %v1825
    %1842 = vst.msk [vmem:[#allocation2 + $0x1a8] sm:$0xff] %vm43, %v1826
    %1843 = vst.msk [vmem:[#allocation2 + $0x1d0] sm:$0xff] %vm43, %v1827
    %1844 = vst.msk [vmem:[#allocation2 + $0x1f8] sm:$0xff] %vm43, %v1828
    %1845 = vst.msk [vmem:[#allocation2 + $0x220] sm:$0xff] %vm43, %v1829
    %1846 = vst.msk [vmem:[#allocation2 + $0x248] sm:$0xff] %vm43, %v1830
    %1847 = vst.msk [vmem:[#allocation2 + $0x270] sm:$0xff] %vm43, %v1831
    %v1848 = vld [vmem:[%s1815 + $0x1] sm:$0xff]
    %v1849 = vld [vmem:[%s1815 + $0x11] sm:$0xff]
    %v1850 = vld [vmem:[%s1815 + $0x21] sm:$0xff]
    %v1851 = vld [vmem:[%s1815 + $0x31] sm:$0xff]
    %v1852 = vld [vmem:[%s1815 + $0x41] sm:$0xff]
    %v1853 = vld [vmem:[%s1815 + $0x51] sm:$0xff]
    %v1854 = vld [vmem:[%s1815 + $0x61] sm:$0xff]
    %v1855 = vld [vmem:[%s1815 + $0x71] sm:$0xff]
    %v1856 = vld [vmem:[%s1815 + $0xa1] sm:$0xff]
    %v1857 = vld [vmem:[%s1815 + $0xb1] sm:$0xff]
    %v1858 = vld [vmem:[%s1815 + $0xc1] sm:$0xff]
    %v1859 = vld [vmem:[%s1815 + $0xd1] sm:$0xff]
    %v1860 = vld [vmem:[%s1815 + $0xe1] sm:$0xff]
    %v1861 = vld [vmem:[%s1815 + $0xf1] sm:$0xff]
    %v1862 = vld [vmem:[%s1815 + $0x101] sm:$0xff]
    %v1863 = vld [vmem:[%s1815 + $0x111] sm:$0xff]
    %1880 = vrot.lane.b32.xlu0 %v1848, 64
    %v1881 = vpop.permute.xlu0 %1880
    %1882 = vrot.lane.b32.xlu0 %v1849, 64
    %v1883 = vpop.permute.xlu0 %1882
    %1884 = vrot.lane.b32.xlu0 %v1850, 64
    %v1885 = vpop.permute.xlu0 %1884
    %1886 = vrot.lane.b32.xlu0 %v1851, 64
    %v1887 = vpop.permute.xlu0 %1886
    %1888 = vrot.lane.b32.xlu0 %v1852, 64
    %v1889 = vpop.permute.xlu0 %1888
    %1890 = vrot.lane.b32.xlu0 %v1853, 64
    %v1891 = vpop.permute.xlu0 %1890
    %1892 = vrot.lane.b32.xlu0 %v1854, 64
    %v1893 = vpop.permute.xlu0 %1892
    %1894 = vrot.lane.b32.xlu0 %v1855, 64
    %v1895 = vpop.permute.xlu0 %1894
    %1896 = vrot.lane.b32.xlu0 %v1856, 64
    %v1897 = vpop.permute.xlu0 %1896
    %1898 = vrot.lane.b32.xlu0 %v1857, 64
    %v1899 = vpop.permute.xlu0 %1898
    %1900 = vrot.lane.b32.xlu0 %v1858, 64
    %v1901 = vpop.permute.xlu0 %1900
    %1902 = vrot.lane.b32.xlu0 %v1859, 64
    %v1903 = vpop.permute.xlu0 %1902
    %1904 = vrot.lane.b32.xlu0 %v1860, 64
    %v1905 = vpop.permute.xlu0 %1904
    %1906 = vrot.lane.b32.xlu0 %v1861, 64
    %v1907 = vpop.permute.xlu0 %1906
    %1908 = vrot.lane.b32.xlu0 %v1862, 64
    %v1909 = vpop.permute.xlu0 %1908
    %1910 = vrot.lane.b32.xlu0 %v1863, 64
    %v1911 = vpop.permute.xlu0 %1910
    %1928 = vst.msk [vmem:[#allocation2 + $0x18] sm:$0xff] %vm140, %v1881
    %1929 = vst.msk [vmem:[#allocation2 + $0x40] sm:$0xff] %vm140, %v1883
    %1930 = vst.msk [vmem:[#allocation2 + $0x68] sm:$0xff] %vm140, %v1885
    %1931 = vst.msk [vmem:[#allocation2 + $0x90] sm:$0xff] %vm140, %v1887
    %1932 = vst.msk [vmem:[#allocation2 + $0xb8] sm:$0xff] %vm140, %v1889
    %1933 = vst.msk [vmem:[#allocation2 + $0xe0] sm:$0xff] %vm140, %v1891
    %1934 = vst.msk [vmem:[#allocation2 + $0x108] sm:$0xff] %vm140, %v1893
    %1935 = vst.msk [vmem:[#allocation2 + $0x130] sm:$0xff] %vm140, %v1895
    %1936 = vst.msk [vmem:[#allocation2 + $0x158] sm:$0xff] %vm140, %v1897
    %1937 = vst.msk [vmem:[#allocation2 + $0x180] sm:$0xff] %vm140, %v1899
    %1938 = vst.msk [vmem:[#allocation2 + $0x1a8] sm:$0xff] %vm140, %v1901
    %1939 = vst.msk [vmem:[#allocation2 + $0x1d0] sm:$0xff] %vm140, %v1903
    %1940 = vst.msk [vmem:[#allocation2 + $0x1f8] sm:$0xff] %vm140, %v1905
    %1941 = vst.msk [vmem:[#allocation2 + $0x220] sm:$0xff] %vm140, %v1907
    %1942 = vst.msk [vmem:[#allocation2 + $0x248] sm:$0xff] %vm140, %v1909
    %1943 = vst.msk [vmem:[#allocation2 + $0x270] sm:$0xff] %vm140, %v1911
    %v1944 = vld [vmem:[%s1815 + $0x2] sm:$0xff]
    %v1945 = vld [vmem:[%s1815 + $0x12] sm:$0xff]
    %v1946 = vld [vmem:[%s1815 + $0x22] sm:$0xff]
    %v1947 = vld [vmem:[%s1815 + $0x32] sm:$0xff]
    %v1948 = vld [vmem:[%s1815 + $0x42] sm:$0xff]
    %v1949 = vld [vmem:[%s1815 + $0x52] sm:$0xff]
    %v1950 = vld [vmem:[%s1815 + $0x62] sm:$0xff]
    %v1951 = vld [vmem:[%s1815 + $0x72] sm:$0xff]
    %v1952 = vld [vmem:[%s1815 + $0xa2] sm:$0xff]
    %v1953 = vld [vmem:[%s1815 + $0xb2] sm:$0xff]
    %v1954 = vld [vmem:[%s1815 + $0xc2] sm:$0xff]
    %v1955 = vld [vmem:[%s1815 + $0xd2] sm:$0xff]
    %v1956 = vld [vmem:[%s1815 + $0xe2] sm:$0xff]
    %v1957 = vld [vmem:[%s1815 + $0xf2] sm:$0xff]
    %v1958 = vld [vmem:[%s1815 + $0x102] sm:$0xff]
    %v1959 = vld [vmem:[%s1815 + $0x112] sm:$0xff]
    %1960 = vst.msk [vmem:[#allocation2 + $0x20] sm:$0xff] %vm43, %v1944
    %1961 = vst.msk [vmem:[#allocation2 + $0x48] sm:$0xff] %vm43, %v1945
    %1962 = vst.msk [vmem:[#allocation2 + $0x70] sm:$0xff] %vm43, %v1946
    %1963 = vst.msk [vmem:[#allocation2 + $0x98] sm:$0xff] %vm43, %v1947
    %1964 = vst.msk [vmem:[#allocation2 + $0xc0] sm:$0xff] %vm43, %v1948
    %1965 = vst.msk [vmem:[#allocation2 + $0xe8] sm:$0xff] %vm43, %v1949
    %1966 = vst.msk [vmem:[#allocation2 + $0x110] sm:$0xff] %vm43, %v1950
    %1967 = vst.msk [vmem:[#allocation2 + $0x138] sm:$0xff] %vm43, %v1951
    %1968 = vst.msk [vmem:[#allocation2 + $0x160] sm:$0xff] %vm43, %v1952
    %1969 = vst.msk [vmem:[#allocation2 + $0x188] sm:$0xff] %vm43, %v1953
    %1970 = vst.msk [vmem:[#allocation2 + $0x1b0] sm:$0xff] %vm43, %v1954
    %1971 = vst.msk [vmem:[#allocation2 + $0x1d8] sm:$0xff] %vm43, %v1955
    %1972 = vst.msk [vmem:[#allocation2 + $0x200] sm:$0xff] %vm43, %v1956
    %1973 = vst.msk [vmem:[#allocation2 + $0x228] sm:$0xff] %vm43, %v1957
    %1974 = vst.msk [vmem:[#allocation2 + $0x250] sm:$0xff] %vm43, %v1958
    %1975 = vst.msk [vmem:[#allocation2 + $0x278] sm:$0xff] %vm43, %v1959
    %v1976 = vld [vmem:[#allocation2] sm:$0xff]
    %v1977 = vld [vmem:[#allocation2 + $0x8] sm:$0xff]
    %v1978 = vld [vmem:[#allocation2 + $0x10] sm:$0xff]
    %v1979 = vld [vmem:[#allocation2 + $0x18] sm:$0xff]
    %v1980 = vld [vmem:[#allocation2 + $0x20] sm:$0xff]
    %v1981 = vld [vmem:[#allocation2 + $0x28] sm:$0xff]
    %v1982 = vld [vmem:[#allocation2 + $0x30] sm:$0xff]
    %v1983 = vld [vmem:[#allocation2 + $0x38] sm:$0xff]
    %v1984 = vld [vmem:[#allocation2 + $0x40] sm:$0xff]
    %v1985 = vld [vmem:[#allocation2 + $0x48] sm:$0xff]
    %v1986 = vld [vmem:[#allocation2 + $0x50] sm:$0xff]
    %v1987 = vld [vmem:[#allocation2 + $0x58] sm:$0xff]
    %v1988 = vld [vmem:[#allocation2 + $0x60] sm:$0xff]
    %v1989 = vld [vmem:[#allocation2 + $0x68] sm:$0xff]
    %v1990 = vld [vmem:[#allocation2 + $0x70] sm:$0xff]
    %v1991 = vld [vmem:[#allocation2 + $0x78] sm:$0xff]
    %v1992 = vld [vmem:[#allocation2 + $0x80] sm:$0xff]
    %v1993 = vld [vmem:[#allocation2 + $0x88] sm:$0xff]
    %v1994 = vld [vmem:[#allocation2 + $0x90] sm:$0xff]
    %v1995 = vld [vmem:[#allocation2 + $0x98] sm:$0xff]
    %v1996 = vld [vmem:[#allocation2 + $0xa0] sm:$0xff]
    %v1997 = vld [vmem:[#allocation2 + $0xa8] sm:$0xff]
    %v1998 = vld [vmem:[#allocation2 + $0xb0] sm:$0xff]
    %v1999 = vld [vmem:[#allocation2 + $0xb8] sm:$0xff]
    %v2000 = vld [vmem:[#allocation2 + $0xc0] sm:$0xff]
    %v2001 = vld [vmem:[#allocation2 + $0xc8] sm:$0xff]
    %v2002 = vld [vmem:[#allocation2 + $0xd0] sm:$0xff]
    %v2003 = vld [vmem:[#allocation2 + $0xd8] sm:$0xff]
    %v2004 = vld [vmem:[#allocation2 + $0xe0] sm:$0xff]
    %v2005 = vld [vmem:[#allocation2 + $0xe8] sm:$0xff]
    %v2006 = vld [vmem:[#allocation2 + $0xf0] sm:$0xff]
    %v2007 = vld [vmem:[#allocation2 + $0xf8] sm:$0xff]
    %v2008 = vld [vmem:[#allocation2 + $0x100] sm:$0xff]
    %v2009 = vld [vmem:[#allocation2 + $0x108] sm:$0xff]
    %v2010 = vld [vmem:[#allocation2 + $0x110] sm:$0xff]
    %v2011 = vld [vmem:[#allocation2 + $0x118] sm:$0xff]
    %v2012 = vld [vmem:[#allocation2 + $0x120] sm:$0xff]
    %v2013 = vld [vmem:[#allocation2 + $0x128] sm:$0xff]
    %v2014 = vld [vmem:[#allocation2 + $0x130] sm:$0xff]
    %v2015 = vld [vmem:[#allocation2 + $0x138] sm:$0xff]
    %v2016 = vld [vmem:[#allocation2 + $0x140] sm:$0xff]
    %v2017 = vld [vmem:[#allocation2 + $0x148] sm:$0xff]
    %v2018 = vld [vmem:[#allocation2 + $0x150] sm:$0xff]
    %v2019 = vld [vmem:[#allocation2 + $0x158] sm:$0xff]
    %v2020 = vld [vmem:[#allocation2 + $0x160] sm:$0xff]
    %v2021 = vld [vmem:[#allocation2 + $0x168] sm:$0xff]
    %v2022 = vld [vmem:[#allocation2 + $0x170] sm:$0xff]
    %v2023 = vld [vmem:[#allocation2 + $0x178] sm:$0xff]
    %v2024 = vld [vmem:[#allocation2 + $0x180] sm:$0xff]
    %v2025 = vld [vmem:[#allocation2 + $0x188] sm:$0xff]
    %v2026 = vld [vmem:[#allocation2 + $0x190] sm:$0xff]
    %v2027 = vld [vmem:[#allocation2 + $0x198] sm:$0xff]
    %v2028 = vld [vmem:[#allocation2 + $0x1a0] sm:$0xff]
    %v2029 = vld [vmem:[#allocation2 + $0x1a8] sm:$0xff]
    %v2030 = vld [vmem:[#allocation2 + $0x1b0] sm:$0xff]
    %v2031 = vld [vmem:[#allocation2 + $0x1b8] sm:$0xff]
    %v2032 = vld [vmem:[#allocation2 + $0x1c0] sm:$0xff]
    %v2033 = vld [vmem:[#allocation2 + $0x1c8] sm:$0xff]
    %v2034 = vld [vmem:[#allocation2 + $0x1d0] sm:$0xff]
    %v2035 = vld [vmem:[#allocation2 + $0x1d8] sm:$0xff]
    %v2036 = vld [vmem:[#allocation2 + $0x1e0] sm:$0xff]
    %v2037 = vld [vmem:[#allocation2 + $0x1e8] sm:$0xff]
    %v2038 = vld [vmem:[#allocation2 + $0x1f0] sm:$0xff]
    %v2039 = vld [vmem:[#allocation2 + $0x1f8] sm:$0xff]
    %v2040 = vld [vmem:[#allocation2 + $0x200] sm:$0xff]
    %v2041 = vld [vmem:[#allocation2 + $0x208] sm:$0xff]
    %v2042 = vld [vmem:[#allocation2 + $0x210] sm:$0xff]
    %v2043 = vld [vmem:[#allocation2 + $0x218] sm:$0xff]
    %v2044 = vld [vmem:[#allocation2 + $0x220] sm:$0xff]
    %v2045 = vld [vmem:[#allocation2 + $0x228] sm:$0xff]
    %v2046 = vld [vmem:[#allocation2 + $0x230] sm:$0xff]
    %v2047 = vld [vmem:[#allocation2 + $0x238] sm:$0xff]
    %v2048 = vld [vmem:[#allocation2 + $0x240] sm:$0xff]
    %v2049 = vld [vmem:[#allocation2 + $0x248] sm:$0xff]
    %v2050 = vld [vmem:[#allocation2 + $0x250] sm:$0xff]
    %v2051 = vld [vmem:[#allocation2 + $0x258] sm:$0xff]
    %v2052 = vld [vmem:[#allocation2 + $0x260] sm:$0xff]
    %v2053 = vld [vmem:[#allocation2 + $0x268] sm:$0xff]
    %v2054 = vld [vmem:[#allocation2 + $0x270] sm:$0xff]
    %v2055 = vld [vmem:[#allocation2 + $0x278] sm:$0xff]
    %v2056 = vld [vmem:[%s4] sm:$0xff]
    %v2057 = vld [vmem:[%s4 + $0x8] sm:$0xff]
    %v2058 = vld [vmem:[%s4 + $0x10] sm:$0xff]
    %v2059 = vld [vmem:[%s4 + $0x18] sm:$0xff]
    %v2060 = vld [vmem:[%s4 + $0x20] sm:$0xff]
    %v2061 = vld [vmem:[%s4 + $0x28] sm:$0xff]
    %v2062 = vld [vmem:[%s4 + $0x30] sm:$0xff]
    %v2063 = vld [vmem:[%s4 + $0x38] sm:$0xff]
    %v2064 = vld [vmem:[%s4 + $0x40] sm:$0xff]
    %v2065 = vld [vmem:[%s4 + $0x48] sm:$0xff]
    %v2066 = vld [vmem:[%s4 + $0x50] sm:$0xff]
    %v2067 = vld [vmem:[%s4 + $0x58] sm:$0xff]
    %v2068 = vld [vmem:[%s4 + $0x60] sm:$0xff]
    %v2069 = vld [vmem:[%s4 + $0x68] sm:$0xff]
    %v2070 = vld [vmem:[%s4 + $0x70] sm:$0xff]
    %v2071 = vld [vmem:[%s4 + $0x78] sm:$0xff]
    %v2072 = vld [vmem:[%s4 + $0x80] sm:$0xff]
    %v2073 = vld [vmem:[%s4 + $0x88] sm:$0xff]
    %v2074 = vld [vmem:[%s4 + $0x90] sm:$0xff]
    %v2075 = vld [vmem:[%s4 + $0x98] sm:$0xff]
    %v2076 = vld [vmem:[%s4 + $0xa0] sm:$0xff]
    %v2077 = vld [vmem:[%s4 + $0xa8] sm:$0xff]
    %v2078 = vld [vmem:[%s4 + $0xb0] sm:$0xff]
    %v2079 = vld [vmem:[%s4 + $0xb8] sm:$0xff]
    %v2080 = vld [vmem:[%s4 + $0xc0] sm:$0xff]
    %v2081 = vld [vmem:[%s4 + $0xc8] sm:$0xff]
    %v2082 = vld [vmem:[%s4 + $0xd0] sm:$0xff]
    %v2083 = vld [vmem:[%s4 + $0xd8] sm:$0xff]
    %v2084 = vld [vmem:[%s4 + $0xe0] sm:$0xff]
    %v2085 = vld [vmem:[%s4 + $0xe8] sm:$0xff]
    %v2086 = vld [vmem:[%s4 + $0xf0] sm:$0xff]
    %v2087 = vld [vmem:[%s4 + $0xf8] sm:$0xff]
    %v2088 = vld [vmem:[%s4 + $0x100] sm:$0xff]
    %v2089 = vld [vmem:[%s4 + $0x108] sm:$0xff]
    %v2090 = vld [vmem:[%s4 + $0x110] sm:$0xff]
    %v2091 = vld [vmem:[%s4 + $0x118] sm:$0xff]
    %v2092 = vld [vmem:[%s4 + $0x120] sm:$0xff]
    %v2093 = vld [vmem:[%s4 + $0x128] sm:$0xff]
    %v2094 = vld [vmem:[%s4 + $0x130] sm:$0xff]
    %v2095 = vld [vmem:[%s4 + $0x138] sm:$0xff]
    %v2096 = vld [vmem:[%s4 + $0x140] sm:$0xff]
    %v2097 = vld [vmem:[%s4 + $0x148] sm:$0xff]
    %v2098 = vld [vmem:[%s4 + $0x150] sm:$0xff]
    %v2099 = vld [vmem:[%s4 + $0x158] sm:$0xff]
    %v2100 = vld [vmem:[%s4 + $0x160] sm:$0xff]
    %v2101 = vld [vmem:[%s4 + $0x168] sm:$0xff]
    %v2102 = vld [vmem:[%s4 + $0x170] sm:$0xff]
    %v2103 = vld [vmem:[%s4 + $0x178] sm:$0xff]
    %v2104 = vld [vmem:[%s4 + $0x180] sm:$0xff]
    %v2105 = vld [vmem:[%s4 + $0x188] sm:$0xff]
    %v2106 = vld [vmem:[%s4 + $0x190] sm:$0xff]
    %v2107 = vld [vmem:[%s4 + $0x198] sm:$0xff]
    %v2108 = vld [vmem:[%s4 + $0x1a0] sm:$0xff]
    %v2109 = vld [vmem:[%s4 + $0x1a8] sm:$0xff]
    %v2110 = vld [vmem:[%s4 + $0x1b0] sm:$0xff]
    %v2111 = vld [vmem:[%s4 + $0x1b8] sm:$0xff]
    %v2112 = vld [vmem:[%s4 + $0x1c0] sm:$0xff]
    %v2113 = vld [vmem:[%s4 + $0x1c8] sm:$0xff]
    %v2114 = vld [vmem:[%s4 + $0x1d0] sm:$0xff]
    %v2115 = vld [vmem:[%s4 + $0x1d8] sm:$0xff]
    %v2116 = vld [vmem:[%s4 + $0x1e0] sm:$0xff]
    %v2117 = vld [vmem:[%s4 + $0x1e8] sm:$0xff]
    %v2118 = vld [vmem:[%s4 + $0x1f0] sm:$0xff]
    %v2119 = vld [vmem:[%s4 + $0x1f8] sm:$0xff]
    %v2120 = vld [vmem:[%s4 + $0x200] sm:$0xff]
    %v2121 = vld [vmem:[%s4 + $0x208] sm:$0xff]
    %v2122 = vld [vmem:[%s4 + $0x210] sm:$0xff]
    %v2123 = vld [vmem:[%s4 + $0x218] sm:$0xff]
    %v2124 = vld [vmem:[%s4 + $0x220] sm:$0xff]
    %v2125 = vld [vmem:[%s4 + $0x228] sm:$0xff]
    %v2126 = vld [vmem:[%s4 + $0x230] sm:$0xff]
    %v2127 = vld [vmem:[%s4 + $0x238] sm:$0xff]
    %v2129 = vsel %vm43, %v1980, 0
    %v2132 = vsel %vm43, %v1985, 0
    %v2135 = vsel %vm43, %v1990, 0
    %v2138 = vsel %vm43, %v1995, 0
    %v2141 = vsel %vm43, %v2000, 0
    %v2144 = vsel %vm43, %v2005, 0
    %v2147 = vsel %vm43, %v2010, 0
    %v2150 = vsel %vm43, %v2015, 0
    %v2153 = vsel %vm43, %v2020, 0
    %v2156 = vsel %vm43, %v2025, 0
    %v2159 = vsel %vm43, %v2030, 0
    %v2162 = vsel %vm43, %v2035, 0
    %v2165 = vsel %vm43, %v2040, 0
    %v2168 = vsel %vm43, %v2045, 0
    %v2171 = vsel %vm43, %v2050, 0
    %v2174 = vsel %vm43, %v2055, 0
    %2176 = vmatprep.subr.mxu0 0.0
    %2177 = vmatpush1.msra.mxu0 %v2071
    %2178 = vmatprep.subr.mxu0 0.0
    %2179 = vmatpush1.msra.mxu0 %v2070
    %2180 = vmatprep.subr.mxu0 0.0
    %2181 = vmatpush1.msra.mxu0 %v2069
    %2182 = vmatprep.subr.mxu0 0.0
    %2183 = vmatpush1.msra.mxu0 %v2068
    %2184 = vmatprep.subr.mxu0 0.0
    %2185 = vmatpush1.msra.mxu0 %v2067
    %2186 = vmatprep.subr.mxu0 0.0
    %2187 = vmatpush1.msra.mxu0 %v2066
    %2188 = vmatprep.subr.mxu0 0.0
    %2189 = vmatpush1.msra.mxu0 %v2065
    %2190 = vmatprep.subr.mxu0 0.0
    %2191 = vmatpush1.msra.mxu0 %v2064
    %2192 = vmatprep.subr.mxu0 0.0
    %2193 = vmatpush1.msra.mxu0 %v2063
    %2194 = vmatprep.subr.mxu0 0.0
    %2195 = vmatpush1.msra.mxu0 %v2062
    %2196 = vmatprep.subr.mxu0 0.0
    %2197 = vmatpush1.msra.mxu0 %v2061
    %2198 = vmatprep.subr.mxu0 0.0
    %2199 = vmatpush1.msra.mxu0 %v2060
    %2200 = vmatprep.subr.mxu0 0.0
    %2201 = vmatpush1.msra.mxu0 %v2059
    %2202 = vmatprep.subr.mxu0 0.0
    %2203 = vmatpush1.msra.mxu0 %v2058
    %2204 = vmatprep.subr.mxu0 0.0
    %2205 = vmatpush1.msra.mxu0 %v2057
    %2206 = vmatprep.subr.mxu0 0.0
    %2207 = vmatpush1.msra.mxu0 %v2056
    %2208 = vmatprep.subr.mxu0 0.0
    %2209 = vmatpush2.msra.mxu0 %v2087
    %2210 = vmatprep.subr.mxu0 0.0
    %2211 = vmatpush2.msra.mxu0 %v2086
    %2212 = vmatprep.subr.mxu0 0.0
    %2213 = vmatpush2.msra.mxu0 %v2085
    %2214 = vmatprep.subr.mxu0 0.0
    %2215 = vmatpush2.msra.mxu0 %v2084
    %2216 = vmatprep.subr.mxu0 0.0
    %2217 = vmatpush2.msra.mxu0 %v2083
    %2218 = vmatprep.subr.mxu0 0.0
    %2219 = vmatpush2.msra.mxu0 %v2082
    %2220 = vmatprep.subr.mxu0 0.0
    %2221 = vmatpush2.msra.mxu0 %v2081
    %2222 = vmatprep.subr.mxu0 0.0
    %2223 = vmatpush2.msra.mxu0 %v2080
    %2224 = vmatprep.subr.mxu0 0.0
    %2225 = vmatpush2.msra.mxu0 %v2079
    %2226 = vmatprep.subr.mxu0 0.0
    %2227 = vmatpush2.msra.mxu0 %v2078
    %2228 = vmatprep.subr.mxu0 0.0
    %2229 = vmatpush2.msra.mxu0 %v2077
    %2230 = vmatprep.subr.mxu0 0.0
    %2231 = vmatpush2.msra.mxu0 %v2076
    %2232 = vmatprep.subr.mxu0 0.0
    %2233 = vmatpush2.msra.mxu0 %v2075
    %2234 = vmatprep.subr.mxu0 0.0
    %2235 = vmatpush2.msra.mxu0 %v2074
    %2236 = vmatprep.subr.mxu0 0.0
    %2237 = vmatpush2.msra.mxu0 %v2073
    %2238 = vmatprep.subr.mxu0 0.0
    %2239 = vmatpush2.msra.mxu0 %v2072
    %2240 = vmatprep.mubr.f32.mxu0 %v1977
    %2241 = vmatmul.mubr.f32.gmra.mxu0 %v1976
    %v2242 = vpop.f32.mrf.mxu0
    %v2243 = vadd.f32 0.0, %v2242
    %v2244 = vpop.f32.mrf.mxu0
    %2245 = vmatprep.mubr.f32.mxu0 %v1982
    %2246 = vmatmul.mubr.f32.gmra.mxu0 %v1981
    %v2247 = vpop.f32.mrf.mxu0
    %v2248 = vadd.f32 0.0, %v2247
    %v2249 = vpop.f32.mrf.mxu0
    %2250 = vmatprep.mubr.f32.mxu0 %v1987
    %2251 = vmatmul.mubr.f32.gmra.mxu0 %v1986
    %v2252 = vpop.f32.mrf.mxu0
    %v2253 = vadd.f32 0.0, %v2252
    %v2254 = vpop.f32.mrf.mxu0
    %2255 = vmatprep.mubr.f32.mxu0 %v1992
    %2256 = vmatmul.mubr.f32.gmra.mxu0 %v1991
    %v2257 = vpop.f32.mrf.mxu0
    %v2258 = vadd.f32 0.0, %v2257
    %v2259 = vpop.f32.mrf.mxu0
    %2260 = vmatprep.mubr.f32.mxu0 %v1997
    %2261 = vmatmul.mubr.f32.gmra.mxu0 %v1996
    %v2262 = vpop.f32.mrf.mxu0
    %v2263 = vadd.f32 0.0, %v2262
    %v2264 = vpop.f32.mrf.mxu0
    %2265 = vmatprep.mubr.f32.mxu0 %v2002
    %2266 = vmatmul.mubr.f32.gmra.mxu0 %v2001
    %v2267 = vpop.f32.mrf.mxu0
    %v2268 = vadd.f32 0.0, %v2267
    %v2269 = vpop.f32.mrf.mxu0
    %2270 = vmatprep.mubr.f32.mxu0 %v2007
    %2271 = vmatmul.mubr.f32.gmra.mxu0 %v2006
    %v2272 = vpop.f32.mrf.mxu0
    %v2273 = vadd.f32 0.0, %v2272
    %v2274 = vpop.f32.mrf.mxu0
    %2275 = vmatprep.mubr.f32.mxu0 %v2012
    %2276 = vmatmul.mubr.f32.gmra.mxu0 %v2011
    %v2277 = vpop.f32.mrf.mxu0
    %v2278 = vadd.f32 0.0, %v2277
    %v2279 = vpop.f32.mrf.mxu0
    %2280 = vmatprep.mubr.f32.mxu0 %v2017
    %2281 = vmatmul.mubr.f32.gmra.mxu0 %v2016
    %v2282 = vpop.f32.mrf.mxu0
    %v2283 = vadd.f32 0.0, %v2282
    %v2284 = vpop.f32.mrf.mxu0
    %2285 = vmatprep.mubr.f32.mxu0 %v2022
    %2286 = vmatmul.mubr.f32.gmra.mxu0 %v2021
    %v2287 = vpop.f32.mrf.mxu0
    %v2288 = vadd.f32 0.0, %v2287
    %v2289 = vpop.f32.mrf.mxu0
    %2290 = vmatprep.mubr.f32.mxu0 %v2027
    %2291 = vmatmul.mubr.f32.gmra.mxu0 %v2026
    %v2292 = vpop.f32.mrf.mxu0
    %v2293 = vadd.f32 0.0, %v2292
    %v2294 = vpop.f32.mrf.mxu0
    %2295 = vmatprep.mubr.f32.mxu0 %v2032
    %2296 = vmatmul.mubr.f32.gmra.mxu0 %v2031
    %v2297 = vpop.f32.mrf.mxu0
    %v2298 = vadd.f32 0.0, %v2297
    %v2299 = vpop.f32.mrf.mxu0
    %2300 = vmatprep.mubr.f32.mxu0 %v2037
    %2301 = vmatmul.mubr.f32.gmra.mxu0 %v2036
    %v2302 = vpop.f32.mrf.mxu0
    %v2303 = vadd.f32 0.0, %v2302
    %v2304 = vpop.f32.mrf.mxu0
    %2305 = vmatprep.mubr.f32.mxu0 %v2042
    %2306 = vmatmul.mubr.f32.gmra.mxu0 %v2041
    %v2307 = vpop.f32.mrf.mxu0
    %v2308 = vadd.f32 0.0, %v2307
    %v2309 = vpop.f32.mrf.mxu0
    %2310 = vmatprep.mubr.f32.mxu0 %v2047
    %2311 = vmatmul.mubr.f32.gmra.mxu0 %v2046
    %v2312 = vpop.f32.mrf.mxu0
    %v2313 = vadd.f32 0.0, %v2312
    %v2314 = vpop.f32.mrf.mxu0
    %2315 = vmatprep.mubr.f32.mxu0 %v2052
    %2316 = vmatmul.mubr.f32.gmra.mxu0 %v2051
    %v2317 = vpop.f32.mrf.mxu0
    %v2318 = vadd.f32 0.0, %v2317
    %v2319 = vpop.f32.mrf.mxu0
    %2320 = vdwg.mxu0
    %2321 = vmatprep.subr.mxu0 0.0
    %2322 = vmatpush1.msra.mxu0 %v2103
    %2323 = vmatprep.subr.mxu0 0.0
    %2324 = vmatpush1.msra.mxu0 %v2102
    %2325 = vmatprep.subr.mxu0 0.0
    %2326 = vmatpush1.msra.mxu0 %v2101
    %2327 = vmatprep.subr.mxu0 0.0
    %2328 = vmatpush1.msra.mxu0 %v2100
    %2329 = vmatprep.subr.mxu0 0.0
    %2330 = vmatpush1.msra.mxu0 %v2099
    %2331 = vmatprep.subr.mxu0 0.0
    %2332 = vmatpush1.msra.mxu0 %v2098
    %2333 = vmatprep.subr.mxu0 0.0
    %2334 = vmatpush1.msra.mxu0 %v2097
    %2335 = vmatprep.subr.mxu0 0.0
    %2336 = vmatpush1.msra.mxu0 %v2096
    %2337 = vmatprep.subr.mxu0 0.0
    %2338 = vmatpush1.msra.mxu0 %v2095
    %2339 = vmatprep.subr.mxu0 0.0
    %2340 = vmatpush1.msra.mxu0 %v2094
    %2341 = vmatprep.subr.mxu0 0.0
    %2342 = vmatpush1.msra.mxu0 %v2093
    %2343 = vmatprep.subr.mxu0 0.0
    %2344 = vmatpush1.msra.mxu0 %v2092
    %2345 = vmatprep.subr.mxu0 0.0
    %2346 = vmatpush1.msra.mxu0 %v2091
    %2347 = vmatprep.subr.mxu0 0.0
    %2348 = vmatpush1.msra.mxu0 %v2090
    %2349 = vmatprep.subr.mxu0 0.0
    %2350 = vmatpush1.msra.mxu0 %v2089
    %2351 = vmatprep.subr.mxu0 0.0
    %2352 = vmatpush1.msra.mxu0 %v2088
    %2353 = vmatprep.subr.mxu0 0.0
    %2354 = vmatpush2.msra.mxu0 %v2119
    %2355 = vmatprep.subr.mxu0 0.0
    %2356 = vmatpush2.msra.mxu0 %v2118
    %2357 = vmatprep.subr.mxu0 0.0
    %2358 = vmatpush2.msra.mxu0 %v2117
    %2359 = vmatprep.subr.mxu0 0.0
    %2360 = vmatpush2.msra.mxu0 %v2116
    %2361 = vmatprep.subr.mxu0 0.0
    %2362 = vmatpush2.msra.mxu0 %v2115
    %2363 = vmatprep.subr.mxu0 0.0
    %2364 = vmatpush2.msra.mxu0 %v2114
    %2365 = vmatprep.subr.mxu0 0.0
    %2366 = vmatpush2.msra.mxu0 %v2113
    %2367 = vmatprep.subr.mxu0 0.0
    %2368 = vmatpush2.msra.mxu0 %v2112
    %2369 = vmatprep.subr.mxu0 0.0
    %2370 = vmatpush2.msra.mxu0 %v2111
    %2371 = vmatprep.subr.mxu0 0.0
    %2372 = vmatpush2.msra.mxu0 %v2110
    %2373 = vmatprep.subr.mxu0 0.0
    %2374 = vmatpush2.msra.mxu0 %v2109
    %2375 = vmatprep.subr.mxu0 0.0
    %2376 = vmatpush2.msra.mxu0 %v2108
    %2377 = vmatprep.subr.mxu0 0.0
    %2378 = vmatpush2.msra.mxu0 %v2107
    %2379 = vmatprep.subr.mxu0 0.0
    %2380 = vmatpush2.msra.mxu0 %v2106
    %2381 = vmatprep.subr.mxu0 0.0
    %2382 = vmatpush2.msra.mxu0 %v2105
    %2383 = vmatprep.subr.mxu0 0.0
    %2384 = vmatpush2.msra.mxu0 %v2104
    %2385 = vmatprep.mubr.f32.mxu0 %v1979
    %2386 = vmatmul.mubr.f32.gmra.mxu0 %v1978
    %v2387 = vpop.f32.mrf.mxu0
    %v2388 = vadd.f32 %v2243, %v2387
    %v2389 = vpop.f32.mrf.mxu0
    %2390 = vmatprep.mubr.f32.mxu0 %v1984
    %2391 = vmatmul.mubr.f32.gmra.mxu0 %v1983
    %v2392 = vpop.f32.mrf.mxu0
    %v2393 = vadd.f32 %v2248, %v2392
    %v2394 = vpop.f32.mrf.mxu0
    %2395 = vmatprep.mubr.f32.mxu0 %v1989
    %2396 = vmatmul.mubr.f32.gmra.mxu0 %v1988
    %v2397 = vpop.f32.mrf.mxu0
    %v2398 = vadd.f32 %v2253, %v2397
    %v2399 = vpop.f32.mrf.mxu0
    %2400 = vmatprep.mubr.f32.mxu0 %v1994
    %2401 = vmatmul.mubr.f32.gmra.mxu0 %v1993
    %v2402 = vpop.f32.mrf.mxu0
    %v2403 = vadd.f32 %v2258, %v2402
    %v2404 = vpop.f32.mrf.mxu0
    %2405 = vmatprep.mubr.f32.mxu0 %v1999
    %2406 = vmatmul.mubr.f32.gmra.mxu0 %v1998
    %v2407 = vpop.f32.mrf.mxu0
    %v2408 = vadd.f32 %v2263, %v2407
    %v2409 = vpop.f32.mrf.mxu0
    %2410 = vmatprep.mubr.f32.mxu0 %v2004
    %2411 = vmatmul.mubr.f32.gmra.mxu0 %v2003
    %v2412 = vpop.f32.mrf.mxu0
    %v2413 = vadd.f32 %v2268, %v2412
    %v2414 = vpop.f32.mrf.mxu0
    %2415 = vmatprep.mubr.f32.mxu0 %v2009
    %2416 = vmatmul.mubr.f32.gmra.mxu0 %v2008
    %v2417 = vpop.f32.mrf.mxu0
    %v2418 = vadd.f32 %v2273, %v2417
    %v2419 = vpop.f32.mrf.mxu0
    %2420 = vmatprep.mubr.f32.mxu0 %v2014
    %2421 = vmatmul.mubr.f32.gmra.mxu0 %v2013
    %v2422 = vpop.f32.mrf.mxu0
    %v2423 = vadd.f32 %v2278, %v2422
    %v2424 = vpop.f32.mrf.mxu0
    %2425 = vmatprep.mubr.f32.mxu0 %v2019
    %2426 = vmatmul.mubr.f32.gmra.mxu0 %v2018
    %v2427 = vpop.f32.mrf.mxu0
    %v2428 = vadd.f32 %v2283, %v2427
    %v2429 = vpop.f32.mrf.mxu0
    %2430 = vmatprep.mubr.f32.mxu0 %v2024
    %2431 = vmatmul.mubr.f32.gmra.mxu0 %v2023
    %v2432 = vpop.f32.mrf.mxu0
    %v2433 = vadd.f32 %v2288, %v2432
    %v2434 = vpop.f32.mrf.mxu0
    %2435 = vmatprep.mubr.f32.mxu0 %v2029
    %2436 = vmatmul.mubr.f32.gmra.mxu0 %v2028
    %v2437 = vpop.f32.mrf.mxu0
    %v2438 = vadd.f32 %v2293, %v2437
    %v2439 = vpop.f32.mrf.mxu0
    %2440 = vmatprep.mubr.f32.mxu0 %v2034
    %2441 = vmatmul.mubr.f32.gmra.mxu0 %v2033
    %v2442 = vpop.f32.mrf.mxu0
    %v2443 = vadd.f32 %v2298, %v2442
    %v2444 = vpop.f32.mrf.mxu0
    %2445 = vmatprep.mubr.f32.mxu0 %v2039
    %2446 = vmatmul.mubr.f32.gmra.mxu0 %v2038
    %v2447 = vpop.f32.mrf.mxu0
    %v2448 = vadd.f32 %v2303, %v2447
    %v2449 = vpop.f32.mrf.mxu0
    %2450 = vmatprep.mubr.f32.mxu0 %v2044
    %2451 = vmatmul.mubr.f32.gmra.mxu0 %v2043
    %v2452 = vpop.f32.mrf.mxu0
    %v2453 = vadd.f32 %v2308, %v2452
    %v2454 = vpop.f32.mrf.mxu0
    %2455 = vmatprep.mubr.f32.mxu0 %v2049
    %2456 = vmatmul.mubr.f32.gmra.mxu0 %v2048
    %v2457 = vpop.f32.mrf.mxu0
    %v2458 = vadd.f32 %v2313, %v2457
    %v2459 = vpop.f32.mrf.mxu0
    %2460 = vmatprep.mubr.f32.mxu0 %v2054
    %2461 = vmatmul.mubr.f32.gmra.mxu0 %v2053
    %v2462 = vpop.f32.mrf.mxu0
    %v2463 = vadd.f32 %v2318, %v2462
    %v2464 = vpop.f32.mrf.mxu0
    %2465 = vdwg.mxu0
    %2466 = vmatprep.subr.mxu0 0.0
    %2467 = vmatpush1.msra.mxu0 0.0
    %2468 = vmatprep.subr.mxu0 0.0
    %2469 = vmatpush1.msra.mxu0 0.0
    %2470 = vmatprep.subr.mxu0 0.0
    %2471 = vmatpush1.msra.mxu0 0.0
    %2472 = vmatprep.subr.mxu0 0.0
    %2473 = vmatpush1.msra.mxu0 0.0
    %2474 = vmatprep.subr.mxu0 0.0
    %2475 = vmatpush1.msra.mxu0 0.0
    %2476 = vmatprep.subr.mxu0 0.0
    %2477 = vmatpush1.msra.mxu0 0.0
    %2478 = vmatprep.subr.mxu0 0.0
    %2479 = vmatpush1.msra.mxu0 0.0
    %2480 = vmatprep.subr.mxu0 0.0
    %2481 = vmatpush1.msra.mxu0 0.0
    %2482 = vmatprep.subr.mxu0 0.0
    %2483 = vmatpush1.msra.mxu0 %v2127
    %2484 = vmatprep.subr.mxu0 0.0
    %2485 = vmatpush1.msra.mxu0 %v2126
    %2486 = vmatprep.subr.mxu0 0.0
    %2487 = vmatpush1.msra.mxu0 %v2125
    %2488 = vmatprep.subr.mxu0 0.0
    %2489 = vmatpush1.msra.mxu0 %v2124
    %2490 = vmatprep.subr.mxu0 0.0
    %2491 = vmatpush1.msra.mxu0 %v2123
    %2492 = vmatprep.subr.mxu0 0.0
    %2493 = vmatpush1.msra.mxu0 %v2122
    %2494 = vmatprep.subr.mxu0 0.0
    %2495 = vmatpush1.msra.mxu0 %v2121
    %2496 = vmatprep.subr.mxu0 0.0
    %2497 = vmatpush1.msra.mxu0 %v2120
    %2498 = vmatprep.subr.mxu0 0.0
    %2499 = vmatpush2.msra.mxu0 0.0
    %2500 = vmatprep.subr.mxu0 0.0
    %2501 = vmatpush2.msra.mxu0 0.0
    %2502 = vmatprep.subr.mxu0 0.0
    %2503 = vmatpush2.msra.mxu0 0.0
    %2504 = vmatprep.subr.mxu0 0.0
    %2505 = vmatpush2.msra.mxu0 0.0
    %2506 = vmatprep.subr.mxu0 0.0
    %2507 = vmatpush2.msra.mxu0 0.0
    %2508 = vmatprep.subr.mxu0 0.0
    %2509 = vmatpush2.msra.mxu0 0.0
    %2510 = vmatprep.subr.mxu0 0.0
    %2511 = vmatpush2.msra.mxu0 0.0
    %2512 = vmatprep.subr.mxu0 0.0
    %2513 = vmatpush2.msra.mxu0 0.0
    %2514 = vmatprep.subr.mxu0 0.0
    %2515 = vmatpush2.msra.mxu0 0.0
    %2516 = vmatprep.subr.mxu0 0.0
    %2517 = vmatpush2.msra.mxu0 0.0
    %2518 = vmatprep.subr.mxu0 0.0
    %2519 = vmatpush2.msra.mxu0 0.0
    %2520 = vmatprep.subr.mxu0 0.0
    %2521 = vmatpush2.msra.mxu0 0.0
    %2522 = vmatprep.subr.mxu0 0.0
    %2523 = vmatpush2.msra.mxu0 0.0
    %2524 = vmatprep.subr.mxu0 0.0
    %2525 = vmatpush2.msra.mxu0 0.0
    %2526 = vmatprep.subr.mxu0 0.0
    %2527 = vmatpush2.msra.mxu0 0.0
    %2528 = vmatprep.subr.mxu0 0.0
    %2529 = vmatpush2.msra.mxu0 0.0
    %2530 = vmatprep.mubr.f32.mxu0 0.0
    %2531 = vmatmul.mubr.f32.gmra.mxu0 %v2129
    %v2532 = vpop.f32.mrf.mxu0
    %v2533 = vadd.f32 %v2388, %v2532
    %v2534 = vpop.f32.mrf.mxu0
    %2535 = vmatprep.mubr.f32.mxu0 0.0
    %2536 = vmatmul.mubr.f32.gmra.mxu0 %v2132
    %v2537 = vpop.f32.mrf.mxu0
    %v2538 = vadd.f32 %v2393, %v2537
    %v2539 = vpop.f32.mrf.mxu0
    %2540 = vmatprep.mubr.f32.mxu0 0.0
    %2541 = vmatmul.mubr.f32.gmra.mxu0 %v2135
    %v2542 = vpop.f32.mrf.mxu0
    %v2543 = vadd.f32 %v2398, %v2542
    %v2544 = vpop.f32.mrf.mxu0
    %2545 = vmatprep.mubr.f32.mxu0 0.0
    %2546 = vmatmul.mubr.f32.gmra.mxu0 %v2138
    %v2547 = vpop.f32.mrf.mxu0
    %v2548 = vadd.f32 %v2403, %v2547
    %v2549 = vpop.f32.mrf.mxu0
    %2550 = vmatprep.mubr.f32.mxu0 0.0
    %2551 = vmatmul.mubr.f32.gmra.mxu0 %v2141
    %v2552 = vpop.f32.mrf.mxu0
    %v2553 = vadd.f32 %v2408, %v2552
    %v2554 = vpop.f32.mrf.mxu0
    %2555 = vmatprep.mubr.f32.mxu0 0.0
    %2556 = vmatmul.mubr.f32.gmra.mxu0 %v2144
    %v2557 = vpop.f32.mrf.mxu0
    %v2558 = vadd.f32 %v2413, %v2557
    %v2559 = vpop.f32.mrf.mxu0
    %2560 = vmatprep.mubr.f32.mxu0 0.0
    %2561 = vmatmul.mubr.f32.gmra.mxu0 %v2147
    %v2562 = vpop.f32.mrf.mxu0
    %v2563 = vadd.f32 %v2418, %v2562
    %v2564 = vpop.f32.mrf.mxu0
    %2565 = vmatprep.mubr.f32.mxu0 0.0
    %2566 = vmatmul.mubr.f32.gmra.mxu0 %v2150
    %v2567 = vpop.f32.mrf.mxu0
    %v2568 = vadd.f32 %v2423, %v2567
    %v2569 = vpop.f32.mrf.mxu0
    %2570 = vmatprep.mubr.f32.mxu0 0.0
    %2571 = vmatmul.mubr.f32.gmra.mxu0 %v2153
    %v2572 = vpop.f32.mrf.mxu0
    %v2573 = vadd.f32 %v2428, %v2572
    %v2574 = vpop.f32.mrf.mxu0
    %2575 = vmatprep.mubr.f32.mxu0 0.0
    %2576 = vmatmul.mubr.f32.gmra.mxu0 %v2156
    %v2577 = vpop.f32.mrf.mxu0
    %v2578 = vadd.f32 %v2433, %v2577
    %v2579 = vpop.f32.mrf.mxu0
    %2580 = vmatprep.mubr.f32.mxu0 0.0
    %2581 = vmatmul.mubr.f32.gmra.mxu0 %v2159
    %v2582 = vpop.f32.mrf.mxu0
    %v2583 = vadd.f32 %v2438, %v2582
    %v2584 = vpop.f32.mrf.mxu0
    %2585 = vmatprep.mubr.f32.mxu0 0.0
    %2586 = vmatmul.mubr.f32.gmra.mxu0 %v2162
    %v2587 = vpop.f32.mrf.mxu0
    %v2588 = vadd.f32 %v2443, %v2587
    %v2589 = vpop.f32.mrf.mxu0
    %2590 = vmatprep.mubr.f32.mxu0 0.0
    %2591 = vmatmul.mubr.f32.gmra.mxu0 %v2165
    %v2592 = vpop.f32.mrf.mxu0
    %v2593 = vadd.f32 %v2448, %v2592
    %v2594 = vpop.f32.mrf.mxu0
    %2595 = vmatprep.mubr.f32.mxu0 0.0
    %2596 = vmatmul.mubr.f32.gmra.mxu0 %v2168
    %v2597 = vpop.f32.mrf.mxu0
    %v2598 = vadd.f32 %v2453, %v2597
    %v2599 = vpop.f32.mrf.mxu0
    %2600 = vmatprep.mubr.f32.mxu0 0.0
    %2601 = vmatmul.mubr.f32.gmra.mxu0 %v2171
    %v2602 = vpop.f32.mrf.mxu0
    %v2603 = vadd.f32 %v2458, %v2602
    %v2604 = vpop.f32.mrf.mxu0
    %2605 = vmatprep.mubr.f32.mxu0 0.0
    %2606 = vmatmul.mubr.f32.gmra.mxu0 %v2174
    %v2607 = vpop.f32.mrf.mxu0
    %v2608 = vadd.f32 %v2463, %v2607
    %v2609 = vpop.f32.mrf.mxu0
    %2610 = vdwg.mxu0
    %v2611 = vld [vmem:[%s5] sm:$0x1]
    %v2612 = vld [vmem:[%s6] sm:$0x1]
    %v2613 = vsel %vm43, %v2533, 0.0
    %v2614 = vsel %vm43, %v2538, 0.0
    %v2615 = vadd.f32 %v2613, %v2614
    %v2616 = vsel %vm43, %v2543, 0.0
    %v2617 = vadd.f32 %v2615, %v2616
    %v2618 = vsel %vm43, %v2548, 0.0
    %v2619 = vadd.f32 %v2617, %v2618
    %v2620 = vsel %vm43, %v2553, 0.0
    %v2621 = vadd.f32 %v2619, %v2620
    %v2622 = vsel %vm43, %v2558, 0.0
    %v2623 = vadd.f32 %v2621, %v2622
    %v2624 = vsel %vm43, %v2563, 0.0
    %v2625 = vadd.f32 %v2623, %v2624
    %v2626 = vsel %vm43, %v2568, 0.0
    %v2627 = vadd.f32 %v2625, %v2626
    %v2628 = vsel %vm43, %v2573, 0.0
    %v2629 = vadd.f32 %v2627, %v2628
    %v2630 = vsel %vm43, %v2578, 0.0
    %v2631 = vadd.f32 %v2629, %v2630
    %v2632 = vsel %vm43, %v2583, 0.0
    %v2633 = vadd.f32 %v2631, %v2632
    %v2634 = vsel %vm43, %v2588, 0.0
    %v2635 = vadd.f32 %v2633, %v2634
    %v2636 = vsel %vm43, %v2593, 0.0
    %v2637 = vadd.f32 %v2635, %v2636
    %v2638 = vsel %vm43, %v2598, 0.0
    %v2639 = vadd.f32 %v2637, %v2638
    %v2640 = vsel %vm43, %v2603, 0.0
    %v2641 = vadd.f32 %v2639, %v2640
    %v2642 = vsel %vm43, %v2608, 0.0
    %v2643 = vadd.f32 %v2641, %v2642
    %v2644 = vrot.slane %v2643, 4
    %v2645 = vadd.f32 %v2643, %v2644
    %v2646 = vrot.slane %v2645, 2
    %v2647 = vadd.f32 %v2645, %v2646
    %v2648 = vrot.slane %v2647, 1
    %v2649 = vadd.f32 %v2647, %v2648
    %v2650 = vmul.f32 %v2533, %v2533
    %v2651 = vmul.f32 %v2538, %v2538
    %v2652 = vmul.f32 %v2543, %v2543
    %v2653 = vmul.f32 %v2548, %v2548
    %v2654 = vmul.f32 %v2553, %v2553
    %v2655 = vmul.f32 %v2558, %v2558
    %v2656 = vmul.f32 %v2563, %v2563
    %v2657 = vmul.f32 %v2568, %v2568
    %v2658 = vmul.f32 %v2573, %v2573
    %v2659 = vmul.f32 %v2578, %v2578
    %v2660 = vmul.f32 %v2583, %v2583
    %v2661 = vmul.f32 %v2588, %v2588
    %v2662 = vmul.f32 %v2593, %v2593
    %v2663 = vmul.f32 %v2598, %v2598
    %v2664 = vmul.f32 %v2603, %v2603
    %v2665 = vmul.f32 %v2608, %v2608
    %v2666 = vsel %vm43, %v2650, 0.0
    %v2667 = vsel %vm43, %v2651, 0.0
    %v2668 = vadd.f32 %v2666, %v2667
    %v2669 = vsel %vm43, %v2652, 0.0
    %v2670 = vadd.f32 %v2668, %v2669
    %v2671 = vsel %vm43, %v2653, 0.0
    %v2672 = vadd.f32 %v2670, %v2671
    %v2673 = vsel %vm43, %v2654, 0.0
    %v2674 = vadd.f32 %v2672, %v2673
    %v2675 = vsel %vm43, %v2655, 0.0
    %v2676 = vadd.f32 %v2674, %v2675
    %v2677 = vsel %vm43, %v2656, 0.0
    %v2678 = vadd.f32 %v2676, %v2677
    %v2679 = vsel %vm43, %v2657, 0.0
    %v2680 = vadd.f32 %v2678, %v2679
    %v2681 = vsel %vm43, %v2658, 0.0
    %v2682 = vadd.f32 %v2680, %v2681
    %v2683 = vsel %vm43, %v2659, 0.0
    %v2684 = vadd.f32 %v2682, %v2683
    %v2685 = vsel %vm43, %v2660, 0.0
    %v2686 = vadd.f32 %v2684, %v2685
    %v2687 = vsel %vm43, %v2661, 0.0
    %v2688 = vadd.f32 %v2686, %v2687
    %v2689 = vsel %vm43, %v2662, 0.0
    %v2690 = vadd.f32 %v2688, %v2689
    %v2691 = vsel %vm43, %v2663, 0.0
    %v2692 = vadd.f32 %v2690, %v2691
    %v2693 = vsel %vm43, %v2664, 0.0
    %v2694 = vadd.f32 %v2692, %v2693
    %v2695 = vsel %vm43, %v2665, 0.0
    %v2696 = vadd.f32 %v2694, %v2695
    %v2697 = vrot.slane %v2696, 4
    %v2698 = vadd.f32 %v2696, %v2697
    %v2699 = vrot.slane %v2698, 2
    %v2700 = vadd.f32 %v2698, %v2699
    %v2701 = vrot.slane %v2700, 1
    %v2702 = vadd.f32 %v2700, %v2701
    %v2703 = vmul.f32 %v2649, 0.0078125
    %v2704 = vmul.f32 %v2702, 0.0078125
    %v2705 = vmul.f32 %v2703, %v2703
    %v2706 = vsub.f32 %v2704, %v2705
    %v2707 = vadd.f32 %v2706, 1e-05
    %v2708 = vrsqrt.pop %v2707
    %v2709 = vmul.f32 %v2611, %v2708
    %v2710 = vmul.f32 %v2703, %v2709
    %v2711 = vsub.f32 %v2612, %v2710
    %v2712 = vld [vmem:[%s189 + $0x1] sm:$0xff]
    %v2713 = vld [vmem:[%s189 + $0x11] sm:$0xff]
    %v2714 = vld [vmem:[%s189 + $0x21] sm:$0xff]
    %v2715 = vld [vmem:[%s189 + $0x31] sm:$0xff]
    %v2716 = vld [vmem:[%s189 + $0x41] sm:$0xff]
    %v2717 = vld [vmem:[%s189 + $0x51] sm:$0xff]
    %v2718 = vld [vmem:[%s189 + $0x61] sm:$0xff]
    %v2719 = vld [vmem:[%s189 + $0x71] sm:$0xff]
    %v2720 = vld [vmem:[%s189 + $0xa1] sm:$0xff]
    %v2721 = vld [vmem:[%s189 + $0xb1] sm:$0xff]
    %v2722 = vld [vmem:[%s189 + $0xc1] sm:$0xff]
    %v2723 = vld [vmem:[%s189 + $0xd1] sm:$0xff]
    %v2724 = vld [vmem:[%s189 + $0xe1] sm:$0xff]
    %v2725 = vld [vmem:[%s189 + $0xf1] sm:$0xff]
    %v2726 = vld [vmem:[%s189 + $0x101] sm:$0xff]
    %v2727 = vld [vmem:[%s189 + $0x111] sm:$0xff]
    %v2729 = vlaneseq
    %v2730 = vshrl.u32 %v2729, 7
    %v2731 = vsub.s32 0, %v2730
    %v2732 = vrot.slane %v2709, %v2731
    %v2734 = vmul.f32 %v2533, %v2732
    %v2735 = vmul.f32 %v2538, %v2732
    %v2736 = vmul.f32 %v2543, %v2732
    %v2737 = vmul.f32 %v2548, %v2732
    %v2738 = vmul.f32 %v2553, %v2732
    %v2739 = vmul.f32 %v2558, %v2732
    %v2740 = vmul.f32 %v2563, %v2732
    %v2741 = vmul.f32 %v2568, %v2732
    %v2742 = vmul.f32 %v2573, %v2732
    %v2743 = vmul.f32 %v2578, %v2732
    %v2744 = vmul.f32 %v2583, %v2732
    %v2745 = vmul.f32 %v2588, %v2732
    %v2746 = vmul.f32 %v2593, %v2732
    %v2747 = vmul.f32 %v2598, %v2732
    %v2748 = vmul.f32 %v2603, %v2732
    %v2749 = vmul.f32 %v2608, %v2732
    %v2750 = vadd.f32 %v2712, %v2734
    %v2751 = vadd.f32 %v2713, %v2735
    %v2752 = vadd.f32 %v2714, %v2736
    %v2753 = vadd.f32 %v2715, %v2737
    %v2754 = vadd.f32 %v2716, %v2738
    %v2755 = vadd.f32 %v2717, %v2739
    %v2756 = vadd.f32 %v2718, %v2740
    %v2757 = vadd.f32 %v2719, %v2741
    %v2758 = vadd.f32 %v2720, %v2742
    %v2759 = vadd.f32 %v2721, %v2743
    %v2760 = vadd.f32 %v2722, %v2744
    %v2761 = vadd.f32 %v2723, %v2745
    %v2762 = vadd.f32 %v2724, %v2746
    %v2763 = vadd.f32 %v2725, %v2747
    %v2764 = vadd.f32 %v2726, %v2748
    %v2765 = vadd.f32 %v2727, %v2749
    %v2767 = vlaneseq
    %v2768 = vshrl.u32 %v2767, 7
    %v2769 = vsub.s32 0, %v2768
    %v2770 = vrot.slane %v2711, %v2769
    %v2772 = vadd.f32 %v2750, %v2770
    %v2773 = vadd.f32 %v2751, %v2770
    %v2774 = vadd.f32 %v2752, %v2770
    %v2775 = vadd.f32 %v2753, %v2770
    %v2776 = vadd.f32 %v2754, %v2770
    %v2777 = vadd.f32 %v2755, %v2770
    %v2778 = vadd.f32 %v2756, %v2770
    %v2779 = vadd.f32 %v2757, %v2770
    %v2780 = vadd.f32 %v2758, %v2770
    %v2781 = vadd.f32 %v2759, %v2770
    %v2782 = vadd.f32 %v2760, %v2770
    %v2783 = vadd.f32 %v2761, %v2770
    %v2784 = vadd.f32 %v2762, %v2770
    %v2785 = vadd.f32 %v2763, %v2770
    %v2786 = vadd.f32 %v2764, %v2770
    %v2787 = vadd.f32 %v2765, %v2770
    %v2788 = vmax.f32 %v2772, 0.0
    %v2789 = vmax.f32 %v2773, 0.0
    %v2790 = vmax.f32 %v2774, 0.0
    %v2791 = vmax.f32 %v2775, 0.0
    %v2792 = vmax.f32 %v2776, 0.0
    %v2793 = vmax.f32 %v2777, 0.0
    %v2794 = vmax.f32 %v2778, 0.0
    %v2795 = vmax.f32 %v2779, 0.0
    %v2796 = vmax.f32 %v2780, 0.0
    %v2797 = vmax.f32 %v2781, 0.0
    %v2798 = vmax.f32 %v2782, 0.0
    %v2799 = vmax.f32 %v2783, 0.0
    %v2800 = vmax.f32 %v2784, 0.0
    %v2801 = vmax.f32 %v2785, 0.0
    %v2802 = vmax.f32 %v2786, 0.0
    %v2803 = vmax.f32 %v2787, 0.0
    %2804 = vst.msk [vmem:[#allocation4] sm:$0xff] %vm43, %v2788
    %2805 = vst.msk [vmem:[#allocation4 + $0x8] sm:$0xff] %vm43, %v2789
    %2806 = vst.msk [vmem:[#allocation4 + $0x10] sm:$0xff] %vm43, %v2790
    %2807 = vst.msk [vmem:[#allocation4 + $0x18] sm:$0xff] %vm43, %v2791
    %2808 = vst.msk [vmem:[#allocation4 + $0x20] sm:$0xff] %vm43, %v2792
    %2809 = vst.msk [vmem:[#allocation4 + $0x28] sm:$0xff] %vm43, %v2793
    %2810 = vst.msk [vmem:[#allocation4 + $0x30] sm:$0xff] %vm43, %v2794
    %2811 = vst.msk [vmem:[#allocation4 + $0x38] sm:$0xff] %vm43, %v2795
    %2812 = vst.msk [vmem:[#allocation4 + $0x40] sm:$0xff] %vm43, %v2796
    %2813 = vst.msk [vmem:[#allocation4 + $0x48] sm:$0xff] %vm43, %v2797
    %2814 = vst.msk [vmem:[#allocation4 + $0x50] sm:$0xff] %vm43, %v2798
    %2815 = vst.msk [vmem:[#allocation4 + $0x58] sm:$0xff] %vm43, %v2799
    %2816 = vst.msk [vmem:[#allocation4 + $0x60] sm:$0xff] %vm43, %v2800
    %2817 = vst.msk [vmem:[#allocation4 + $0x68] sm:$0xff] %vm43, %v2801
    %2818 = vst.msk [vmem:[#allocation4 + $0x70] sm:$0xff] %vm43, %v2802
    %2819 = vst.msk [vmem:[#allocation4 + $0x78] sm:$0xff] %vm43, %v2803
    // Predicated region
    $region30: #{tpu_custom_call.1} parent=1 // pred_check
      _
    $region31: #{tpu_custom_call.1} parent=1 // pred_check_branch
      %2821 = sbr.rel (0) target = $region33
    $region32: #{tpu_custom_call.1} parent=1 // pred_region
      %s2823 = ssub.s32 2048, 2048
      %2824 = vsyncadd [#allocation5], %s2823
      %s2825 = sshll.u32 [#allocation4], 4
      %s2826 = int_to_ptr.vmem [resolvable:$true] %s2825
      %2831 = dma.vmem_to_hbm [thread:$0]  %s2826, 2048, %s7, [#allocation5], 128, 128, 8
    $region33: #{tpu_custom_call.1} parent=1 // pred_fallthru
      _
    // Predicated region
    $region34: #{tpu_custom_call.1} parent=1 // pred_check
      _
    $region35: #{tpu_custom_call.1} parent=1 // pred_check_branch
      %2833 = sbr.rel (0) target = $region37
    $region36: #{tpu_custom_call.1} parent=1 // pred_region
      %2834 = dma.done [#allocation5], 2048
    $region37: #{tpu_custom_call.1} parent=1 // pred_fallthru
      _
    %2835 = vsyncpa [#allocation5], 1

</llo_original>
